<compile_context>
chip_gen: v7x
topology: tpu7x:2x2x1
jax: 0.10.0
libtpu: 0.0.40
codegen_flags: <defaults>
</compile_context>

<pallas_src>
import functools

import jax
import jax.numpy as jnp
from jax.experimental import pallas as pl
from jax.experimental.pallas import tpu as pltpu

DIM_E = 640
HIDDEN = 2048
OUT_DIM = 128
EPS = 1e-12  # F.normalize default eps


def _proj_kernel(x_ref, w1_ref, b1_ref, w2_ref, b2_ref, o_ref):
    # ---- Linear 1: bf16 MXU matmul, f32 accumulate; bias + ReLU in f32 ----
    h = jnp.dot(x_ref[...], w1_ref[...], preferred_element_type=jnp.float32)
    h = jnp.maximum(h + b1_ref[...], 0.0)        # (TB, HIDDEN) + (1, HIDDEN)

    # ---- Linear 2: cast activations to bf16 (halves the intermediate and
    #      keeps the MXU on its native bf16 path), accumulate in f32 ----
    p = jnp.dot(h.astype(jnp.bfloat16), w2_ref[...],
                preferred_element_type=jnp.float32)
    p = p + b2_ref[...]                          # (TB, OUT_DIM) + (1, OUT_DIM)

    # ---- F.normalize: p / max(||p||, eps) == p * rsqrt(max(||p||^2, eps^2)) ----
    sq = jnp.sum(p * p, axis=-1, keepdims=True)  # XLU reduce
    inv = jax.lax.rsqrt(jnp.maximum(sq, EPS * EPS))  # EUP
    o_ref[...] = (p * inv).astype(o_ref.dtype)


def _round_up(n, m):
    return ((n + m - 1) // m) * m


def _resident_spec(shape):
    """BlockSpec for a weight/bias that is resident across all grid steps.

    Single-buffered (the index_map is constant, so double-buffering only wastes
    VMEM).  Falls back to the default pipeline if pipeline_mode is unsupported.
    """
    idx = lambda i: (0, 0)
    try:
        return pl.BlockSpec(shape, idx, pipeline_mode=pl.Buffered(1))
    except TypeError:
        return pl.BlockSpec(shape, idx)


def _choose_blk(B, block_b):
    """Pick the batch tile: multiple of 16 (bf16 sublane packing), <= block_b,
    minimal padding waste, and >= 2 grid steps for medium/large batches so the
    'parallel' grid axis can shard across both v7x TensorCores."""
    Bp = _round_up(B, 16)
    block_b = max(16, _round_up(block_b, 16))
    if Bp <= 256:
        return min(Bp, block_b)          # small batch: one tile (DMA-bound anyway)

    cands = {min(_round_up((Bp + 1) // 2, 16), block_b)}  # half-split -> 2 steps
    c = 128
    while c <= block_b:
        cands.add(c)
        c += 128

    def waste(blk):
        return _round_up(Bp, blk) - Bp

    best = None
    for blk in sorted(cands, reverse=True):      # tie-break to the larger tile
        if _round_up(Bp, blk) // blk < 2:
            continue                             # keep both TCs busy on v7x
        if best is None or waste(blk) < waste(best):
            best = blk
    return best if best is not None else min(Bp, block_b)


@functools.partial(jax.jit, static_argnames=("block_b",))
def wide_resnet_proj(x, w1, b1, w2, b2, *, block_b=512):
    """x: (B, 640) f32 -> (B, 128) f32, L2-normalized rows.

    Weights/activations are cast to bf16 for the MXU (f32 accumulation); the
    bias adds, ReLU and normalization run in f32.  block_b caps the batch tile.
    """
    B, D = x.shape
    assert D == DIM_E

    blk = _choose_blk(B, block_b)
    Bp = _round_up(B, blk)
    if Bp != B:
        # Padded rows produce garbage (relu(b1) path) but are sliced off below.
        x = jnp.pad(x, ((0, Bp - B), (0, 0)))

    # bf16 operands for the MXU; biases stay f32.
    x_bf = x.astype(jnp.bfloat16)
    w1_bf = w1.astype(jnp.bfloat16)
    w2_bf = w2.astype(jnp.bfloat16)

    grid = (Bp // blk,)

    flops = 2 * Bp * (DIM_E * HIDDEN + HIDDEN * OUT_DIM)
    bytes_accessed = (
        2 * Bp * DIM_E                          # x (bf16)
        + 2 * (DIM_E * HIDDEN + HIDDEN * OUT_DIM)   # W1, W2 (bf16)
        + 4 * (HIDDEN + OUT_DIM)                # b1, b2 (f32)
        + 4 * Bp * OUT_DIM                      # out (f32)
    )

    out = pl.pallas_call(
        _proj_kernel,
        out_shape=jax.ShapeDtypeStruct((Bp, OUT_DIM), jnp.float32),
        grid_spec=pltpu.PrefetchScalarGridSpec(
            num_scalar_prefetch=0,
            grid=grid,
            in_specs=[
                pl.BlockSpec((blk, DIM_E), lambda i: (i, 0)),   # x tile (bf16)
                _resident_spec((DIM_E, HIDDEN)),                # W1 (bf16, resident)
                _resident_spec((1, HIDDEN)),                    # b1 (f32)
                _resident_spec((HIDDEN, OUT_DIM)),              # W2 (bf16, resident)
                _resident_spec((1, OUT_DIM)),                   # b2 (f32)
            ],
            out_specs=pl.BlockSpec((blk, OUT_DIM), lambda i: (i, 0)),
        ),
        compiler_params=pltpu.CompilerParams(
            dimension_semantics=("parallel",),   # batch tiles shard across TCs (v7x)
            vmem_limit_bytes=32 << 20,           # ~12 MiB footprint at blk=512
        ),
        cost_estimate=pl.CostEstimate(
            flops=flops, transcendentals=Bp, bytes_accessed=bytes_accessed),
    )(x_bf, w1_bf, b1, w2_bf, b2)

    return out[:B]


def init_params(key):
    """Deterministic PyTorch-style (Kaiming-uniform-ish) init, stored as (in, out)."""
    k1, k2, k3, k4 = jax.random.split(key, 4)
    bound1 = 1.0 / jnp.sqrt(DIM_E)
    bound2 = 1.0 / jnp.sqrt(HIDDEN)
    w1 = jax.random.uniform(k1, (DIM_E, HIDDEN), jnp.float32, -bound1, bound1)
    b1 = jax.random.uniform(k2, (1, HIDDEN), jnp.float32, -bound1, bound1)
    w2 = jax.random.uniform(k3, (HIDDEN, OUT_DIM), jnp.float32, -bound2, bound2)
    b2 = jax.random.uniform(k4, (1, OUT_DIM), jnp.float32, -bound2, bound2)
    return w1, b1, w2, b2


def _reference(x, w1, b1, w2, b2):
    h = jnp.maximum(x @ w1 + b1, 0.0)
    p = h @ w2 + b2
    n = jnp.sqrt(jnp.sum(p * p, axis=1, keepdims=True))
    return p / jnp.maximum(n, EPS)


if __name__ == "__main__":
    key = jax.random.PRNGKey(0)
    kx, kp = jax.random.split(key)

    B = 8  # small demo batch; feature dims are fixed by the module (640 -> 2048 -> 128)
    x = jax.random.normal(kx, (B, DIM_E), jnp.float32)
    w1, b1, w2, b2 = init_params(kp)

    out = wide_resnet_proj(x, w1, b1, w2, b2)
    out = jax.block_until_ready(out)

    ref = _reference(x, w1, b1, w2, b2)
    assert out.shape == (B, OUT_DIM)
    # bf16 MXU operands with f32 accumulation: components of a unit vector,
    # so absolute tolerance ~2e-2 is comfortably loose.
    assert jnp.allclose(out, ref, atol=2e-2, rtol=0.0), "mismatch vs pure-JAX reference"
    # rows should be unit-norm (normalization itself runs in f32)
    assert jnp.allclose(jnp.linalg.norm(out, axis=1), 1.0, atol=1e-5)

    print("KERNEL_OK")
</pallas_src>

<mosaic_0001>
module attributes {stable_mosaic.version = 11 : i64} {
  func.func @_proj_kernel(%arg0: i32, %arg1: memref<16x640xbf16, #tpu.memory_space<vmem>>, %arg2: memref<640x2048xbf16, #tpu.memory_space<vmem>>, %arg3: memref<1x2048xf32, #tpu.memory_space<vmem>>, %arg4: memref<2048x128xbf16, #tpu.memory_space<vmem>>, %arg5: memref<1x128xf32, #tpu.memory_space<vmem>>, %arg6: memref<16x128xf32, #tpu.memory_space<vmem>>) attributes {dimension_semantics = [#tpu.dimension_semantics<parallel>], iteration_bounds = array<i64: 1>, scalar_prefetch = 0 : i64, scratch_operands = 0 : i64, tpu.core_type = #tpu.core_type<tc>, window_params = [{transform_indices = @transform_0, window_bounds = array<i64: 16, 640>}, {pipeline_mode = #tpu.pipeline_mode<synchronous>, transform_indices = @transform_1, window_bounds = array<i64: 640, 2048>}, {pipeline_mode = #tpu.pipeline_mode<synchronous>, transform_indices = @transform_2, window_bounds = array<i64: 1, 2048>}, {pipeline_mode = #tpu.pipeline_mode<synchronous>, transform_indices = @transform_3, window_bounds = array<i64: 2048, 128>}, {pipeline_mode = #tpu.pipeline_mode<synchronous>, transform_indices = @transform_4, window_bounds = array<i64: 1, 128>}, {transform_indices = @transform_5, window_bounds = array<i64: 16, 128>}]} {
    %c0 = arith.constant 0 : index
    %c0_0 = arith.constant 0 : index
    %0 = vector.load %arg1[%c0, %c0_0] : memref<16x640xbf16, #tpu.memory_space<vmem>>, vector<16x640xbf16>
    %c0_1 = arith.constant 0 : index
    %c0_2 = arith.constant 0 : index
    %1 = vector.load %arg2[%c0_1, %c0_2] : memref<640x2048xbf16, #tpu.memory_space<vmem>>, vector<640x2048xbf16>
    %cst = arith.constant dense<0.000000e+00> : vector<16x2048xf32>
    %2 = tpu.matmul %0, %1, %cst {dimension_numbers = #tpu.dot_dimension_numbers<[1], [0], [0], [1], [0, 0, 1, 1], [], []>} : vector<16x640xbf16>, vector<640x2048xbf16>, vector<16x2048xf32> -> vector<16x2048xf32>
    %c0_3 = arith.constant 0 : index
    %c0_4 = arith.constant 0 : index
    %3 = vector.load %arg3[%c0_3, %c0_4] : memref<1x2048xf32, #tpu.memory_space<vmem>>, vector<1x2048xf32>
    %4 = vector.broadcast %3 : vector<1x2048xf32> to vector<16x2048xf32>
    %5 = arith.addf %2, %4 : vector<16x2048xf32>
    %cst_5 = arith.constant 0.000000e+00 : f32
    %6 = vector.broadcast %cst_5 : f32 to vector<16x2048xf32>
    %7 = arith.maximumf %5, %6 : vector<16x2048xf32>
    %8 = arith.truncf %7 : vector<16x2048xf32> to vector<16x2048xbf16>
    %c0_6 = arith.constant 0 : index
    %c0_7 = arith.constant 0 : index
    %9 = vector.load %arg4[%c0_6, %c0_7] : memref<2048x128xbf16, #tpu.memory_space<vmem>>, vector<2048x128xbf16>
    %cst_8 = arith.constant dense<0.000000e+00> : vector<16x128xf32>
    %10 = tpu.matmul %8, %9, %cst_8 {dimension_numbers = #tpu.dot_dimension_numbers<[1], [0], [0], [1], [0, 0, 1, 1], [], []>} : vector<16x2048xbf16>, vector<2048x128xbf16>, vector<16x128xf32> -> vector<16x128xf32>
    %c0_9 = arith.constant 0 : index
    %c0_10 = arith.constant 0 : index
    %11 = vector.load %arg5[%c0_9, %c0_10] : memref<1x128xf32, #tpu.memory_space<vmem>>, vector<1x128xf32>
    %12 = vector.broadcast %11 : vector<1x128xf32> to vector<16x128xf32>
    %13 = arith.addf %10, %12 : vector<16x128xf32>
    %14 = arith.mulf %13, %13 : vector<16x128xf32>
    %cst_11 = arith.constant dense<0.000000e+00> : vector<16xf32>
    %15 = vector.multi_reduction <add>, %14, %cst_11 [1] : vector<16x128xf32> to vector<16xf32>
    %16 = vector.shape_cast %15 : vector<16xf32> to vector<16x1xf32>
    %cst_12 = arith.constant 1.000000e-24 : f32
    %17 = vector.broadcast %cst_12 : f32 to vector<16x1xf32>
    %18 = arith.maximumf %16, %17 : vector<16x1xf32>
    %19 = math.rsqrt %18 : vector<16x1xf32>
    %20 = vector.broadcast %19 : vector<16x1xf32> to vector<16x128xf32>
    %21 = arith.mulf %13, %20 : vector<16x128xf32>
    %c0_13 = arith.constant 0 : index
    %c0_14 = arith.constant 0 : index
    %22 = vector.load %arg6[%c0_13, %c0_14] : memref<16x128xf32, #tpu.memory_space<vmem>>, vector<16x128xf32>
    tpu.vector_store %arg6[%c0_13, %c0_14], %21 {strides = array<i32>} : memref<16x128xf32, #tpu.memory_space<vmem>>, vector<16x128xf32>,
    return
  }
  func.func @transform_0(%arg0: i32) -> (i32, i32) {
    %c0_i32 = arith.constant 0 : i32
    %c0_i32_0 = arith.constant 0 : i32
    return %arg0, %c0_i32 : i32, i32
  }
  func.func @transform_1(%arg0: i32) -> (i32, i32) {
    %c0_i32 = arith.constant 0 : i32
    %c0_i32_0 = arith.constant 0 : i32
    %c0_i32_1 = arith.constant 0 : i32
    return %c0_i32, %c0_i32_0 : i32, i32
  }
  func.func @transform_2(%arg0: i32) -> (i32, i32) {
    %c0_i32 = arith.constant 0 : i32
    %c0_i32_0 = arith.constant 0 : i32
    %c0_i32_1 = arith.constant 0 : i32
    return %c0_i32, %c0_i32_0 : i32, i32
  }
  func.func @transform_3(%arg0: i32) -> (i32, i32) {
    %c0_i32 = arith.constant 0 : i32
    %c0_i32_0 = arith.constant 0 : i32
    %c0_i32_1 = arith.constant 0 : i32
    return %c0_i32, %c0_i32_0 : i32, i32
  }
  func.func @transform_4(%arg0: i32) -> (i32, i32) {
    %c0_i32 = arith.constant 0 : i32
    %c0_i32_0 = arith.constant 0 : i32
    %c0_i32_1 = arith.constant 0 : i32
    return %c0_i32, %c0_i32_0 : i32, i32
  }
  func.func @transform_5(%arg0: i32) -> (i32, i32) {
    %c0_i32 = arith.constant 0 : i32
    %c0_i32_0 = arith.constant 0 : i32
    return %arg0, %c0_i32 : i32, i32
  }
}

</mosaic_0001>

<llo_original>
// kernel: wide_resnet_proj.1
$region0: #{wide_resnet_proj.1}
  #allocation0 [shape = 'u32[]', space=smem, size = 0x4, offset = 0x4, fixed_abs, tag = 'smem constant byte address 0x4 - core index']
  #allocation1 [shape = 'u32[144,128]{1,0:T(1,128)}', space=vmem, size = 0x12000, scoped, tag = 'internal scratch']
  %s0 = inlined_call_operand.vmem [shape: bf16[16,640], index: 0, kind: input, shape index: {}]
  %s1 = inlined_call_operand.vmem [shape: bf16[640,2048], index: 1, kind: input, shape index: {}]
  %s2 = inlined_call_operand.vmem [shape: f32[1,2048], index: 2, kind: input, shape index: {}]
  %s3 = inlined_call_operand.vmem [shape: bf16[2048,128], index: 3, kind: input, shape index: {}]
  %s4 = inlined_call_operand.vmem [shape: f32[1,128], index: 4, kind: input, shape index: {}]
  %s5 = inlined_call_operand.vmem [shape: f32[16,128], index: 5, kind: output, shape index: {}]
  %s6 = sld [smem:[#allocation0]]
  $region30: #{wide_resnet_proj.1} parent=0
    _
  %s8 = ssub.s32 1, %s6
  %s9 = scalar_select 0, %s8, %s6
  // Predicated region
  $region2: #{wide_resnet_proj.1} parent=0 // pred_check
    _
  $region3: #{wide_resnet_proj.1} parent=0 // pred_check_branch
    %11 = sbr.rel (0) target = $region5
  $region4: #{wide_resnet_proj.1} parent=0 // pred_region
    _
  $region5: #{wide_resnet_proj.1} parent=0 // pred_fallthru
    _
  // Predicated region
  $region6: #{wide_resnet_proj.1} parent=0 // pred_check
    _
  $region7: #{wide_resnet_proj.1} parent=0 // pred_check_branch
    %13 = sbr.rel (0) target = $region9
  $region8: #{wide_resnet_proj.1} parent=0 // pred_region
    _
  $region9: #{wide_resnet_proj.1} parent=0 // pred_fallthru
    _
  // Predicated region
  $region10: #{wide_resnet_proj.1} parent=0 // pred_check
    _
  $region11: #{wide_resnet_proj.1} parent=0 // pred_check_branch
    %15 = sbr.rel (0) target = $region13
  $region12: #{wide_resnet_proj.1} parent=0 // pred_region
    _
  $region13: #{wide_resnet_proj.1} parent=0 // pred_fallthru
    _
  // Predicated region
  $region14: #{wide_resnet_proj.1} parent=0 // pred_check
    _
  $region15: #{wide_resnet_proj.1} parent=0 // pred_check_branch
    %17 = sbr.rel (0) target = $region17
  $region16: #{wide_resnet_proj.1} parent=0 // pred_region
    _
  $region17: #{wide_resnet_proj.1} parent=0 // pred_fallthru
    _
  // Predicated region
  $region18: #{wide_resnet_proj.1} parent=0 // pred_check
    _
  $region19: #{wide_resnet_proj.1} parent=0 // pred_check_branch
    %19 = sbr.rel (0) target = $region21
  $region20: #{wide_resnet_proj.1} parent=0 // pred_region
    _
  $region21: #{wide_resnet_proj.1} parent=0 // pred_fallthru
    _
  %v21 = vld [vmem:[%s0] sm:$0xff]
  %v22 = vld [vmem:[%s0 + $0x8] sm:$0xff]
  %v23 = vld [vmem:[%s0 + $0x10] sm:$0xf]
  %v24 = vld [vmem:[%s0 + $0x14] sm:$0xff]
  %v25 = vld [vmem:[%s0 + $0x1c] sm:$0xff]
  %v26 = vld [vmem:[%s0 + $0x24] sm:$0xf]
  %v27 = vld [vmem:[%s1] sm:$0xff]
  %v28 = vld [vmem:[%s1 + $0x8] sm:$0xff]
  %v29 = vld [vmem:[%s1 + $0x10] sm:$0xff]
  %v30 = vld [vmem:[%s1 + $0x18] sm:$0xff]
  %v31 = vld [vmem:[%s1 + $0x20] sm:$0xff]
  %v32 = vld [vmem:[%s1 + $0x28] sm:$0xff]
  %v33 = vld [vmem:[%s1 + $0x30] sm:$0xff]
  %v34 = vld [vmem:[%s1 + $0x38] sm:$0xff]
  %v35 = vld [vmem:[%s1 + $0x40] sm:$0xff]
  %v36 = vld [vmem:[%s1 + $0x48] sm:$0xff]
  %v37 = vld [vmem:[%s1 + $0x50] sm:$0xff]
  %v38 = vld [vmem:[%s1 + $0x58] sm:$0xff]
  %v39 = vld [vmem:[%s1 + $0x60] sm:$0xff]
  %v40 = vld [vmem:[%s1 + $0x68] sm:$0xff]
  %v41 = vld [vmem:[%s1 + $0x70] sm:$0xff]
  %v42 = vld [vmem:[%s1 + $0x78] sm:$0xff]
  %v43 = vld [vmem:[%s1 + $0x80] sm:$0xff]
  %v44 = vld [vmem:[%s1 + $0x88] sm:$0xff]
  %v45 = vld [vmem:[%s1 + $0x90] sm:$0xff]
  %v46 = vld [vmem:[%s1 + $0x98] sm:$0xff]
  %v47 = vld [vmem:[%s1 + $0xa0] sm:$0xff]
  %v48 = vld [vmem:[%s1 + $0xa8] sm:$0xff]
  %v49 = vld [vmem:[%s1 + $0xb0] sm:$0xff]
  %v50 = vld [vmem:[%s1 + $0xb8] sm:$0xff]
  %v51 = vld [vmem:[%s1 + $0xc0] sm:$0xff]
  %v52 = vld [vmem:[%s1 + $0xc8] sm:$0xff]
  %v53 = vld [vmem:[%s1 + $0xd0] sm:$0xff]
  %v54 = vld [vmem:[%s1 + $0xd8] sm:$0xff]
  %v55 = vld [vmem:[%s1 + $0xe0] sm:$0xff]
  %v56 = vld [vmem:[%s1 + $0xe8] sm:$0xff]
  %v57 = vld [vmem:[%s1 + $0xf0] sm:$0xff]
  %v58 = vld [vmem:[%s1 + $0xf8] sm:$0xff]
  %v59 = vld [vmem:[%s1 + $0x100] sm:$0xff]
  %v60 = vld [vmem:[%s1 + $0x108] sm:$0xff]
  %v61 = vld [vmem:[%s1 + $0x110] sm:$0xff]
  %v62 = vld [vmem:[%s1 + $0x118] sm:$0xff]
  %v63 = vld [vmem:[%s1 + $0x120] sm:$0xff]
  %v64 = vld [vmem:[%s1 + $0x128] sm:$0xff]
  %v65 = vld [vmem:[%s1 + $0x130] sm:$0xff]
  %v66 = vld [vmem:[%s1 + $0x138] sm:$0xff]
  %v67 = vld [vmem:[%s1 + $0x140] sm:$0xff]
  %v68 = vld [vmem:[%s1 + $0x148] sm:$0xff]
  %v69 = vld [vmem:[%s1 + $0x150] sm:$0xff]
  %v70 = vld [vmem:[%s1 + $0x158] sm:$0xff]
  %v71 = vld [vmem:[%s1 + $0x160] sm:$0xff]
  %v72 = vld [vmem:[%s1 + $0x168] sm:$0xff]
  %v73 = vld [vmem:[%s1 + $0x170] sm:$0xff]
  %v74 = vld [vmem:[%s1 + $0x178] sm:$0xff]
  %v75 = vld [vmem:[%s1 + $0x180] sm:$0xff]
  %v76 = vld [vmem:[%s1 + $0x188] sm:$0xff]
  %v77 = vld [vmem:[%s1 + $0x190] sm:$0xff]
  %v78 = vld [vmem:[%s1 + $0x198] sm:$0xff]
  %v79 = vld [vmem:[%s1 + $0x1a0] sm:$0xff]
  %v80 = vld [vmem:[%s1 + $0x1a8] sm:$0xff]
  %v81 = vld [vmem:[%s1 + $0x1b0] sm:$0xff]
  %v82 = vld [vmem:[%s1 + $0x1b8] sm:$0xff]
  %v83 = vld [vmem:[%s1 + $0x1c0] sm:$0xff]
  %v84 = vld [vmem:[%s1 + $0x1c8] sm:$0xff]
  %v85 = vld [vmem:[%s1 + $0x1d0] sm:$0xff]
  %v86 = vld [vmem:[%s1 + $0x1d8] sm:$0xff]
  %v87 = vld [vmem:[%s1 + $0x1e0] sm:$0xff]
  %v88 = vld [vmem:[%s1 + $0x1e8] sm:$0xff]
  %v89 = vld [vmem:[%s1 + $0x1f0] sm:$0xff]
  %v90 = vld [vmem:[%s1 + $0x1f8] sm:$0xff]
  %v91 = vld [vmem:[%s1 + $0x200] sm:$0xff]
  %v92 = vld [vmem:[%s1 + $0x208] sm:$0xff]
  %v93 = vld [vmem:[%s1 + $0x210] sm:$0xff]
  %v94 = vld [vmem:[%s1 + $0x218] sm:$0xff]
  %v95 = vld [vmem:[%s1 + $0x220] sm:$0xff]
  %v96 = vld [vmem:[%s1 + $0x228] sm:$0xff]
  %v97 = vld [vmem:[%s1 + $0x230] sm:$0xff]
  %v98 = vld [vmem:[%s1 + $0x238] sm:$0xff]
  %v99 = vld [vmem:[%s1 + $0x240] sm:$0xff]
  %v100 = vld [vmem:[%s1 + $0x248] sm:$0xff]
  %v101 = vld [vmem:[%s1 + $0x250] sm:$0xff]
  %v102 = vld [vmem:[%s1 + $0x258] sm:$0xff]
  %v103 = vld [vmem:[%s1 + $0x260] sm:$0xff]
  %v104 = vld [vmem:[%s1 + $0x268] sm:$0xff]
  %v105 = vld [vmem:[%s1 + $0x270] sm:$0xff]
  %v106 = vld [vmem:[%s1 + $0x278] sm:$0xff]
  %v107 = vld [vmem:[%s1 + $0x280] sm:$0xff]
  %v108 = vld [vmem:[%s1 + $0x288] sm:$0xff]
  %v109 = vld [vmem:[%s1 + $0x290] sm:$0xff]
  %v110 = vld [vmem:[%s1 + $0x298] sm:$0xff]
  %v111 = vld [vmem:[%s1 + $0x2a0] sm:$0xff]
  %v112 = vld [vmem:[%s1 + $0x2a8] sm:$0xff]
  %v113 = vld [vmem:[%s1 + $0x2b0] sm:$0xff]
  %v114 = vld [vmem:[%s1 + $0x2b8] sm:$0xff]
  %v115 = vld [vmem:[%s1 + $0x2c0] sm:$0xff]
  %v116 = vld [vmem:[%s1 + $0x2c8] sm:$0xff]
  %v117 = vld [vmem:[%s1 + $0x2d0] sm:$0xff]
  %v118 = vld [vmem:[%s1 + $0x2d8] sm:$0xff]
  %v119 = vld [vmem:[%s1 + $0x2e0] sm:$0xff]
  %v120 = vld [vmem:[%s1 + $0x2e8] sm:$0xff]
  %v121 = vld [vmem:[%s1 + $0x2f0] sm:$0xff]
  %v122 = vld [vmem:[%s1 + $0x2f8] sm:$0xff]
  %v123 = vld [vmem:[%s1 + $0x300] sm:$0xff]
  %v124 = vld [vmem:[%s1 + $0x308] sm:$0xff]
  %v125 = vld [vmem:[%s1 + $0x310] sm:$0xff]
  %v126 = vld [vmem:[%s1 + $0x318] sm:$0xff]
  %v127 = vld [vmem:[%s1 + $0x320] sm:$0xff]
  %v128 = vld [vmem:[%s1 + $0x328] sm:$0xff]
  %v129 = vld [vmem:[%s1 + $0x330] sm:$0xff]
  %v130 = vld [vmem:[%s1 + $0x338] sm:$0xff]
  %v131 = vld [vmem:[%s1 + $0x340] sm:$0xff]
  %v132 = vld [vmem:[%s1 + $0x348] sm:$0xff]
  %v133 = vld [vmem:[%s1 + $0x350] sm:$0xff]
  %v134 = vld [vmem:[%s1 + $0x358] sm:$0xff]
  %v135 = vld [vmem:[%s1 + $0x360] sm:$0xff]
  %v136 = vld [vmem:[%s1 + $0x368] sm:$0xff]
  %v137 = vld [vmem:[%s1 + $0x370] sm:$0xff]
  %v138 = vld [vmem:[%s1 + $0x378] sm:$0xff]
  %v139 = vld [vmem:[%s1 + $0x380] sm:$0xff]
  %v140 = vld [vmem:[%s1 + $0x388] sm:$0xff]
  %v141 = vld [vmem:[%s1 + $0x390] sm:$0xff]
  %v142 = vld [vmem:[%s1 + $0x398] sm:$0xff]
  %v143 = vld [vmem:[%s1 + $0x3a0] sm:$0xff]
  %v144 = vld [vmem:[%s1 + $0x3a8] sm:$0xff]
  %v145 = vld [vmem:[%s1 + $0x3b0] sm:$0xff]
  %v146 = vld [vmem:[%s1 + $0x3b8] sm:$0xff]
  %v147 = vld [vmem:[%s1 + $0x3c0] sm:$0xff]
  %v148 = vld [vmem:[%s1 + $0x3c8] sm:$0xff]
  %v149 = vld [vmem:[%s1 + $0x3d0] sm:$0xff]
  %v150 = vld [vmem:[%s1 + $0x3d8] sm:$0xff]
  %v151 = vld [vmem:[%s1 + $0x3e0] sm:$0xff]
  %v152 = vld [vmem:[%s1 + $0x3e8] sm:$0xff]
  %v153 = vld [vmem:[%s1 + $0x3f0] sm:$0xff]
  %v154 = vld [vmem:[%s1 + $0x3f8] sm:$0xff]
  %v155 = vld [vmem:[%s1 + $0x400] sm:$0xff]
  %v156 = vld [vmem:[%s1 + $0x408] sm:$0xff]
  %v157 = vld [vmem:[%s1 + $0x410] sm:$0xff]
  %v158 = vld [vmem:[%s1 + $0x418] sm:$0xff]
  %v159 = vld [vmem:[%s1 + $0x420] sm:$0xff]
  %v160 = vld [vmem:[%s1 + $0x428] sm:$0xff]
  %v161 = vld [vmem:[%s1 + $0x430] sm:$0xff]
  %v162 = vld [vmem:[%s1 + $0x438] sm:$0xff]
  %v163 = vld [vmem:[%s1 + $0x440] sm:$0xff]
  %v164 = vld [vmem:[%s1 + $0x448] sm:$0xff]
  %v165 = vld [vmem:[%s1 + $0x450] sm:$0xff]
  %v166 = vld [vmem:[%s1 + $0x458] sm:$0xff]
  %v167 = vld [vmem:[%s1 + $0x460] sm:$0xff]
  %v168 = vld [vmem:[%s1 + $0x468] sm:$0xff]
  %v169 = vld [vmem:[%s1 + $0x470] sm:$0xff]
  %v170 = vld [vmem:[%s1 + $0x478] sm:$0xff]
  %v171 = vld [vmem:[%s1 + $0x480] sm:$0xff]
  %v172 = vld [vmem:[%s1 + $0x488] sm:$0xff]
  %v173 = vld [vmem:[%s1 + $0x490] sm:$0xff]
  %v174 = vld [vmem:[%s1 + $0x498] sm:$0xff]
  %v175 = vld [vmem:[%s1 + $0x4a0] sm:$0xff]
  %v176 = vld [vmem:[%s1 + $0x4a8] sm:$0xff]
  %v177 = vld [vmem:[%s1 + $0x4b0] sm:$0xff]
  %v178 = vld [vmem:[%s1 + $0x4b8] sm:$0xff]
  %v179 = vld [vmem:[%s1 + $0x4c0] sm:$0xff]
  %v180 = vld [vmem:[%s1 + $0x4c8] sm:$0xff]
  %v181 = vld [vmem:[%s1 + $0x4d0] sm:$0xff]
  %v182 = vld [vmem:[%s1 + $0x4d8] sm:$0xff]
  %v183 = vld [vmem:[%s1 + $0x4e0] sm:$0xff]
  %v184 = vld [vmem:[%s1 + $0x4e8] sm:$0xff]
  %v185 = vld [vmem:[%s1 + $0x4f0] sm:$0xff]
  %v186 = vld [vmem:[%s1 + $0x4f8] sm:$0xff]
  %v187 = vld [vmem:[%s1 + $0x500] sm:$0xff]
  %v188 = vld [vmem:[%s1 + $0x508] sm:$0xff]
  %v189 = vld [vmem:[%s1 + $0x510] sm:$0xff]
  %v190 = vld [vmem:[%s1 + $0x518] sm:$0xff]
  %v191 = vld [vmem:[%s1 + $0x520] sm:$0xff]
  %v192 = vld [vmem:[%s1 + $0x528] sm:$0xff]
  %v193 = vld [vmem:[%s1 + $0x530] sm:$0xff]
  %v194 = vld [vmem:[%s1 + $0x538] sm:$0xff]
  %v195 = vld [vmem:[%s1 + $0x540] sm:$0xff]
  %v196 = vld [vmem:[%s1 + $0x548] sm:$0xff]
  %v197 = vld [vmem:[%s1 + $0x550] sm:$0xff]
  %v198 = vld [vmem:[%s1 + $0x558] sm:$0xff]
  %v199 = vld [vmem:[%s1 + $0x560] sm:$0xff]
  %v200 = vld [vmem:[%s1 + $0x568] sm:$0xff]
  %v201 = vld [vmem:[%s1 + $0x570] sm:$0xff]
  %v202 = vld [vmem:[%s1 + $0x578] sm:$0xff]
  %v203 = vld [vmem:[%s1 + $0x580] sm:$0xff]
  %v204 = vld [vmem:[%s1 + $0x588] sm:$0xff]
  %v205 = vld [vmem:[%s1 + $0x590] sm:$0xff]
  %v206 = vld [vmem:[%s1 + $0x598] sm:$0xff]
  %v207 = vld [vmem:[%s1 + $0x5a0] sm:$0xff]
  %v208 = vld [vmem:[%s1 + $0x5a8] sm:$0xff]
  %v209 = vld [vmem:[%s1 + $0x5b0] sm:$0xff]
  %v210 = vld [vmem:[%s1 + $0x5b8] sm:$0xff]
  %v211 = vld [vmem:[%s1 + $0x5c0] sm:$0xff]
  %v212 = vld [vmem:[%s1 + $0x5c8] sm:$0xff]
  %v213 = vld [vmem:[%s1 + $0x5d0] sm:$0xff]
  %v214 = vld [vmem:[%s1 + $0x5d8] sm:$0xff]
  %v215 = vld [vmem:[%s1 + $0x5e0] sm:$0xff]
  %v216 = vld [vmem:[%s1 + $0x5e8] sm:$0xff]
  %v217 = vld [vmem:[%s1 + $0x5f0] sm:$0xff]
  %v218 = vld [vmem:[%s1 + $0x5f8] sm:$0xff]
  %v219 = vld [vmem:[%s1 + $0x600] sm:$0xff]
  %v220 = vld [vmem:[%s1 + $0x608] sm:$0xff]
  %v221 = vld [vmem:[%s1 + $0x610] sm:$0xff]
  %v222 = vld [vmem:[%s1 + $0x618] sm:$0xff]
  %v223 = vld [vmem:[%s1 + $0x620] sm:$0xff]
  %v224 = vld [vmem:[%s1 + $0x628] sm:$0xff]
  %v225 = vld [vmem:[%s1 + $0x630] sm:$0xff]
  %v226 = vld [vmem:[%s1 + $0x638] sm:$0xff]
  %v227 = vld [vmem:[%s1 + $0x640] sm:$0xff]
  %v228 = vld [vmem:[%s1 + $0x648] sm:$0xff]
  %v229 = vld [vmem:[%s1 + $0x650] sm:$0xff]
  %v230 = vld [vmem:[%s1 + $0x658] sm:$0xff]
  %v231 = vld [vmem:[%s1 + $0x660] sm:$0xff]
  %v232 = vld [vmem:[%s1 + $0x668] sm:$0xff]
  %v233 = vld [vmem:[%s1 + $0x670] sm:$0xff]
  %v234 = vld [vmem:[%s1 + $0x678] sm:$0xff]
  %v235 = vld [vmem:[%s1 + $0x680] sm:$0xff]
  %v236 = vld [vmem:[%s1 + $0x688] sm:$0xff]
  %v237 = vld [vmem:[%s1 + $0x690] sm:$0xff]
  %v238 = vld [vmem:[%s1 + $0x698] sm:$0xff]
  %v239 = vld [vmem:[%s1 + $0x6a0] sm:$0xff]
  %v240 = vld [vmem:[%s1 + $0x6a8] sm:$0xff]
  %v241 = vld [vmem:[%s1 + $0x6b0] sm:$0xff]
  %v242 = vld [vmem:[%s1 + $0x6b8] sm:$0xff]
  %v243 = vld [vmem:[%s1 + $0x6c0] sm:$0xff]
  %v244 = vld [vmem:[%s1 + $0x6c8] sm:$0xff]
  %v245 = vld [vmem:[%s1 + $0x6d0] sm:$0xff]
  %v246 = vld [vmem:[%s1 + $0x6d8] sm:$0xff]
  %v247 = vld [vmem:[%s1 + $0x6e0] sm:$0xff]
  %v248 = vld [vmem:[%s1 + $0x6e8] sm:$0xff]
  %v249 = vld [vmem:[%s1 + $0x6f0] sm:$0xff]
  %v250 = vld [vmem:[%s1 + $0x6f8] sm:$0xff]
  %v251 = vld [vmem:[%s1 + $0x700] sm:$0xff]
  %v252 = vld [vmem:[%s1 + $0x708] sm:$0xff]
  %v253 = vld [vmem:[%s1 + $0x710] sm:$0xff]
  %v254 = vld [vmem:[%s1 + $0x718] sm:$0xff]
  %v255 = vld [vmem:[%s1 + $0x720] sm:$0xff]
  %v256 = vld [vmem:[%s1 + $0x728] sm:$0xff]
  %v257 = vld [vmem:[%s1 + $0x730] sm:$0xff]
  %v258 = vld [vmem:[%s1 + $0x738] sm:$0xff]
  %v259 = vld [vmem:[%s1 + $0x740] sm:$0xff]
  %v260 = vld [vmem:[%s1 + $0x748] sm:$0xff]
  %v261 = vld [vmem:[%s1 + $0x750] sm:$0xff]
  %v262 = vld [vmem:[%s1 + $0x758] sm:$0xff]
  %v263 = vld [vmem:[%s1 + $0x760] sm:$0xff]
  %v264 = vld [vmem:[%s1 + $0x768] sm:$0xff]
  %v265 = vld [vmem:[%s1 + $0x770] sm:$0xff]
  %v266 = vld [vmem:[%s1 + $0x778] sm:$0xff]
  %v267 = vld [vmem:[%s1 + $0x780] sm:$0xff]
  %v268 = vld [vmem:[%s1 + $0x788] sm:$0xff]
  %v269 = vld [vmem:[%s1 + $0x790] sm:$0xff]
  %v270 = vld [vmem:[%s1 + $0x798] sm:$0xff]
  %v271 = vld [vmem:[%s1 + $0x7a0] sm:$0xff]
  %v272 = vld [vmem:[%s1 + $0x7a8] sm:$0xff]
  %v273 = vld [vmem:[%s1 + $0x7b0] sm:$0xff]
  %v274 = vld [vmem:[%s1 + $0x7b8] sm:$0xff]
  %v275 = vld [vmem:[%s1 + $0x7c0] sm:$0xff]
  %v276 = vld [vmem:[%s1 + $0x7c8] sm:$0xff]
  %v277 = vld [vmem:[%s1 + $0x7d0] sm:$0xff]
  %v278 = vld [vmem:[%s1 + $0x7d8] sm:$0xff]
  %v279 = vld [vmem:[%s1 + $0x7e0] sm:$0xff]
  %v280 = vld [vmem:[%s1 + $0x7e8] sm:$0xff]
  %v281 = vld [vmem:[%s1 + $0x7f0] sm:$0xff]
  %v282 = vld [vmem:[%s1 + $0x7f8] sm:$0xff]
  %v283 = vld [vmem:[%s1 + $0x800] sm:$0xff]
  %v284 = vld [vmem:[%s1 + $0x808] sm:$0xff]
  %v285 = vld [vmem:[%s1 + $0x810] sm:$0xff]
  %v286 = vld [vmem:[%s1 + $0x818] sm:$0xff]
  %v287 = vld [vmem:[%s1 + $0x820] sm:$0xff]
  %v288 = vld [vmem:[%s1 + $0x828] sm:$0xff]
  %v289 = vld [vmem:[%s1 + $0x830] sm:$0xff]
  %v290 = vld [vmem:[%s1 + $0x838] sm:$0xff]
  %v291 = vld [vmem:[%s1 + $0x840] sm:$0xff]
  %v292 = vld [vmem:[%s1 + $0x848] sm:$0xff]
  %v293 = vld [vmem:[%s1 + $0x850] sm:$0xff]
  %v294 = vld [vmem:[%s1 + $0x858] sm:$0xff]
  %v295 = vld [vmem:[%s1 + $0x860] sm:$0xff]
  %v296 = vld [vmem:[%s1 + $0x868] sm:$0xff]
  %v297 = vld [vmem:[%s1 + $0x870] sm:$0xff]
  %v298 = vld [vmem:[%s1 + $0x878] sm:$0xff]
  %v299 = vld [vmem:[%s1 + $0x880] sm:$0xff]
  %v300 = vld [vmem:[%s1 + $0x888] sm:$0xff]
  %v301 = vld [vmem:[%s1 + $0x890] sm:$0xff]
  %v302 = vld [vmem:[%s1 + $0x898] sm:$0xff]
  %v303 = vld [vmem:[%s1 + $0x8a0] sm:$0xff]
  %v304 = vld [vmem:[%s1 + $0x8a8] sm:$0xff]
  %v305 = vld [vmem:[%s1 + $0x8b0] sm:$0xff]
  %v306 = vld [vmem:[%s1 + $0x8b8] sm:$0xff]
  %v307 = vld [vmem:[%s1 + $0x8c0] sm:$0xff]
  %v308 = vld [vmem:[%s1 + $0x8c8] sm:$0xff]
  %v309 = vld [vmem:[%s1 + $0x8d0] sm:$0xff]
  %v310 = vld [vmem:[%s1 + $0x8d8] sm:$0xff]
  %v311 = vld [vmem:[%s1 + $0x8e0] sm:$0xff]
  %v312 = vld [vmem:[%s1 + $0x8e8] sm:$0xff]
  %v313 = vld [vmem:[%s1 + $0x8f0] sm:$0xff]
  %v314 = vld [vmem:[%s1 + $0x8f8] sm:$0xff]
  %v315 = vld [vmem:[%s1 + $0x900] sm:$0xff]
  %v316 = vld [vmem:[%s1 + $0x908] sm:$0xff]
  %v317 = vld [vmem:[%s1 + $0x910] sm:$0xff]
  %v318 = vld [vmem:[%s1 + $0x918] sm:$0xff]
  %v319 = vld [vmem:[%s1 + $0x920] sm:$0xff]
  %v320 = vld [vmem:[%s1 + $0x928] sm:$0xff]
  %v321 = vld [vmem:[%s1 + $0x930] sm:$0xff]
  %v322 = vld [vmem:[%s1 + $0x938] sm:$0xff]
  %v323 = vld [vmem:[%s1 + $0x940] sm:$0xff]
  %v324 = vld [vmem:[%s1 + $0x948] sm:$0xff]
  %v325 = vld [vmem:[%s1 + $0x950] sm:$0xff]
  %v326 = vld [vmem:[%s1 + $0x958] sm:$0xff]
  %v327 = vld [vmem:[%s1 + $0x960] sm:$0xff]
  %v328 = vld [vmem:[%s1 + $0x968] sm:$0xff]
  %v329 = vld [vmem:[%s1 + $0x970] sm:$0xff]
  %v330 = vld [vmem:[%s1 + $0x978] sm:$0xff]
  %v331 = vld [vmem:[%s1 + $0x980] sm:$0xff]
  %v332 = vld [vmem:[%s1 + $0x988] sm:$0xff]
  %v333 = vld [vmem:[%s1 + $0x990] sm:$0xff]
  %v334 = vld [vmem:[%s1 + $0x998] sm:$0xff]
  %v335 = vld [vmem:[%s1 + $0x9a0] sm:$0xff]
  %v336 = vld [vmem:[%s1 + $0x9a8] sm:$0xff]
  %v337 = vld [vmem:[%s1 + $0x9b0] sm:$0xff]
  %v338 = vld [vmem:[%s1 + $0x9b8] sm:$0xff]
  %v339 = vld [vmem:[%s1 + $0x9c0] sm:$0xff]
  %v340 = vld [vmem:[%s1 + $0x9c8] sm:$0xff]
  %v341 = vld [vmem:[%s1 + $0x9d0] sm:$0xff]
  %v342 = vld [vmem:[%s1 + $0x9d8] sm:$0xff]
  %v343 = vld [vmem:[%s1 + $0x9e0] sm:$0xff]
  %v344 = vld [vmem:[%s1 + $0x9e8] sm:$0xff]
  %v345 = vld [vmem:[%s1 + $0x9f0] sm:$0xff]
  %v346 = vld [vmem:[%s1 + $0x9f8] sm:$0xff]
  %v347 = vld [vmem:[%s1 + $0xa00] sm:$0xff]
  %v348 = vld [vmem:[%s1 + $0xa08] sm:$0xff]
  %v349 = vld [vmem:[%s1 + $0xa10] sm:$0xff]
  %v350 = vld [vmem:[%s1 + $0xa18] sm:$0xff]
  %v351 = vld [vmem:[%s1 + $0xa20] sm:$0xff]
  %v352 = vld [vmem:[%s1 + $0xa28] sm:$0xff]
  %v353 = vld [vmem:[%s1 + $0xa30] sm:$0xff]
  %v354 = vld [vmem:[%s1 + $0xa38] sm:$0xff]
  %v355 = vld [vmem:[%s1 + $0xa40] sm:$0xff]
  %v356 = vld [vmem:[%s1 + $0xa48] sm:$0xff]
  %v357 = vld [vmem:[%s1 + $0xa50] sm:$0xff]
  %v358 = vld [vmem:[%s1 + $0xa58] sm:$0xff]
  %v359 = vld [vmem:[%s1 + $0xa60] sm:$0xff]
  %v360 = vld [vmem:[%s1 + $0xa68] sm:$0xff]
  %v361 = vld [vmem:[%s1 + $0xa70] sm:$0xff]
  %v362 = vld [vmem:[%s1 + $0xa78] sm:$0xff]
  %v363 = vld [vmem:[%s1 + $0xa80] sm:$0xff]
  %v364 = vld [vmem:[%s1 + $0xa88] sm:$0xff]
  %v365 = vld [vmem:[%s1 + $0xa90] sm:$0xff]
  %v366 = vld [vmem:[%s1 + $0xa98] sm:$0xff]
  %v367 = vld [vmem:[%s1 + $0xaa0] sm:$0xff]
  %v368 = vld [vmem:[%s1 + $0xaa8] sm:$0xff]
  %v369 = vld [vmem:[%s1 + $0xab0] sm:$0xff]
  %v370 = vld [vmem:[%s1 + $0xab8] sm:$0xff]
  %v371 = vld [vmem:[%s1 + $0xac0] sm:$0xff]
  %v372 = vld [vmem:[%s1 + $0xac8] sm:$0xff]
  %v373 = vld [vmem:[%s1 + $0xad0] sm:$0xff]
  %v374 = vld [vmem:[%s1 + $0xad8] sm:$0xff]
  %v375 = vld [vmem:[%s1 + $0xae0] sm:$0xff]
  %v376 = vld [vmem:[%s1 + $0xae8] sm:$0xff]
  %v377 = vld [vmem:[%s1 + $0xaf0] sm:$0xff]
  %v378 = vld [vmem:[%s1 + $0xaf8] sm:$0xff]
  %v379 = vld [vmem:[%s1 + $0xb00] sm:$0xff]
  %v380 = vld [vmem:[%s1 + $0xb08] sm:$0xff]
  %v381 = vld [vmem:[%s1 + $0xb10] sm:$0xff]
  %v382 = vld [vmem:[%s1 + $0xb18] sm:$0xff]
  %v383 = vld [vmem:[%s1 + $0xb20] sm:$0xff]
  %v384 = vld [vmem:[%s1 + $0xb28] sm:$0xff]
  %v385 = vld [vmem:[%s1 + $0xb30] sm:$0xff]
  %v386 = vld [vmem:[%s1 + $0xb38] sm:$0xff]
  %v387 = vld [vmem:[%s1 + $0xb40] sm:$0xff]
  %v388 = vld [vmem:[%s1 + $0xb48] sm:$0xff]
  %v389 = vld [vmem:[%s1 + $0xb50] sm:$0xff]
  %v390 = vld [vmem:[%s1 + $0xb58] sm:$0xff]
  %v391 = vld [vmem:[%s1 + $0xb60] sm:$0xff]
  %v392 = vld [vmem:[%s1 + $0xb68] sm:$0xff]
  %v393 = vld [vmem:[%s1 + $0xb70] sm:$0xff]
  %v394 = vld [vmem:[%s1 + $0xb78] sm:$0xff]
  %v395 = vld [vmem:[%s1 + $0xb80] sm:$0xff]
  %v396 = vld [vmem:[%s1 + $0xb88] sm:$0xff]
  %v397 = vld [vmem:[%s1 + $0xb90] sm:$0xff]
  %v398 = vld [vmem:[%s1 + $0xb98] sm:$0xff]
  %v399 = vld [vmem:[%s1 + $0xba0] sm:$0xff]
  %v400 = vld [vmem:[%s1 + $0xba8] sm:$0xff]
  %v401 = vld [vmem:[%s1 + $0xbb0] sm:$0xff]
  %v402 = vld [vmem:[%s1 + $0xbb8] sm:$0xff]
  %v403 = vld [vmem:[%s1 + $0xbc0] sm:$0xff]
  %v404 = vld [vmem:[%s1 + $0xbc8] sm:$0xff]
  %v405 = vld [vmem:[%s1 + $0xbd0] sm:$0xff]
  %v406 = vld [vmem:[%s1 + $0xbd8] sm:$0xff]
  %v407 = vld [vmem:[%s1 + $0xbe0] sm:$0xff]
  %v408 = vld [vmem:[%s1 + $0xbe8] sm:$0xff]
  %v409 = vld [vmem:[%s1 + $0xbf0] sm:$0xff]
  %v410 = vld [vmem:[%s1 + $0xbf8] sm:$0xff]
  %v411 = vld [vmem:[%s1 + $0xc00] sm:$0xff]
  %v412 = vld [vmem:[%s1 + $0xc08] sm:$0xff]
  %v413 = vld [vmem:[%s1 + $0xc10] sm:$0xff]
  %v414 = vld [vmem:[%s1 + $0xc18] sm:$0xff]
  %v415 = vld [vmem:[%s1 + $0xc20] sm:$0xff]
  %v416 = vld [vmem:[%s1 + $0xc28] sm:$0xff]
  %v417 = vld [vmem:[%s1 + $0xc30] sm:$0xff]
  %v418 = vld [vmem:[%s1 + $0xc38] sm:$0xff]
  %v419 = vld [vmem:[%s1 + $0xc40] sm:$0xff]
  %v420 = vld [vmem:[%s1 + $0xc48] sm:$0xff]
  %v421 = vld [vmem:[%s1 + $0xc50] sm:$0xff]
  %v422 = vld [vmem:[%s1 + $0xc58] sm:$0xff]
  %v423 = vld [vmem:[%s1 + $0xc60] sm:$0xff]
  %v424 = vld [vmem:[%s1 + $0xc68] sm:$0xff]
  %v425 = vld [vmem:[%s1 + $0xc70] sm:$0xff]
  %v426 = vld [vmem:[%s1 + $0xc78] sm:$0xff]
  %v427 = vld [vmem:[%s1 + $0xc80] sm:$0xff]
  %v428 = vld [vmem:[%s1 + $0xc88] sm:$0xff]
  %v429 = vld [vmem:[%s1 + $0xc90] sm:$0xff]
  %v430 = vld [vmem:[%s1 + $0xc98] sm:$0xff]
  %v431 = vld [vmem:[%s1 + $0xca0] sm:$0xff]
  %v432 = vld [vmem:[%s1 + $0xca8] sm:$0xff]
  %v433 = vld [vmem:[%s1 + $0xcb0] sm:$0xff]
  %v434 = vld [vmem:[%s1 + $0xcb8] sm:$0xff]
  %v435 = vld [vmem:[%s1 + $0xcc0] sm:$0xff]
  %v436 = vld [vmem:[%s1 + $0xcc8] sm:$0xff]
  %v437 = vld [vmem:[%s1 + $0xcd0] sm:$0xff]
  %v438 = vld [vmem:[%s1 + $0xcd8] sm:$0xff]
  %v439 = vld [vmem:[%s1 + $0xce0] sm:$0xff]
  %v440 = vld [vmem:[%s1 + $0xce8] sm:$0xff]
  %v441 = vld [vmem:[%s1 + $0xcf0] sm:$0xff]
  %v442 = vld [vmem:[%s1 + $0xcf8] sm:$0xff]
  %v443 = vld [vmem:[%s1 + $0xd00] sm:$0xff]
  %v444 = vld [vmem:[%s1 + $0xd08] sm:$0xff]
  %v445 = vld [vmem:[%s1 + $0xd10] sm:$0xff]
  %v446 = vld [vmem:[%s1 + $0xd18] sm:$0xff]
  %v447 = vld [vmem:[%s1 + $0xd20] sm:$0xff]
  %v448 = vld [vmem:[%s1 + $0xd28] sm:$0xff]
  %v449 = vld [vmem:[%s1 + $0xd30] sm:$0xff]
  %v450 = vld [vmem:[%s1 + $0xd38] sm:$0xff]
  %v451 = vld [vmem:[%s1 + $0xd40] sm:$0xff]
  %v452 = vld [vmem:[%s1 + $0xd48] sm:$0xff]
  %v453 = vld [vmem:[%s1 + $0xd50] sm:$0xff]
  %v454 = vld [vmem:[%s1 + $0xd58] sm:$0xff]
  %v455 = vld [vmem:[%s1 + $0xd60] sm:$0xff]
  %v456 = vld [vmem:[%s1 + $0xd68] sm:$0xff]
  %v457 = vld [vmem:[%s1 + $0xd70] sm:$0xff]
  %v458 = vld [vmem:[%s1 + $0xd78] sm:$0xff]
  %v459 = vld [vmem:[%s1 + $0xd80] sm:$0xff]
  %v460 = vld [vmem:[%s1 + $0xd88] sm:$0xff]
  %v461 = vld [vmem:[%s1 + $0xd90] sm:$0xff]
  %v462 = vld [vmem:[%s1 + $0xd98] sm:$0xff]
  %v463 = vld [vmem:[%s1 + $0xda0] sm:$0xff]
  %v464 = vld [vmem:[%s1 + $0xda8] sm:$0xff]
  %v465 = vld [vmem:[%s1 + $0xdb0] sm:$0xff]
  %v466 = vld [vmem:[%s1 + $0xdb8] sm:$0xff]
  %v467 = vld [vmem:[%s1 + $0xdc0] sm:$0xff]
  %v468 = vld [vmem:[%s1 + $0xdc8] sm:$0xff]
  %v469 = vld [vmem:[%s1 + $0xdd0] sm:$0xff]
  %v470 = vld [vmem:[%s1 + $0xdd8] sm:$0xff]
  %v471 = vld [vmem:[%s1 + $0xde0] sm:$0xff]
  %v472 = vld [vmem:[%s1 + $0xde8] sm:$0xff]
  %v473 = vld [vmem:[%s1 + $0xdf0] sm:$0xff]
  %v474 = vld [vmem:[%s1 + $0xdf8] sm:$0xff]
  %v475 = vld [vmem:[%s1 + $0xe00] sm:$0xff]
  %v476 = vld [vmem:[%s1 + $0xe08] sm:$0xff]
  %v477 = vld [vmem:[%s1 + $0xe10] sm:$0xff]
  %v478 = vld [vmem:[%s1 + $0xe18] sm:$0xff]
  %v479 = vld [vmem:[%s1 + $0xe20] sm:$0xff]
  %v480 = vld [vmem:[%s1 + $0xe28] sm:$0xff]
  %v481 = vld [vmem:[%s1 + $0xe30] sm:$0xff]
  %v482 = vld [vmem:[%s1 + $0xe38] sm:$0xff]
  %v483 = vld [vmem:[%s1 + $0xe40] sm:$0xff]
  %v484 = vld [vmem:[%s1 + $0xe48] sm:$0xff]
  %v485 = vld [vmem:[%s1 + $0xe50] sm:$0xff]
  %v486 = vld [vmem:[%s1 + $0xe58] sm:$0xff]
  %v487 = vld [vmem:[%s1 + $0xe60] sm:$0xff]
  %v488 = vld [vmem:[%s1 + $0xe68] sm:$0xff]
  %v489 = vld [vmem:[%s1 + $0xe70] sm:$0xff]
  %v490 = vld [vmem:[%s1 + $0xe78] sm:$0xff]
  %v491 = vld [vmem:[%s1 + $0xe80] sm:$0xff]
  %v492 = vld [vmem:[%s1 + $0xe88] sm:$0xff]
  %v493 = vld [vmem:[%s1 + $0xe90] sm:$0xff]
  %v494 = vld [vmem:[%s1 + $0xe98] sm:$0xff]
  %v495 = vld [vmem:[%s1 + $0xea0] sm:$0xff]
  %v496 = vld [vmem:[%s1 + $0xea8] sm:$0xff]
  %v497 = vld [vmem:[%s1 + $0xeb0] sm:$0xff]
  %v498 = vld [vmem:[%s1 + $0xeb8] sm:$0xff]
  %v499 = vld [vmem:[%s1 + $0xec0] sm:$0xff]
  %v500 = vld [vmem:[%s1 + $0xec8] sm:$0xff]
  %v501 = vld [vmem:[%s1 + $0xed0] sm:$0xff]
  %v502 = vld [vmem:[%s1 + $0xed8] sm:$0xff]
  %v503 = vld [vmem:[%s1 + $0xee0] sm:$0xff]
  %v504 = vld [vmem:[%s1 + $0xee8] sm:$0xff]
  %v505 = vld [vmem:[%s1 + $0xef0] sm:$0xff]
  %v506 = vld [vmem:[%s1 + $0xef8] sm:$0xff]
  %v507 = vld [vmem:[%s1 + $0xf00] sm:$0xff]
  %v508 = vld [vmem:[%s1 + $0xf08] sm:$0xff]
  %v509 = vld [vmem:[%s1 + $0xf10] sm:$0xff]
  %v510 = vld [vmem:[%s1 + $0xf18] sm:$0xff]
  %v511 = vld [vmem:[%s1 + $0xf20] sm:$0xff]
  %v512 = vld [vmem:[%s1 + $0xf28] sm:$0xff]
  %v513 = vld [vmem:[%s1 + $0xf30] sm:$0xff]
  %v514 = vld [vmem:[%s1 + $0xf38] sm:$0xff]
  %v515 = vld [vmem:[%s1 + $0xf40] sm:$0xff]
  %v516 = vld [vmem:[%s1 + $0xf48] sm:$0xff]
  %v517 = vld [vmem:[%s1 + $0xf50] sm:$0xff]
  %v518 = vld [vmem:[%s1 + $0xf58] sm:$0xff]
  %v519 = vld [vmem:[%s1 + $0xf60] sm:$0xff]
  %v520 = vld [vmem:[%s1 + $0xf68] sm:$0xff]
  %v521 = vld [vmem:[%s1 + $0xf70] sm:$0xff]
  %v522 = vld [vmem:[%s1 + $0xf78] sm:$0xff]
  %v523 = vld [vmem:[%s1 + $0xf80] sm:$0xff]
  %v524 = vld [vmem:[%s1 + $0xf88] sm:$0xff]
  %v525 = vld [vmem:[%s1 + $0xf90] sm:$0xff]
  %v526 = vld [vmem:[%s1 + $0xf98] sm:$0xff]
  %v527 = vld [vmem:[%s1 + $0xfa0] sm:$0xff]
  %v528 = vld [vmem:[%s1 + $0xfa8] sm:$0xff]
  %v529 = vld [vmem:[%s1 + $0xfb0] sm:$0xff]
  %v530 = vld [vmem:[%s1 + $0xfb8] sm:$0xff]
  %v531 = vld [vmem:[%s1 + $0xfc0] sm:$0xff]
  %v532 = vld [vmem:[%s1 + $0xfc8] sm:$0xff]
  %v533 = vld [vmem:[%s1 + $0xfd0] sm:$0xff]
  %v534 = vld [vmem:[%s1 + $0xfd8] sm:$0xff]
  %v535 = vld [vmem:[%s1 + $0xfe0] sm:$0xff]
  %v536 = vld [vmem:[%s1 + $0xfe8] sm:$0xff]
  %v537 = vld [vmem:[%s1 + $0xff0] sm:$0xff]
  %v538 = vld [vmem:[%s1 + $0xff8] sm:$0xff]
  %v539 = vld [vmem:[%s1 + $0x1000] sm:$0xff]
  %v540 = vld [vmem:[%s1 + $0x1008] sm:$0xff]
  %v541 = vld [vmem:[%s1 + $0x1010] sm:$0xff]
  %v542 = vld [vmem:[%s1 + $0x1018] sm:$0xff]
  %v543 = vld [vmem:[%s1 + $0x1020] sm:$0xff]
  %v544 = vld [vmem:[%s1 + $0x1028] sm:$0xff]
  %v545 = vld [vmem:[%s1 + $0x1030] sm:$0xff]
  %v546 = vld [vmem:[%s1 + $0x1038] sm:$0xff]
  %v547 = vld [vmem:[%s1 + $0x1040] sm:$0xff]
  %v548 = vld [vmem:[%s1 + $0x1048] sm:$0xff]
  %v549 = vld [vmem:[%s1 + $0x1050] sm:$0xff]
  %v550 = vld [vmem:[%s1 + $0x1058] sm:$0xff]
  %v551 = vld [vmem:[%s1 + $0x1060] sm:$0xff]
  %v552 = vld [vmem:[%s1 + $0x1068] sm:$0xff]
  %v553 = vld [vmem:[%s1 + $0x1070] sm:$0xff]
  %v554 = vld [vmem:[%s1 + $0x1078] sm:$0xff]
  %v555 = vld [vmem:[%s1 + $0x1080] sm:$0xff]
  %v556 = vld [vmem:[%s1 + $0x1088] sm:$0xff]
  %v557 = vld [vmem:[%s1 + $0x1090] sm:$0xff]
  %v558 = vld [vmem:[%s1 + $0x1098] sm:$0xff]
  %v559 = vld [vmem:[%s1 + $0x10a0] sm:$0xff]
  %v560 = vld [vmem:[%s1 + $0x10a8] sm:$0xff]
  %v561 = vld [vmem:[%s1 + $0x10b0] sm:$0xff]
  %v562 = vld [vmem:[%s1 + $0x10b8] sm:$0xff]
  %v563 = vld [vmem:[%s1 + $0x10c0] sm:$0xff]
  %v564 = vld [vmem:[%s1 + $0x10c8] sm:$0xff]
  %v565 = vld [vmem:[%s1 + $0x10d0] sm:$0xff]
  %v566 = vld [vmem:[%s1 + $0x10d8] sm:$0xff]
  %v567 = vld [vmem:[%s1 + $0x10e0] sm:$0xff]
  %v568 = vld [vmem:[%s1 + $0x10e8] sm:$0xff]
  %v569 = vld [vmem:[%s1 + $0x10f0] sm:$0xff]
  %v570 = vld [vmem:[%s1 + $0x10f8] sm:$0xff]
  %v571 = vld [vmem:[%s1 + $0x1100] sm:$0xff]
  %v572 = vld [vmem:[%s1 + $0x1108] sm:$0xff]
  %v573 = vld [vmem:[%s1 + $0x1110] sm:$0xff]
  %v574 = vld [vmem:[%s1 + $0x1118] sm:$0xff]
  %v575 = vld [vmem:[%s1 + $0x1120] sm:$0xff]
  %v576 = vld [vmem:[%s1 + $0x1128] sm:$0xff]
  %v577 = vld [vmem:[%s1 + $0x1130] sm:$0xff]
  %v578 = vld [vmem:[%s1 + $0x1138] sm:$0xff]
  %v579 = vld [vmem:[%s1 + $0x1140] sm:$0xff]
  %v580 = vld [vmem:[%s1 + $0x1148] sm:$0xff]
  %v581 = vld [vmem:[%s1 + $0x1150] sm:$0xff]
  %v582 = vld [vmem:[%s1 + $0x1158] sm:$0xff]
  %v583 = vld [vmem:[%s1 + $0x1160] sm:$0xff]
  %v584 = vld [vmem:[%s1 + $0x1168] sm:$0xff]
  %v585 = vld [vmem:[%s1 + $0x1170] sm:$0xff]
  %v586 = vld [vmem:[%s1 + $0x1178] sm:$0xff]
  %v587 = vld [vmem:[%s1 + $0x1180] sm:$0xff]
  %v588 = vld [vmem:[%s1 + $0x1188] sm:$0xff]
  %v589 = vld [vmem:[%s1 + $0x1190] sm:$0xff]
  %v590 = vld [vmem:[%s1 + $0x1198] sm:$0xff]
  %v591 = vld [vmem:[%s1 + $0x11a0] sm:$0xff]
  %v592 = vld [vmem:[%s1 + $0x11a8] sm:$0xff]
  %v593 = vld [vmem:[%s1 + $0x11b0] sm:$0xff]
  %v594 = vld [vmem:[%s1 + $0x11b8] sm:$0xff]
  %v595 = vld [vmem:[%s1 + $0x11c0] sm:$0xff]
  %v596 = vld [vmem:[%s1 + $0x11c8] sm:$0xff]
  %v597 = vld [vmem:[%s1 + $0x11d0] sm:$0xff]
  %v598 = vld [vmem:[%s1 + $0x11d8] sm:$0xff]
  %v599 = vld [vmem:[%s1 + $0x11e0] sm:$0xff]
  %v600 = vld [vmem:[%s1 + $0x11e8] sm:$0xff]
  %v601 = vld [vmem:[%s1 + $0x11f0] sm:$0xff]
  %v602 = vld [vmem:[%s1 + $0x11f8] sm:$0xff]
  %v603 = vld [vmem:[%s1 + $0x1200] sm:$0xff]
  %v604 = vld [vmem:[%s1 + $0x1208] sm:$0xff]
  %v605 = vld [vmem:[%s1 + $0x1210] sm:$0xff]
  %v606 = vld [vmem:[%s1 + $0x1218] sm:$0xff]
  %v607 = vld [vmem:[%s1 + $0x1220] sm:$0xff]
  %v608 = vld [vmem:[%s1 + $0x1228] sm:$0xff]
  %v609 = vld [vmem:[%s1 + $0x1230] sm:$0xff]
  %v610 = vld [vmem:[%s1 + $0x1238] sm:$0xff]
  %v611 = vld [vmem:[%s1 + $0x1240] sm:$0xff]
  %v612 = vld [vmem:[%s1 + $0x1248] sm:$0xff]
  %v613 = vld [vmem:[%s1 + $0x1250] sm:$0xff]
  %v614 = vld [vmem:[%s1 + $0x1258] sm:$0xff]
  %v615 = vld [vmem:[%s1 + $0x1260] sm:$0xff]
  %v616 = vld [vmem:[%s1 + $0x1268] sm:$0xff]
  %v617 = vld [vmem:[%s1 + $0x1270] sm:$0xff]
  %v618 = vld [vmem:[%s1 + $0x1278] sm:$0xff]
  %v619 = vld [vmem:[%s1 + $0x1280] sm:$0xff]
  %v620 = vld [vmem:[%s1 + $0x1288] sm:$0xff]
  %v621 = vld [vmem:[%s1 + $0x1290] sm:$0xff]
  %v622 = vld [vmem:[%s1 + $0x1298] sm:$0xff]
  %v623 = vld [vmem:[%s1 + $0x12a0] sm:$0xff]
  %v624 = vld [vmem:[%s1 + $0x12a8] sm:$0xff]
  %v625 = vld [vmem:[%s1 + $0x12b0] sm:$0xff]
  %v626 = vld [vmem:[%s1 + $0x12b8] sm:$0xff]
  %v627 = vld [vmem:[%s1 + $0x12c0] sm:$0xff]
  %v628 = vld [vmem:[%s1 + $0x12c8] sm:$0xff]
  %v629 = vld [vmem:[%s1 + $0x12d0] sm:$0xff]
  %v630 = vld [vmem:[%s1 + $0x12d8] sm:$0xff]
  %v631 = vld [vmem:[%s1 + $0x12e0] sm:$0xff]
  %v632 = vld [vmem:[%s1 + $0x12e8] sm:$0xff]
  %v633 = vld [vmem:[%s1 + $0x12f0] sm:$0xff]
  %v634 = vld [vmem:[%s1 + $0x12f8] sm:$0xff]
  %v635 = vld [vmem:[%s1 + $0x1300] sm:$0xff]
  %v636 = vld [vmem:[%s1 + $0x1308] sm:$0xff]
  %v637 = vld [vmem:[%s1 + $0x1310] sm:$0xff]
  %v638 = vld [vmem:[%s1 + $0x1318] sm:$0xff]
  %v639 = vld [vmem:[%s1 + $0x1320] sm:$0xff]
  %v640 = vld [vmem:[%s1 + $0x1328] sm:$0xff]
  %v641 = vld [vmem:[%s1 + $0x1330] sm:$0xff]
  %v642 = vld [vmem:[%s1 + $0x1338] sm:$0xff]
  %v643 = vld [vmem:[%s1 + $0x1340] sm:$0xff]
  %v644 = vld [vmem:[%s1 + $0x1348] sm:$0xff]
  %v645 = vld [vmem:[%s1 + $0x1350] sm:$0xff]
  %v646 = vld [vmem:[%s1 + $0x1358] sm:$0xff]
  %v647 = vld [vmem:[%s1 + $0x1360] sm:$0xff]
  %v648 = vld [vmem:[%s1 + $0x1368] sm:$0xff]
  %v649 = vld [vmem:[%s1 + $0x1370] sm:$0xff]
  %v650 = vld [vmem:[%s1 + $0x1378] sm:$0xff]
  %v651 = vld [vmem:[%s1 + $0x1380] sm:$0xff]
  %v652 = vld [vmem:[%s1 + $0x1388] sm:$0xff]
  %v653 = vld [vmem:[%s1 + $0x1390] sm:$0xff]
  %v654 = vld [vmem:[%s1 + $0x1398] sm:$0xff]
  %v655 = vld [vmem:[%s1 + $0x13a0] sm:$0xff]
  %v656 = vld [vmem:[%s1 + $0x13a8] sm:$0xff]
  %v657 = vld [vmem:[%s1 + $0x13b0] sm:$0xff]
  %v658 = vld [vmem:[%s1 + $0x13b8] sm:$0xff]
  %v659 = vld [vmem:[%s1 + $0x13c0] sm:$0xff]
  %v660 = vld [vmem:[%s1 + $0x13c8] sm:$0xff]
  %v661 = vld [vmem:[%s1 + $0x13d0] sm:$0xff]
  %v662 = vld [vmem:[%s1 + $0x13d8] sm:$0xff]
  %v663 = vld [vmem:[%s1 + $0x13e0] sm:$0xff]
  %v664 = vld [vmem:[%s1 + $0x13e8] sm:$0xff]
  %v665 = vld [vmem:[%s1 + $0x13f0] sm:$0xff]
  %v666 = vld [vmem:[%s1 + $0x13f8] sm:$0xff]
  %v667 = vld [vmem:[%s2] sm:$0xff]
  %v668 = vld [vmem:[%s2 + $0x8] sm:$0xff]
  %v671 = vlaneseq
  %v672 = vshrl.u32 %v671, 7
  %v673 = vsub.s32 0, %v672
  %v674 = vrot.slane %v667, %v673
  %v675 = vlaneseq
  %v676 = vshrl.u32 %v675, 7
  %v677 = vsub.s32 1, %v676
  %v678 = vrot.slane %v667, %v677
  %v679 = vlaneseq
  %v680 = vshrl.u32 %v679, 7
  %v681 = vsub.s32 2, %v680
  %v682 = vrot.slane %v667, %v681
  %v683 = vlaneseq
  %v684 = vshrl.u32 %v683, 7
  %v685 = vsub.s32 3, %v684
  %v686 = vrot.slane %v667, %v685
  %v687 = vlaneseq
  %v688 = vshrl.u32 %v687, 7
  %v689 = vsub.s32 4, %v688
  %v690 = vrot.slane %v667, %v689
  %v691 = vlaneseq
  %v692 = vshrl.u32 %v691, 7
  %v693 = vsub.s32 5, %v692
  %v694 = vrot.slane %v667, %v693
  %v695 = vlaneseq
  %v696 = vshrl.u32 %v695, 7
  %v697 = vsub.s32 6, %v696
  %v698 = vrot.slane %v667, %v697
  %v699 = vlaneseq
  %v700 = vshrl.u32 %v699, 7
  %v701 = vsub.s32 7, %v700
  %v702 = vrot.slane %v667, %v701
  %v703 = vlaneseq
  %v704 = vshrl.u32 %v703, 7
  %v705 = vsub.s32 0, %v704
  %v706 = vrot.slane %v668, %v705
  %v707 = vlaneseq
  %v708 = vshrl.u32 %v707, 7
  %v709 = vsub.s32 1, %v708
  %v710 = vrot.slane %v668, %v709
  %v711 = vlaneseq
  %v712 = vshrl.u32 %v711, 7
  %v713 = vsub.s32 2, %v712
  %v714 = vrot.slane %v668, %v713
  %v715 = vlaneseq
  %v716 = vshrl.u32 %v715, 7
  %v717 = vsub.s32 3, %v716
  %v718 = vrot.slane %v668, %v717
  %v719 = vlaneseq
  %v720 = vshrl.u32 %v719, 7
  %v721 = vsub.s32 4, %v720
  %v722 = vrot.slane %v668, %v721
  %v723 = vlaneseq
  %v724 = vshrl.u32 %v723, 7
  %v725 = vsub.s32 5, %v724
  %v726 = vrot.slane %v668, %v725
  %v727 = vlaneseq
  %v728 = vshrl.u32 %v727, 7
  %v729 = vsub.s32 6, %v728
  %v730 = vrot.slane %v668, %v729
  %v731 = vlaneseq
  %v732 = vshrl.u32 %v731, 7
  %v733 = vsub.s32 7, %v732
  %v734 = vrot.slane %v668, %v733
  %v757 = vunpack.c.l.b16 %v21
  %v758 = vunpack.c.h.b16 %v21
  %v759 = vunpack.c.l.b16 %v22
  %v760 = vunpack.c.h.b16 %v22
  %v761 = vunpack.c.l.b16 %v23
  %v762 = vunpack.c.l.b16 %v24
  %v763 = vunpack.c.h.b16 %v24
  %v764 = vunpack.c.l.b16 %v25
  %v765 = vunpack.c.h.b16 %v25
  %v766 = vunpack.c.l.b16 %v26
  %v767 = vpack.c.b16 %v762, %v757
  %v768 = vpack.c.b16 %v763, %v758
  %v769 = vpack.c.b16 %v764, %v759
  %v770 = vpack.c.b16 %v765, %v760
  %v771 = vpack.c.b16 %v766, %v761
  %v1417 = vunpack.c.l.b16 %v27
  %v1418 = vunpack.c.h.b16 %v27
  %v1419 = vunpack.c.l.b16 %v28
  %v1420 = vunpack.c.h.b16 %v28
  %v1421 = vunpack.c.l.b16 %v29
  %v1422 = vunpack.c.h.b16 %v29
  %v1423 = vunpack.c.l.b16 %v30
  %v1424 = vunpack.c.h.b16 %v30
  %v1425 = vunpack.c.l.b16 %v31
  %v1426 = vunpack.c.h.b16 %v31
  %v1427 = vunpack.c.l.b16 %v32
  %v1428 = vunpack.c.h.b16 %v32
  %v1429 = vunpack.c.l.b16 %v33
  %v1430 = vunpack.c.h.b16 %v33
  %v1431 = vunpack.c.l.b16 %v34
  %v1432 = vunpack.c.h.b16 %v34
  %v1433 = vunpack.c.l.b16 %v35
  %v1434 = vunpack.c.h.b16 %v35
  %v1435 = vunpack.c.l.b16 %v36
  %v1436 = vunpack.c.h.b16 %v36
  %v1437 = vunpack.c.l.b16 %v37
  %v1438 = vunpack.c.h.b16 %v37
  %v1439 = vunpack.c.l.b16 %v38
  %v1440 = vunpack.c.h.b16 %v38
  %v1441 = vunpack.c.l.b16 %v39
  %v1442 = vunpack.c.h.b16 %v39
  %v1443 = vunpack.c.l.b16 %v40
  %v1444 = vunpack.c.h.b16 %v40
  %v1445 = vunpack.c.l.b16 %v41
  %v1446 = vunpack.c.h.b16 %v41
  %v1447 = vunpack.c.l.b16 %v42
  %v1448 = vunpack.c.h.b16 %v42
  %v1449 = vunpack.c.l.b16 %v43
  %v1450 = vunpack.c.h.b16 %v43
  %v1451 = vunpack.c.l.b16 %v44
  %v1452 = vunpack.c.h.b16 %v44
  %v1453 = vunpack.c.l.b16 %v45
  %v1454 = vunpack.c.h.b16 %v45
  %v1455 = vunpack.c.l.b16 %v46
  %v1456 = vunpack.c.h.b16 %v46
  %v1457 = vunpack.c.l.b16 %v47
  %v1458 = vunpack.c.h.b16 %v47
  %v1459 = vunpack.c.l.b16 %v48
  %v1460 = vunpack.c.h.b16 %v48
  %v1461 = vunpack.c.l.b16 %v49
  %v1462 = vunpack.c.h.b16 %v49
  %v1463 = vunpack.c.l.b16 %v50
  %v1464 = vunpack.c.h.b16 %v50
  %v1465 = vunpack.c.l.b16 %v51
  %v1466 = vunpack.c.h.b16 %v51
  %v1467 = vunpack.c.l.b16 %v52
  %v1468 = vunpack.c.h.b16 %v52
  %v1469 = vunpack.c.l.b16 %v53
  %v1470 = vunpack.c.h.b16 %v53
  %v1471 = vunpack.c.l.b16 %v54
  %v1472 = vunpack.c.h.b16 %v54
  %v1473 = vunpack.c.l.b16 %v55
  %v1474 = vunpack.c.h.b16 %v55
  %v1475 = vunpack.c.l.b16 %v56
  %v1476 = vunpack.c.h.b16 %v56
  %v1477 = vunpack.c.l.b16 %v57
  %v1478 = vunpack.c.h.b16 %v57
  %v1479 = vunpack.c.l.b16 %v58
  %v1480 = vunpack.c.h.b16 %v58
  %v1481 = vunpack.c.l.b16 %v59
  %v1482 = vunpack.c.h.b16 %v59
  %v1483 = vunpack.c.l.b16 %v60
  %v1484 = vunpack.c.h.b16 %v60
  %v1485 = vunpack.c.l.b16 %v61
  %v1486 = vunpack.c.h.b16 %v61
  %v1487 = vunpack.c.l.b16 %v62
  %v1488 = vunpack.c.h.b16 %v62
  %v1489 = vunpack.c.l.b16 %v63
  %v1490 = vunpack.c.h.b16 %v63
  %v1491 = vunpack.c.l.b16 %v64
  %v1492 = vunpack.c.h.b16 %v64
  %v1493 = vunpack.c.l.b16 %v65
  %v1494 = vunpack.c.h.b16 %v65
  %v1495 = vunpack.c.l.b16 %v66
  %v1496 = vunpack.c.h.b16 %v66
  %v1497 = vunpack.c.l.b16 %v67
  %v1498 = vunpack.c.h.b16 %v67
  %v1499 = vunpack.c.l.b16 %v68
  %v1500 = vunpack.c.h.b16 %v68
  %v1501 = vunpack.c.l.b16 %v69
  %v1502 = vunpack.c.h.b16 %v69
  %v1503 = vunpack.c.l.b16 %v70
  %v1504 = vunpack.c.h.b16 %v70
  %v1505 = vunpack.c.l.b16 %v71
  %v1506 = vunpack.c.h.b16 %v71
  %v1507 = vunpack.c.l.b16 %v72
  %v1508 = vunpack.c.h.b16 %v72
  %v1509 = vunpack.c.l.b16 %v73
  %v1510 = vunpack.c.h.b16 %v73
  %v1511 = vunpack.c.l.b16 %v74
  %v1512 = vunpack.c.h.b16 %v74
  %v1513 = vunpack.c.l.b16 %v75
  %v1514 = vunpack.c.h.b16 %v75
  %v1515 = vunpack.c.l.b16 %v76
  %v1516 = vunpack.c.h.b16 %v76
  %v1517 = vunpack.c.l.b16 %v77
  %v1518 = vunpack.c.h.b16 %v77
  %v1519 = vunpack.c.l.b16 %v78
  %v1520 = vunpack.c.h.b16 %v78
  %v1521 = vunpack.c.l.b16 %v79
  %v1522 = vunpack.c.h.b16 %v79
  %v1523 = vunpack.c.l.b16 %v80
  %v1524 = vunpack.c.h.b16 %v80
  %v1525 = vunpack.c.l.b16 %v81
  %v1526 = vunpack.c.h.b16 %v81
  %v1527 = vunpack.c.l.b16 %v82
  %v1528 = vunpack.c.h.b16 %v82
  %v1529 = vunpack.c.l.b16 %v83
  %v1530 = vunpack.c.h.b16 %v83
  %v1531 = vunpack.c.l.b16 %v84
  %v1532 = vunpack.c.h.b16 %v84
  %v1533 = vunpack.c.l.b16 %v85
  %v1534 = vunpack.c.h.b16 %v85
  %v1535 = vunpack.c.l.b16 %v86
  %v1536 = vunpack.c.h.b16 %v86
  %v1537 = vunpack.c.l.b16 %v87
  %v1538 = vunpack.c.h.b16 %v87
  %v1539 = vunpack.c.l.b16 %v88
  %v1540 = vunpack.c.h.b16 %v88
  %v1541 = vunpack.c.l.b16 %v89
  %v1542 = vunpack.c.h.b16 %v89
  %v1543 = vunpack.c.l.b16 %v90
  %v1544 = vunpack.c.h.b16 %v90
  %v1545 = vunpack.c.l.b16 %v91
  %v1546 = vunpack.c.h.b16 %v91
  %v1547 = vunpack.c.l.b16 %v92
  %v1548 = vunpack.c.h.b16 %v92
  %v1549 = vunpack.c.l.b16 %v93
  %v1550 = vunpack.c.h.b16 %v93
  %v1551 = vunpack.c.l.b16 %v94
  %v1552 = vunpack.c.h.b16 %v94
  %v1553 = vunpack.c.l.b16 %v95
  %v1554 = vunpack.c.h.b16 %v95
  %v1555 = vunpack.c.l.b16 %v96
  %v1556 = vunpack.c.h.b16 %v96
  %v1557 = vunpack.c.l.b16 %v97
  %v1558 = vunpack.c.h.b16 %v97
  %v1559 = vunpack.c.l.b16 %v98
  %v1560 = vunpack.c.h.b16 %v98
  %v1561 = vunpack.c.l.b16 %v99
  %v1562 = vunpack.c.h.b16 %v99
  %v1563 = vunpack.c.l.b16 %v100
  %v1564 = vunpack.c.h.b16 %v100
  %v1565 = vunpack.c.l.b16 %v101
  %v1566 = vunpack.c.h.b16 %v101
  %v1567 = vunpack.c.l.b16 %v102
  %v1568 = vunpack.c.h.b16 %v102
  %v1569 = vunpack.c.l.b16 %v103
  %v1570 = vunpack.c.h.b16 %v103
  %v1571 = vunpack.c.l.b16 %v104
  %v1572 = vunpack.c.h.b16 %v104
  %v1573 = vunpack.c.l.b16 %v105
  %v1574 = vunpack.c.h.b16 %v105
  %v1575 = vunpack.c.l.b16 %v106
  %v1576 = vunpack.c.h.b16 %v106
  %v1577 = vunpack.c.l.b16 %v107
  %v1578 = vunpack.c.h.b16 %v107
  %v1579 = vunpack.c.l.b16 %v108
  %v1580 = vunpack.c.h.b16 %v108
  %v1581 = vunpack.c.l.b16 %v109
  %v1582 = vunpack.c.h.b16 %v109
  %v1583 = vunpack.c.l.b16 %v110
  %v1584 = vunpack.c.h.b16 %v110
  %v1585 = vunpack.c.l.b16 %v111
  %v1586 = vunpack.c.h.b16 %v111
  %v1587 = vunpack.c.l.b16 %v112
  %v1588 = vunpack.c.h.b16 %v112
  %v1589 = vunpack.c.l.b16 %v113
  %v1590 = vunpack.c.h.b16 %v113
  %v1591 = vunpack.c.l.b16 %v114
  %v1592 = vunpack.c.h.b16 %v114
  %v1593 = vunpack.c.l.b16 %v115
  %v1594 = vunpack.c.h.b16 %v115
  %v1595 = vunpack.c.l.b16 %v116
  %v1596 = vunpack.c.h.b16 %v116
  %v1597 = vunpack.c.l.b16 %v117
  %v1598 = vunpack.c.h.b16 %v117
  %v1599 = vunpack.c.l.b16 %v118
  %v1600 = vunpack.c.h.b16 %v118
  %v1601 = vunpack.c.l.b16 %v119
  %v1602 = vunpack.c.h.b16 %v119
  %v1603 = vunpack.c.l.b16 %v120
  %v1604 = vunpack.c.h.b16 %v120
  %v1605 = vunpack.c.l.b16 %v121
  %v1606 = vunpack.c.h.b16 %v121
  %v1607 = vunpack.c.l.b16 %v122
  %v1608 = vunpack.c.h.b16 %v122
  %v1609 = vunpack.c.l.b16 %v123
  %v1610 = vunpack.c.h.b16 %v123
  %v1611 = vunpack.c.l.b16 %v124
  %v1612 = vunpack.c.h.b16 %v124
  %v1613 = vunpack.c.l.b16 %v125
  %v1614 = vunpack.c.h.b16 %v125
  %v1615 = vunpack.c.l.b16 %v126
  %v1616 = vunpack.c.h.b16 %v126
  %v1617 = vunpack.c.l.b16 %v127
  %v1618 = vunpack.c.h.b16 %v127
  %v1619 = vunpack.c.l.b16 %v128
  %v1620 = vunpack.c.h.b16 %v128
  %v1621 = vunpack.c.l.b16 %v129
  %v1622 = vunpack.c.h.b16 %v129
  %v1623 = vunpack.c.l.b16 %v130
  %v1624 = vunpack.c.h.b16 %v130
  %v1625 = vunpack.c.l.b16 %v131
  %v1626 = vunpack.c.h.b16 %v131
  %v1627 = vunpack.c.l.b16 %v132
  %v1628 = vunpack.c.h.b16 %v132
  %v1629 = vunpack.c.l.b16 %v133
  %v1630 = vunpack.c.h.b16 %v133
  %v1631 = vunpack.c.l.b16 %v134
  %v1632 = vunpack.c.h.b16 %v134
  %v1633 = vunpack.c.l.b16 %v135
  %v1634 = vunpack.c.h.b16 %v135
  %v1635 = vunpack.c.l.b16 %v136
  %v1636 = vunpack.c.h.b16 %v136
  %v1637 = vunpack.c.l.b16 %v137
  %v1638 = vunpack.c.h.b16 %v137
  %v1639 = vunpack.c.l.b16 %v138
  %v1640 = vunpack.c.h.b16 %v138
  %v1641 = vunpack.c.l.b16 %v139
  %v1642 = vunpack.c.h.b16 %v139
  %v1643 = vunpack.c.l.b16 %v140
  %v1644 = vunpack.c.h.b16 %v140
  %v1645 = vunpack.c.l.b16 %v141
  %v1646 = vunpack.c.h.b16 %v141
  %v1647 = vunpack.c.l.b16 %v142
  %v1648 = vunpack.c.h.b16 %v142
  %v1649 = vunpack.c.l.b16 %v143
  %v1650 = vunpack.c.h.b16 %v143
  %v1651 = vunpack.c.l.b16 %v144
  %v1652 = vunpack.c.h.b16 %v144
  %v1653 = vunpack.c.l.b16 %v145
  %v1654 = vunpack.c.h.b16 %v145
  %v1655 = vunpack.c.l.b16 %v146
  %v1656 = vunpack.c.h.b16 %v146
  %v1657 = vunpack.c.l.b16 %v147
  %v1658 = vunpack.c.h.b16 %v147
  %v1659 = vunpack.c.l.b16 %v148
  %v1660 = vunpack.c.h.b16 %v148
  %v1661 = vunpack.c.l.b16 %v149
  %v1662 = vunpack.c.h.b16 %v149
  %v1663 = vunpack.c.l.b16 %v150
  %v1664 = vunpack.c.h.b16 %v150
  %v1665 = vunpack.c.l.b16 %v151
  %v1666 = vunpack.c.h.b16 %v151
  %v1667 = vunpack.c.l.b16 %v152
  %v1668 = vunpack.c.h.b16 %v152
  %v1669 = vunpack.c.l.b16 %v153
  %v1670 = vunpack.c.h.b16 %v153
  %v1671 = vunpack.c.l.b16 %v154
  %v1672 = vunpack.c.h.b16 %v154
  %v1673 = vunpack.c.l.b16 %v155
  %v1674 = vunpack.c.h.b16 %v155
  %v1675 = vunpack.c.l.b16 %v156
  %v1676 = vunpack.c.h.b16 %v156
  %v1677 = vunpack.c.l.b16 %v157
  %v1678 = vunpack.c.h.b16 %v157
  %v1679 = vunpack.c.l.b16 %v158
  %v1680 = vunpack.c.h.b16 %v158
  %v1681 = vunpack.c.l.b16 %v159
  %v1682 = vunpack.c.h.b16 %v159
  %v1683 = vunpack.c.l.b16 %v160
  %v1684 = vunpack.c.h.b16 %v160
  %v1685 = vunpack.c.l.b16 %v161
  %v1686 = vunpack.c.h.b16 %v161
  %v1687 = vunpack.c.l.b16 %v162
  %v1688 = vunpack.c.h.b16 %v162
  %v1689 = vunpack.c.l.b16 %v163
  %v1690 = vunpack.c.h.b16 %v163
  %v1691 = vunpack.c.l.b16 %v164
  %v1692 = vunpack.c.h.b16 %v164
  %v1693 = vunpack.c.l.b16 %v165
  %v1694 = vunpack.c.h.b16 %v165
  %v1695 = vunpack.c.l.b16 %v166
  %v1696 = vunpack.c.h.b16 %v166
  %v1697 = vunpack.c.l.b16 %v167
  %v1698 = vunpack.c.h.b16 %v167
  %v1699 = vunpack.c.l.b16 %v168
  %v1700 = vunpack.c.h.b16 %v168
  %v1701 = vunpack.c.l.b16 %v169
  %v1702 = vunpack.c.h.b16 %v169
  %v1703 = vunpack.c.l.b16 %v170
  %v1704 = vunpack.c.h.b16 %v170
  %v1705 = vunpack.c.l.b16 %v171
  %v1706 = vunpack.c.h.b16 %v171
  %v1707 = vunpack.c.l.b16 %v172
  %v1708 = vunpack.c.h.b16 %v172
  %v1709 = vunpack.c.l.b16 %v173
  %v1710 = vunpack.c.h.b16 %v173
  %v1711 = vunpack.c.l.b16 %v174
  %v1712 = vunpack.c.h.b16 %v174
  %v1713 = vunpack.c.l.b16 %v175
  %v1714 = vunpack.c.h.b16 %v175
  %v1715 = vunpack.c.l.b16 %v176
  %v1716 = vunpack.c.h.b16 %v176
  %v1717 = vunpack.c.l.b16 %v177
  %v1718 = vunpack.c.h.b16 %v177
  %v1719 = vunpack.c.l.b16 %v178
  %v1720 = vunpack.c.h.b16 %v178
  %v1721 = vunpack.c.l.b16 %v179
  %v1722 = vunpack.c.h.b16 %v179
  %v1723 = vunpack.c.l.b16 %v180
  %v1724 = vunpack.c.h.b16 %v180
  %v1725 = vunpack.c.l.b16 %v181
  %v1726 = vunpack.c.h.b16 %v181
  %v1727 = vunpack.c.l.b16 %v182
  %v1728 = vunpack.c.h.b16 %v182
  %v1729 = vunpack.c.l.b16 %v183
  %v1730 = vunpack.c.h.b16 %v183
  %v1731 = vunpack.c.l.b16 %v184
  %v1732 = vunpack.c.h.b16 %v184
  %v1733 = vunpack.c.l.b16 %v185
  %v1734 = vunpack.c.h.b16 %v185
  %v1735 = vunpack.c.l.b16 %v186
  %v1736 = vunpack.c.h.b16 %v186
  %v1737 = vunpack.c.l.b16 %v187
  %v1738 = vunpack.c.h.b16 %v187
  %v1739 = vunpack.c.l.b16 %v188
  %v1740 = vunpack.c.h.b16 %v188
  %v1741 = vunpack.c.l.b16 %v189
  %v1742 = vunpack.c.h.b16 %v189
  %v1743 = vunpack.c.l.b16 %v190
  %v1744 = vunpack.c.h.b16 %v190
  %v1745 = vunpack.c.l.b16 %v191
  %v1746 = vunpack.c.h.b16 %v191
  %v1747 = vunpack.c.l.b16 %v192
  %v1748 = vunpack.c.h.b16 %v192
  %v1749 = vunpack.c.l.b16 %v193
  %v1750 = vunpack.c.h.b16 %v193
  %v1751 = vunpack.c.l.b16 %v194
  %v1752 = vunpack.c.h.b16 %v194
  %v1753 = vunpack.c.l.b16 %v195
  %v1754 = vunpack.c.h.b16 %v195
  %v1755 = vunpack.c.l.b16 %v196
  %v1756 = vunpack.c.h.b16 %v196
  %v1757 = vunpack.c.l.b16 %v197
  %v1758 = vunpack.c.h.b16 %v197
  %v1759 = vunpack.c.l.b16 %v198
  %v1760 = vunpack.c.h.b16 %v198
  %v1761 = vunpack.c.l.b16 %v199
  %v1762 = vunpack.c.h.b16 %v199
  %v1763 = vunpack.c.l.b16 %v200
  %v1764 = vunpack.c.h.b16 %v200
  %v1765 = vunpack.c.l.b16 %v201
  %v1766 = vunpack.c.h.b16 %v201
  %v1767 = vunpack.c.l.b16 %v202
  %v1768 = vunpack.c.h.b16 %v202
  %v1769 = vunpack.c.l.b16 %v203
  %v1770 = vunpack.c.h.b16 %v203
  %v1771 = vunpack.c.l.b16 %v204
  %v1772 = vunpack.c.h.b16 %v204
  %v1773 = vunpack.c.l.b16 %v205
  %v1774 = vunpack.c.h.b16 %v205
  %v1775 = vunpack.c.l.b16 %v206
  %v1776 = vunpack.c.h.b16 %v206
  %v1777 = vunpack.c.l.b16 %v207
  %v1778 = vunpack.c.h.b16 %v207
  %v1779 = vunpack.c.l.b16 %v208
  %v1780 = vunpack.c.h.b16 %v208
  %v1781 = vunpack.c.l.b16 %v209
  %v1782 = vunpack.c.h.b16 %v209
  %v1783 = vunpack.c.l.b16 %v210
  %v1784 = vunpack.c.h.b16 %v210
  %v1785 = vunpack.c.l.b16 %v211
  %v1786 = vunpack.c.h.b16 %v211
  %v1787 = vunpack.c.l.b16 %v212
  %v1788 = vunpack.c.h.b16 %v212
  %v1789 = vunpack.c.l.b16 %v213
  %v1790 = vunpack.c.h.b16 %v213
  %v1791 = vunpack.c.l.b16 %v214
  %v1792 = vunpack.c.h.b16 %v214
  %v1793 = vunpack.c.l.b16 %v215
  %v1794 = vunpack.c.h.b16 %v215
  %v1795 = vunpack.c.l.b16 %v216
  %v1796 = vunpack.c.h.b16 %v216
  %v1797 = vunpack.c.l.b16 %v217
  %v1798 = vunpack.c.h.b16 %v217
  %v1799 = vunpack.c.l.b16 %v218
  %v1800 = vunpack.c.h.b16 %v218
  %v1801 = vunpack.c.l.b16 %v219
  %v1802 = vunpack.c.h.b16 %v219
  %v1803 = vunpack.c.l.b16 %v220
  %v1804 = vunpack.c.h.b16 %v220
  %v1805 = vunpack.c.l.b16 %v221
  %v1806 = vunpack.c.h.b16 %v221
  %v1807 = vunpack.c.l.b16 %v222
  %v1808 = vunpack.c.h.b16 %v222
  %v1809 = vunpack.c.l.b16 %v223
  %v1810 = vunpack.c.h.b16 %v223
  %v1811 = vunpack.c.l.b16 %v224
  %v1812 = vunpack.c.h.b16 %v224
  %v1813 = vunpack.c.l.b16 %v225
  %v1814 = vunpack.c.h.b16 %v225
  %v1815 = vunpack.c.l.b16 %v226
  %v1816 = vunpack.c.h.b16 %v226
  %v1817 = vunpack.c.l.b16 %v227
  %v1818 = vunpack.c.h.b16 %v227
  %v1819 = vunpack.c.l.b16 %v228
  %v1820 = vunpack.c.h.b16 %v228
  %v1821 = vunpack.c.l.b16 %v229
  %v1822 = vunpack.c.h.b16 %v229
  %v1823 = vunpack.c.l.b16 %v230
  %v1824 = vunpack.c.h.b16 %v230
  %v1825 = vunpack.c.l.b16 %v231
  %v1826 = vunpack.c.h.b16 %v231
  %v1827 = vunpack.c.l.b16 %v232
  %v1828 = vunpack.c.h.b16 %v232
  %v1829 = vunpack.c.l.b16 %v233
  %v1830 = vunpack.c.h.b16 %v233
  %v1831 = vunpack.c.l.b16 %v234
  %v1832 = vunpack.c.h.b16 %v234
  %v1833 = vunpack.c.l.b16 %v235
  %v1834 = vunpack.c.h.b16 %v235
  %v1835 = vunpack.c.l.b16 %v236
  %v1836 = vunpack.c.h.b16 %v236
  %v1837 = vunpack.c.l.b16 %v237
  %v1838 = vunpack.c.h.b16 %v237
  %v1839 = vunpack.c.l.b16 %v238
  %v1840 = vunpack.c.h.b16 %v238
  %v1841 = vunpack.c.l.b16 %v239
  %v1842 = vunpack.c.h.b16 %v239
  %v1843 = vunpack.c.l.b16 %v240
  %v1844 = vunpack.c.h.b16 %v240
  %v1845 = vunpack.c.l.b16 %v241
  %v1846 = vunpack.c.h.b16 %v241
  %v1847 = vunpack.c.l.b16 %v242
  %v1848 = vunpack.c.h.b16 %v242
  %v1849 = vunpack.c.l.b16 %v243
  %v1850 = vunpack.c.h.b16 %v243
  %v1851 = vunpack.c.l.b16 %v244
  %v1852 = vunpack.c.h.b16 %v244
  %v1853 = vunpack.c.l.b16 %v245
  %v1854 = vunpack.c.h.b16 %v245
  %v1855 = vunpack.c.l.b16 %v246
  %v1856 = vunpack.c.h.b16 %v246
  %v1857 = vunpack.c.l.b16 %v247
  %v1858 = vunpack.c.h.b16 %v247
  %v1859 = vunpack.c.l.b16 %v248
  %v1860 = vunpack.c.h.b16 %v248
  %v1861 = vunpack.c.l.b16 %v249
  %v1862 = vunpack.c.h.b16 %v249
  %v1863 = vunpack.c.l.b16 %v250
  %v1864 = vunpack.c.h.b16 %v250
  %v1865 = vunpack.c.l.b16 %v251
  %v1866 = vunpack.c.h.b16 %v251
  %v1867 = vunpack.c.l.b16 %v252
  %v1868 = vunpack.c.h.b16 %v252
  %v1869 = vunpack.c.l.b16 %v253
  %v1870 = vunpack.c.h.b16 %v253
  %v1871 = vunpack.c.l.b16 %v254
  %v1872 = vunpack.c.h.b16 %v254
  %v1873 = vunpack.c.l.b16 %v255
  %v1874 = vunpack.c.h.b16 %v255
  %v1875 = vunpack.c.l.b16 %v256
  %v1876 = vunpack.c.h.b16 %v256
  %v1877 = vunpack.c.l.b16 %v257
  %v1878 = vunpack.c.h.b16 %v257
  %v1879 = vunpack.c.l.b16 %v258
  %v1880 = vunpack.c.h.b16 %v258
  %v1881 = vunpack.c.l.b16 %v259
  %v1882 = vunpack.c.h.b16 %v259
  %v1883 = vunpack.c.l.b16 %v260
  %v1884 = vunpack.c.h.b16 %v260
  %v1885 = vunpack.c.l.b16 %v261
  %v1886 = vunpack.c.h.b16 %v261
  %v1887 = vunpack.c.l.b16 %v262
  %v1888 = vunpack.c.h.b16 %v262
  %v1889 = vunpack.c.l.b16 %v263
  %v1890 = vunpack.c.h.b16 %v263
  %v1891 = vunpack.c.l.b16 %v264
  %v1892 = vunpack.c.h.b16 %v264
  %v1893 = vunpack.c.l.b16 %v265
  %v1894 = vunpack.c.h.b16 %v265
  %v1895 = vunpack.c.l.b16 %v266
  %v1896 = vunpack.c.h.b16 %v266
  %v1897 = vunpack.c.l.b16 %v267
  %v1898 = vunpack.c.h.b16 %v267
  %v1899 = vunpack.c.l.b16 %v268
  %v1900 = vunpack.c.h.b16 %v268
  %v1901 = vunpack.c.l.b16 %v269
  %v1902 = vunpack.c.h.b16 %v269
  %v1903 = vunpack.c.l.b16 %v270
  %v1904 = vunpack.c.h.b16 %v270
  %v1905 = vunpack.c.l.b16 %v271
  %v1906 = vunpack.c.h.b16 %v271
  %v1907 = vunpack.c.l.b16 %v272
  %v1908 = vunpack.c.h.b16 %v272
  %v1909 = vunpack.c.l.b16 %v273
  %v1910 = vunpack.c.h.b16 %v273
  %v1911 = vunpack.c.l.b16 %v274
  %v1912 = vunpack.c.h.b16 %v274
  %v1913 = vunpack.c.l.b16 %v275
  %v1914 = vunpack.c.h.b16 %v275
  %v1915 = vunpack.c.l.b16 %v276
  %v1916 = vunpack.c.h.b16 %v276
  %v1917 = vunpack.c.l.b16 %v277
  %v1918 = vunpack.c.h.b16 %v277
  %v1919 = vunpack.c.l.b16 %v278
  %v1920 = vunpack.c.h.b16 %v278
  %v1921 = vunpack.c.l.b16 %v279
  %v1922 = vunpack.c.h.b16 %v279
  %v1923 = vunpack.c.l.b16 %v280
  %v1924 = vunpack.c.h.b16 %v280
  %v1925 = vunpack.c.l.b16 %v281
  %v1926 = vunpack.c.h.b16 %v281
  %v1927 = vunpack.c.l.b16 %v282
  %v1928 = vunpack.c.h.b16 %v282
  %v1929 = vunpack.c.l.b16 %v283
  %v1930 = vunpack.c.h.b16 %v283
  %v1931 = vunpack.c.l.b16 %v284
  %v1932 = vunpack.c.h.b16 %v284
  %v1933 = vunpack.c.l.b16 %v285
  %v1934 = vunpack.c.h.b16 %v285
  %v1935 = vunpack.c.l.b16 %v286
  %v1936 = vunpack.c.h.b16 %v286
  %v1937 = vunpack.c.l.b16 %v287
  %v1938 = vunpack.c.h.b16 %v287
  %v1939 = vunpack.c.l.b16 %v288
  %v1940 = vunpack.c.h.b16 %v288
  %v1941 = vunpack.c.l.b16 %v289
  %v1942 = vunpack.c.h.b16 %v289
  %v1943 = vunpack.c.l.b16 %v290
  %v1944 = vunpack.c.h.b16 %v290
  %v1945 = vunpack.c.l.b16 %v291
  %v1946 = vunpack.c.h.b16 %v291
  %v1947 = vunpack.c.l.b16 %v292
  %v1948 = vunpack.c.h.b16 %v292
  %v1949 = vunpack.c.l.b16 %v293
  %v1950 = vunpack.c.h.b16 %v293
  %v1951 = vunpack.c.l.b16 %v294
  %v1952 = vunpack.c.h.b16 %v294
  %v1953 = vunpack.c.l.b16 %v295
  %v1954 = vunpack.c.h.b16 %v295
  %v1955 = vunpack.c.l.b16 %v296
  %v1956 = vunpack.c.h.b16 %v296
  %v1957 = vunpack.c.l.b16 %v297
  %v1958 = vunpack.c.h.b16 %v297
  %v1959 = vunpack.c.l.b16 %v298
  %v1960 = vunpack.c.h.b16 %v298
  %v1961 = vunpack.c.l.b16 %v299
  %v1962 = vunpack.c.h.b16 %v299
  %v1963 = vunpack.c.l.b16 %v300
  %v1964 = vunpack.c.h.b16 %v300
  %v1965 = vunpack.c.l.b16 %v301
  %v1966 = vunpack.c.h.b16 %v301
  %v1967 = vunpack.c.l.b16 %v302
  %v1968 = vunpack.c.h.b16 %v302
  %v1969 = vunpack.c.l.b16 %v303
  %v1970 = vunpack.c.h.b16 %v303
  %v1971 = vunpack.c.l.b16 %v304
  %v1972 = vunpack.c.h.b16 %v304
  %v1973 = vunpack.c.l.b16 %v305
  %v1974 = vunpack.c.h.b16 %v305
  %v1975 = vunpack.c.l.b16 %v306
  %v1976 = vunpack.c.h.b16 %v306
  %v1977 = vunpack.c.l.b16 %v307
  %v1978 = vunpack.c.h.b16 %v307
  %v1979 = vunpack.c.l.b16 %v308
  %v1980 = vunpack.c.h.b16 %v308
  %v1981 = vunpack.c.l.b16 %v309
  %v1982 = vunpack.c.h.b16 %v309
  %v1983 = vunpack.c.l.b16 %v310
  %v1984 = vunpack.c.h.b16 %v310
  %v1985 = vunpack.c.l.b16 %v311
  %v1986 = vunpack.c.h.b16 %v311
  %v1987 = vunpack.c.l.b16 %v312
  %v1988 = vunpack.c.h.b16 %v312
  %v1989 = vunpack.c.l.b16 %v313
  %v1990 = vunpack.c.h.b16 %v313
  %v1991 = vunpack.c.l.b16 %v314
  %v1992 = vunpack.c.h.b16 %v314
  %v1993 = vunpack.c.l.b16 %v315
  %v1994 = vunpack.c.h.b16 %v315
  %v1995 = vunpack.c.l.b16 %v316
  %v1996 = vunpack.c.h.b16 %v316
  %v1997 = vunpack.c.l.b16 %v317
  %v1998 = vunpack.c.h.b16 %v317
  %v1999 = vunpack.c.l.b16 %v318
  %v2000 = vunpack.c.h.b16 %v318
  %v2001 = vunpack.c.l.b16 %v319
  %v2002 = vunpack.c.h.b16 %v319
  %v2003 = vunpack.c.l.b16 %v320
  %v2004 = vunpack.c.h.b16 %v320
  %v2005 = vunpack.c.l.b16 %v321
  %v2006 = vunpack.c.h.b16 %v321
  %v2007 = vunpack.c.l.b16 %v322
  %v2008 = vunpack.c.h.b16 %v322
  %v2009 = vunpack.c.l.b16 %v323
  %v2010 = vunpack.c.h.b16 %v323
  %v2011 = vunpack.c.l.b16 %v324
  %v2012 = vunpack.c.h.b16 %v324
  %v2013 = vunpack.c.l.b16 %v325
  %v2014 = vunpack.c.h.b16 %v325
  %v2015 = vunpack.c.l.b16 %v326
  %v2016 = vunpack.c.h.b16 %v326
  %v2017 = vunpack.c.l.b16 %v327
  %v2018 = vunpack.c.h.b16 %v327
  %v2019 = vunpack.c.l.b16 %v328
  %v2020 = vunpack.c.h.b16 %v328
  %v2021 = vunpack.c.l.b16 %v329
  %v2022 = vunpack.c.h.b16 %v329
  %v2023 = vunpack.c.l.b16 %v330
  %v2024 = vunpack.c.h.b16 %v330
  %v2025 = vunpack.c.l.b16 %v331
  %v2026 = vunpack.c.h.b16 %v331
  %v2027 = vunpack.c.l.b16 %v332
  %v2028 = vunpack.c.h.b16 %v332
  %v2029 = vunpack.c.l.b16 %v333
  %v2030 = vunpack.c.h.b16 %v333
  %v2031 = vunpack.c.l.b16 %v334
  %v2032 = vunpack.c.h.b16 %v334
  %v2033 = vunpack.c.l.b16 %v335
  %v2034 = vunpack.c.h.b16 %v335
  %v2035 = vunpack.c.l.b16 %v336
  %v2036 = vunpack.c.h.b16 %v336
  %v2037 = vunpack.c.l.b16 %v337
  %v2038 = vunpack.c.h.b16 %v337
  %v2039 = vunpack.c.l.b16 %v338
  %v2040 = vunpack.c.h.b16 %v338
  %v2041 = vunpack.c.l.b16 %v339
  %v2042 = vunpack.c.h.b16 %v339
  %v2043 = vunpack.c.l.b16 %v340
  %v2044 = vunpack.c.h.b16 %v340
  %v2045 = vunpack.c.l.b16 %v341
  %v2046 = vunpack.c.h.b16 %v341
  %v2047 = vunpack.c.l.b16 %v342
  %v2048 = vunpack.c.h.b16 %v342
  %v2049 = vunpack.c.l.b16 %v343
  %v2050 = vunpack.c.h.b16 %v343
  %v2051 = vunpack.c.l.b16 %v344
  %v2052 = vunpack.c.h.b16 %v344
  %v2053 = vunpack.c.l.b16 %v345
  %v2054 = vunpack.c.h.b16 %v345
  %v2055 = vunpack.c.l.b16 %v346
  %v2056 = vunpack.c.h.b16 %v346
  %v2057 = vunpack.c.l.b16 %v347
  %v2058 = vunpack.c.h.b16 %v347
  %v2059 = vunpack.c.l.b16 %v348
  %v2060 = vunpack.c.h.b16 %v348
  %v2061 = vunpack.c.l.b16 %v349
  %v2062 = vunpack.c.h.b16 %v349
  %v2063 = vunpack.c.l.b16 %v350
  %v2064 = vunpack.c.h.b16 %v350
  %v2065 = vunpack.c.l.b16 %v351
  %v2066 = vunpack.c.h.b16 %v351
  %v2067 = vunpack.c.l.b16 %v352
  %v2068 = vunpack.c.h.b16 %v352
  %v2069 = vunpack.c.l.b16 %v353
  %v2070 = vunpack.c.h.b16 %v353
  %v2071 = vunpack.c.l.b16 %v354
  %v2072 = vunpack.c.h.b16 %v354
  %v2073 = vunpack.c.l.b16 %v355
  %v2074 = vunpack.c.h.b16 %v355
  %v2075 = vunpack.c.l.b16 %v356
  %v2076 = vunpack.c.h.b16 %v356
  %v2077 = vunpack.c.l.b16 %v357
  %v2078 = vunpack.c.h.b16 %v357
  %v2079 = vunpack.c.l.b16 %v358
  %v2080 = vunpack.c.h.b16 %v358
  %v2081 = vunpack.c.l.b16 %v359
  %v2082 = vunpack.c.h.b16 %v359
  %v2083 = vunpack.c.l.b16 %v360
  %v2084 = vunpack.c.h.b16 %v360
  %v2085 = vunpack.c.l.b16 %v361
  %v2086 = vunpack.c.h.b16 %v361
  %v2087 = vunpack.c.l.b16 %v362
  %v2088 = vunpack.c.h.b16 %v362
  %v2089 = vunpack.c.l.b16 %v363
  %v2090 = vunpack.c.h.b16 %v363
  %v2091 = vunpack.c.l.b16 %v364
  %v2092 = vunpack.c.h.b16 %v364
  %v2093 = vunpack.c.l.b16 %v365
  %v2094 = vunpack.c.h.b16 %v365
  %v2095 = vunpack.c.l.b16 %v366
  %v2096 = vunpack.c.h.b16 %v366
  %v2097 = vunpack.c.l.b16 %v367
  %v2098 = vunpack.c.h.b16 %v367
  %v2099 = vunpack.c.l.b16 %v368
  %v2100 = vunpack.c.h.b16 %v368
  %v2101 = vunpack.c.l.b16 %v369
  %v2102 = vunpack.c.h.b16 %v369
  %v2103 = vunpack.c.l.b16 %v370
  %v2104 = vunpack.c.h.b16 %v370
  %v2105 = vunpack.c.l.b16 %v371
  %v2106 = vunpack.c.h.b16 %v371
  %v2107 = vunpack.c.l.b16 %v372
  %v2108 = vunpack.c.h.b16 %v372
  %v2109 = vunpack.c.l.b16 %v373
  %v2110 = vunpack.c.h.b16 %v373
  %v2111 = vunpack.c.l.b16 %v374
  %v2112 = vunpack.c.h.b16 %v374
  %v2113 = vunpack.c.l.b16 %v375
  %v2114 = vunpack.c.h.b16 %v375
  %v2115 = vunpack.c.l.b16 %v376
  %v2116 = vunpack.c.h.b16 %v376
  %v2117 = vunpack.c.l.b16 %v377
  %v2118 = vunpack.c.h.b16 %v377
  %v2119 = vunpack.c.l.b16 %v378
  %v2120 = vunpack.c.h.b16 %v378
  %v2121 = vunpack.c.l.b16 %v379
  %v2122 = vunpack.c.h.b16 %v379
  %v2123 = vunpack.c.l.b16 %v380
  %v2124 = vunpack.c.h.b16 %v380
  %v2125 = vunpack.c.l.b16 %v381
  %v2126 = vunpack.c.h.b16 %v381
  %v2127 = vunpack.c.l.b16 %v382
  %v2128 = vunpack.c.h.b16 %v382
  %v2129 = vunpack.c.l.b16 %v383
  %v2130 = vunpack.c.h.b16 %v383
  %v2131 = vunpack.c.l.b16 %v384
  %v2132 = vunpack.c.h.b16 %v384
  %v2133 = vunpack.c.l.b16 %v385
  %v2134 = vunpack.c.h.b16 %v385
  %v2135 = vunpack.c.l.b16 %v386
  %v2136 = vunpack.c.h.b16 %v386
  %v2137 = vunpack.c.l.b16 %v387
  %v2138 = vunpack.c.h.b16 %v387
  %v2139 = vunpack.c.l.b16 %v388
  %v2140 = vunpack.c.h.b16 %v388
  %v2141 = vunpack.c.l.b16 %v389
  %v2142 = vunpack.c.h.b16 %v389
  %v2143 = vunpack.c.l.b16 %v390
  %v2144 = vunpack.c.h.b16 %v390
  %v2145 = vunpack.c.l.b16 %v391
  %v2146 = vunpack.c.h.b16 %v391
  %v2147 = vunpack.c.l.b16 %v392
  %v2148 = vunpack.c.h.b16 %v392
  %v2149 = vunpack.c.l.b16 %v393
  %v2150 = vunpack.c.h.b16 %v393
  %v2151 = vunpack.c.l.b16 %v394
  %v2152 = vunpack.c.h.b16 %v394
  %v2153 = vunpack.c.l.b16 %v395
  %v2154 = vunpack.c.h.b16 %v395
  %v2155 = vunpack.c.l.b16 %v396
  %v2156 = vunpack.c.h.b16 %v396
  %v2157 = vunpack.c.l.b16 %v397
  %v2158 = vunpack.c.h.b16 %v397
  %v2159 = vunpack.c.l.b16 %v398
  %v2160 = vunpack.c.h.b16 %v398
  %v2161 = vunpack.c.l.b16 %v399
  %v2162 = vunpack.c.h.b16 %v399
  %v2163 = vunpack.c.l.b16 %v400
  %v2164 = vunpack.c.h.b16 %v400
  %v2165 = vunpack.c.l.b16 %v401
  %v2166 = vunpack.c.h.b16 %v401
  %v2167 = vunpack.c.l.b16 %v402
  %v2168 = vunpack.c.h.b16 %v402
  %v2169 = vunpack.c.l.b16 %v403
  %v2170 = vunpack.c.h.b16 %v403
  %v2171 = vunpack.c.l.b16 %v404
  %v2172 = vunpack.c.h.b16 %v404
  %v2173 = vunpack.c.l.b16 %v405
  %v2174 = vunpack.c.h.b16 %v405
  %v2175 = vunpack.c.l.b16 %v406
  %v2176 = vunpack.c.h.b16 %v406
  %v2177 = vunpack.c.l.b16 %v407
  %v2178 = vunpack.c.h.b16 %v407
  %v2179 = vunpack.c.l.b16 %v408
  %v2180 = vunpack.c.h.b16 %v408
  %v2181 = vunpack.c.l.b16 %v409
  %v2182 = vunpack.c.h.b16 %v409
  %v2183 = vunpack.c.l.b16 %v410
  %v2184 = vunpack.c.h.b16 %v410
  %v2185 = vunpack.c.l.b16 %v411
  %v2186 = vunpack.c.h.b16 %v411
  %v2187 = vunpack.c.l.b16 %v412
  %v2188 = vunpack.c.h.b16 %v412
  %v2189 = vunpack.c.l.b16 %v413
  %v2190 = vunpack.c.h.b16 %v413
  %v2191 = vunpack.c.l.b16 %v414
  %v2192 = vunpack.c.h.b16 %v414
  %v2193 = vunpack.c.l.b16 %v415
  %v2194 = vunpack.c.h.b16 %v415
  %v2195 = vunpack.c.l.b16 %v416
  %v2196 = vunpack.c.h.b16 %v416
  %v2197 = vunpack.c.l.b16 %v417
  %v2198 = vunpack.c.h.b16 %v417
  %v2199 = vunpack.c.l.b16 %v418
  %v2200 = vunpack.c.h.b16 %v418
  %v2201 = vunpack.c.l.b16 %v419
  %v2202 = vunpack.c.h.b16 %v419
  %v2203 = vunpack.c.l.b16 %v420
  %v2204 = vunpack.c.h.b16 %v420
  %v2205 = vunpack.c.l.b16 %v421
  %v2206 = vunpack.c.h.b16 %v421
  %v2207 = vunpack.c.l.b16 %v422
  %v2208 = vunpack.c.h.b16 %v422
  %v2209 = vunpack.c.l.b16 %v423
  %v2210 = vunpack.c.h.b16 %v423
  %v2211 = vunpack.c.l.b16 %v424
  %v2212 = vunpack.c.h.b16 %v424
  %v2213 = vunpack.c.l.b16 %v425
  %v2214 = vunpack.c.h.b16 %v425
  %v2215 = vunpack.c.l.b16 %v426
  %v2216 = vunpack.c.h.b16 %v426
  %v2217 = vunpack.c.l.b16 %v427
  %v2218 = vunpack.c.h.b16 %v427
  %v2219 = vunpack.c.l.b16 %v428
  %v2220 = vunpack.c.h.b16 %v428
  %v2221 = vunpack.c.l.b16 %v429
  %v2222 = vunpack.c.h.b16 %v429
  %v2223 = vunpack.c.l.b16 %v430
  %v2224 = vunpack.c.h.b16 %v430
  %v2225 = vunpack.c.l.b16 %v431
  %v2226 = vunpack.c.h.b16 %v431
  %v2227 = vunpack.c.l.b16 %v432
  %v2228 = vunpack.c.h.b16 %v432
  %v2229 = vunpack.c.l.b16 %v433
  %v2230 = vunpack.c.h.b16 %v433
  %v2231 = vunpack.c.l.b16 %v434
  %v2232 = vunpack.c.h.b16 %v434
  %v2233 = vunpack.c.l.b16 %v435
  %v2234 = vunpack.c.h.b16 %v435
  %v2235 = vunpack.c.l.b16 %v436
  %v2236 = vunpack.c.h.b16 %v436
  %v2237 = vunpack.c.l.b16 %v437
  %v2238 = vunpack.c.h.b16 %v437
  %v2239 = vunpack.c.l.b16 %v438
  %v2240 = vunpack.c.h.b16 %v438
  %v2241 = vunpack.c.l.b16 %v439
  %v2242 = vunpack.c.h.b16 %v439
  %v2243 = vunpack.c.l.b16 %v440
  %v2244 = vunpack.c.h.b16 %v440
  %v2245 = vunpack.c.l.b16 %v441
  %v2246 = vunpack.c.h.b16 %v441
  %v2247 = vunpack.c.l.b16 %v442
  %v2248 = vunpack.c.h.b16 %v442
  %v2249 = vunpack.c.l.b16 %v443
  %v2250 = vunpack.c.h.b16 %v443
  %v2251 = vunpack.c.l.b16 %v444
  %v2252 = vunpack.c.h.b16 %v444
  %v2253 = vunpack.c.l.b16 %v445
  %v2254 = vunpack.c.h.b16 %v445
  %v2255 = vunpack.c.l.b16 %v446
  %v2256 = vunpack.c.h.b16 %v446
  %v2257 = vunpack.c.l.b16 %v447
  %v2258 = vunpack.c.h.b16 %v447
  %v2259 = vunpack.c.l.b16 %v448
  %v2260 = vunpack.c.h.b16 %v448
  %v2261 = vunpack.c.l.b16 %v449
  %v2262 = vunpack.c.h.b16 %v449
  %v2263 = vunpack.c.l.b16 %v450
  %v2264 = vunpack.c.h.b16 %v450
  %v2265 = vunpack.c.l.b16 %v451
  %v2266 = vunpack.c.h.b16 %v451
  %v2267 = vunpack.c.l.b16 %v452
  %v2268 = vunpack.c.h.b16 %v452
  %v2269 = vunpack.c.l.b16 %v453
  %v2270 = vunpack.c.h.b16 %v453
  %v2271 = vunpack.c.l.b16 %v454
  %v2272 = vunpack.c.h.b16 %v454
  %v2273 = vunpack.c.l.b16 %v455
  %v2274 = vunpack.c.h.b16 %v455
  %v2275 = vunpack.c.l.b16 %v456
  %v2276 = vunpack.c.h.b16 %v456
  %v2277 = vunpack.c.l.b16 %v457
  %v2278 = vunpack.c.h.b16 %v457
  %v2279 = vunpack.c.l.b16 %v458
  %v2280 = vunpack.c.h.b16 %v458
  %v2281 = vunpack.c.l.b16 %v459
  %v2282 = vunpack.c.h.b16 %v459
  %v2283 = vunpack.c.l.b16 %v460
  %v2284 = vunpack.c.h.b16 %v460
  %v2285 = vunpack.c.l.b16 %v461
  %v2286 = vunpack.c.h.b16 %v461
  %v2287 = vunpack.c.l.b16 %v462
  %v2288 = vunpack.c.h.b16 %v462
  %v2289 = vunpack.c.l.b16 %v463
  %v2290 = vunpack.c.h.b16 %v463
  %v2291 = vunpack.c.l.b16 %v464
  %v2292 = vunpack.c.h.b16 %v464
  %v2293 = vunpack.c.l.b16 %v465
  %v2294 = vunpack.c.h.b16 %v465
  %v2295 = vunpack.c.l.b16 %v466
  %v2296 = vunpack.c.h.b16 %v466
  %v2297 = vunpack.c.l.b16 %v467
  %v2298 = vunpack.c.h.b16 %v467
  %v2299 = vunpack.c.l.b16 %v468
  %v2300 = vunpack.c.h.b16 %v468
  %v2301 = vunpack.c.l.b16 %v469
  %v2302 = vunpack.c.h.b16 %v469
  %v2303 = vunpack.c.l.b16 %v470
  %v2304 = vunpack.c.h.b16 %v470
  %v2305 = vunpack.c.l.b16 %v471
  %v2306 = vunpack.c.h.b16 %v471
  %v2307 = vunpack.c.l.b16 %v472
  %v2308 = vunpack.c.h.b16 %v472
  %v2309 = vunpack.c.l.b16 %v473
  %v2310 = vunpack.c.h.b16 %v473
  %v2311 = vunpack.c.l.b16 %v474
  %v2312 = vunpack.c.h.b16 %v474
  %v2313 = vunpack.c.l.b16 %v475
  %v2314 = vunpack.c.h.b16 %v475
  %v2315 = vunpack.c.l.b16 %v476
  %v2316 = vunpack.c.h.b16 %v476
  %v2317 = vunpack.c.l.b16 %v477
  %v2318 = vunpack.c.h.b16 %v477
  %v2319 = vunpack.c.l.b16 %v478
  %v2320 = vunpack.c.h.b16 %v478
  %v2321 = vunpack.c.l.b16 %v479
  %v2322 = vunpack.c.h.b16 %v479
  %v2323 = vunpack.c.l.b16 %v480
  %v2324 = vunpack.c.h.b16 %v480
  %v2325 = vunpack.c.l.b16 %v481
  %v2326 = vunpack.c.h.b16 %v481
  %v2327 = vunpack.c.l.b16 %v482
  %v2328 = vunpack.c.h.b16 %v482
  %v2329 = vunpack.c.l.b16 %v483
  %v2330 = vunpack.c.h.b16 %v483
  %v2331 = vunpack.c.l.b16 %v484
  %v2332 = vunpack.c.h.b16 %v484
  %v2333 = vunpack.c.l.b16 %v485
  %v2334 = vunpack.c.h.b16 %v485
  %v2335 = vunpack.c.l.b16 %v486
  %v2336 = vunpack.c.h.b16 %v486
  %v2337 = vunpack.c.l.b16 %v487
  %v2338 = vunpack.c.h.b16 %v487
  %v2339 = vunpack.c.l.b16 %v488
  %v2340 = vunpack.c.h.b16 %v488
  %v2341 = vunpack.c.l.b16 %v489
  %v2342 = vunpack.c.h.b16 %v489
  %v2343 = vunpack.c.l.b16 %v490
  %v2344 = vunpack.c.h.b16 %v490
  %v2345 = vunpack.c.l.b16 %v491
  %v2346 = vunpack.c.h.b16 %v491
  %v2347 = vunpack.c.l.b16 %v492
  %v2348 = vunpack.c.h.b16 %v492
  %v2349 = vunpack.c.l.b16 %v493
  %v2350 = vunpack.c.h.b16 %v493
  %v2351 = vunpack.c.l.b16 %v494
  %v2352 = vunpack.c.h.b16 %v494
  %v2353 = vunpack.c.l.b16 %v495
  %v2354 = vunpack.c.h.b16 %v495
  %v2355 = vunpack.c.l.b16 %v496
  %v2356 = vunpack.c.h.b16 %v496
  %v2357 = vunpack.c.l.b16 %v497
  %v2358 = vunpack.c.h.b16 %v497
  %v2359 = vunpack.c.l.b16 %v498
  %v2360 = vunpack.c.h.b16 %v498
  %v2361 = vunpack.c.l.b16 %v499
  %v2362 = vunpack.c.h.b16 %v499
  %v2363 = vunpack.c.l.b16 %v500
  %v2364 = vunpack.c.h.b16 %v500
  %v2365 = vunpack.c.l.b16 %v501
  %v2366 = vunpack.c.h.b16 %v501
  %v2367 = vunpack.c.l.b16 %v502
  %v2368 = vunpack.c.h.b16 %v502
  %v2369 = vunpack.c.l.b16 %v503
  %v2370 = vunpack.c.h.b16 %v503
  %v2371 = vunpack.c.l.b16 %v504
  %v2372 = vunpack.c.h.b16 %v504
  %v2373 = vunpack.c.l.b16 %v505
  %v2374 = vunpack.c.h.b16 %v505
  %v2375 = vunpack.c.l.b16 %v506
  %v2376 = vunpack.c.h.b16 %v506
  %v2377 = vunpack.c.l.b16 %v507
  %v2378 = vunpack.c.h.b16 %v507
  %v2379 = vunpack.c.l.b16 %v508
  %v2380 = vunpack.c.h.b16 %v508
  %v2381 = vunpack.c.l.b16 %v509
  %v2382 = vunpack.c.h.b16 %v509
  %v2383 = vunpack.c.l.b16 %v510
  %v2384 = vunpack.c.h.b16 %v510
  %v2385 = vunpack.c.l.b16 %v511
  %v2386 = vunpack.c.h.b16 %v511
  %v2387 = vunpack.c.l.b16 %v512
  %v2388 = vunpack.c.h.b16 %v512
  %v2389 = vunpack.c.l.b16 %v513
  %v2390 = vunpack.c.h.b16 %v513
  %v2391 = vunpack.c.l.b16 %v514
  %v2392 = vunpack.c.h.b16 %v514
  %v2393 = vunpack.c.l.b16 %v515
  %v2394 = vunpack.c.h.b16 %v515
  %v2395 = vunpack.c.l.b16 %v516
  %v2396 = vunpack.c.h.b16 %v516
  %v2397 = vunpack.c.l.b16 %v517
  %v2398 = vunpack.c.h.b16 %v517
  %v2399 = vunpack.c.l.b16 %v518
  %v2400 = vunpack.c.h.b16 %v518
  %v2401 = vunpack.c.l.b16 %v519
  %v2402 = vunpack.c.h.b16 %v519
  %v2403 = vunpack.c.l.b16 %v520
  %v2404 = vunpack.c.h.b16 %v520
  %v2405 = vunpack.c.l.b16 %v521
  %v2406 = vunpack.c.h.b16 %v521
  %v2407 = vunpack.c.l.b16 %v522
  %v2408 = vunpack.c.h.b16 %v522
  %v2409 = vunpack.c.l.b16 %v523
  %v2410 = vunpack.c.h.b16 %v523
  %v2411 = vunpack.c.l.b16 %v524
  %v2412 = vunpack.c.h.b16 %v524
  %v2413 = vunpack.c.l.b16 %v525
  %v2414 = vunpack.c.h.b16 %v525
  %v2415 = vunpack.c.l.b16 %v526
  %v2416 = vunpack.c.h.b16 %v526
  %v2417 = vunpack.c.l.b16 %v527
  %v2418 = vunpack.c.h.b16 %v527
  %v2419 = vunpack.c.l.b16 %v528
  %v2420 = vunpack.c.h.b16 %v528
  %v2421 = vunpack.c.l.b16 %v529
  %v2422 = vunpack.c.h.b16 %v529
  %v2423 = vunpack.c.l.b16 %v530
  %v2424 = vunpack.c.h.b16 %v530
  %v2425 = vunpack.c.l.b16 %v531
  %v2426 = vunpack.c.h.b16 %v531
  %v2427 = vunpack.c.l.b16 %v532
  %v2428 = vunpack.c.h.b16 %v532
  %v2429 = vunpack.c.l.b16 %v533
  %v2430 = vunpack.c.h.b16 %v533
  %v2431 = vunpack.c.l.b16 %v534
  %v2432 = vunpack.c.h.b16 %v534
  %v2433 = vunpack.c.l.b16 %v535
  %v2434 = vunpack.c.h.b16 %v535
  %v2435 = vunpack.c.l.b16 %v536
  %v2436 = vunpack.c.h.b16 %v536
  %v2437 = vunpack.c.l.b16 %v537
  %v2438 = vunpack.c.h.b16 %v537
  %v2439 = vunpack.c.l.b16 %v538
  %v2440 = vunpack.c.h.b16 %v538
  %v2441 = vunpack.c.l.b16 %v539
  %v2442 = vunpack.c.h.b16 %v539
  %v2443 = vunpack.c.l.b16 %v540
  %v2444 = vunpack.c.h.b16 %v540
  %v2445 = vunpack.c.l.b16 %v541
  %v2446 = vunpack.c.h.b16 %v541
  %v2447 = vunpack.c.l.b16 %v542
  %v2448 = vunpack.c.h.b16 %v542
  %v2449 = vunpack.c.l.b16 %v543
  %v2450 = vunpack.c.h.b16 %v543
  %v2451 = vunpack.c.l.b16 %v544
  %v2452 = vunpack.c.h.b16 %v544
  %v2453 = vunpack.c.l.b16 %v545
  %v2454 = vunpack.c.h.b16 %v545
  %v2455 = vunpack.c.l.b16 %v546
  %v2456 = vunpack.c.h.b16 %v546
  %v2457 = vunpack.c.l.b16 %v547
  %v2458 = vunpack.c.h.b16 %v547
  %v2459 = vunpack.c.l.b16 %v548
  %v2460 = vunpack.c.h.b16 %v548
  %v2461 = vunpack.c.l.b16 %v549
  %v2462 = vunpack.c.h.b16 %v549
  %v2463 = vunpack.c.l.b16 %v550
  %v2464 = vunpack.c.h.b16 %v550
  %v2465 = vunpack.c.l.b16 %v551
  %v2466 = vunpack.c.h.b16 %v551
  %v2467 = vunpack.c.l.b16 %v552
  %v2468 = vunpack.c.h.b16 %v552
  %v2469 = vunpack.c.l.b16 %v553
  %v2470 = vunpack.c.h.b16 %v553
  %v2471 = vunpack.c.l.b16 %v554
  %v2472 = vunpack.c.h.b16 %v554
  %v2473 = vunpack.c.l.b16 %v555
  %v2474 = vunpack.c.h.b16 %v555
  %v2475 = vunpack.c.l.b16 %v556
  %v2476 = vunpack.c.h.b16 %v556
  %v2477 = vunpack.c.l.b16 %v557
  %v2478 = vunpack.c.h.b16 %v557
  %v2479 = vunpack.c.l.b16 %v558
  %v2480 = vunpack.c.h.b16 %v558
  %v2481 = vunpack.c.l.b16 %v559
  %v2482 = vunpack.c.h.b16 %v559
  %v2483 = vunpack.c.l.b16 %v560
  %v2484 = vunpack.c.h.b16 %v560
  %v2485 = vunpack.c.l.b16 %v561
  %v2486 = vunpack.c.h.b16 %v561
  %v2487 = vunpack.c.l.b16 %v562
  %v2488 = vunpack.c.h.b16 %v562
  %v2489 = vunpack.c.l.b16 %v563
  %v2490 = vunpack.c.h.b16 %v563
  %v2491 = vunpack.c.l.b16 %v564
  %v2492 = vunpack.c.h.b16 %v564
  %v2493 = vunpack.c.l.b16 %v565
  %v2494 = vunpack.c.h.b16 %v565
  %v2495 = vunpack.c.l.b16 %v566
  %v2496 = vunpack.c.h.b16 %v566
  %v2497 = vunpack.c.l.b16 %v567
  %v2498 = vunpack.c.h.b16 %v567
  %v2499 = vunpack.c.l.b16 %v568
  %v2500 = vunpack.c.h.b16 %v568
  %v2501 = vunpack.c.l.b16 %v569
  %v2502 = vunpack.c.h.b16 %v569
  %v2503 = vunpack.c.l.b16 %v570
  %v2504 = vunpack.c.h.b16 %v570
  %v2505 = vunpack.c.l.b16 %v571
  %v2506 = vunpack.c.h.b16 %v571
  %v2507 = vunpack.c.l.b16 %v572
  %v2508 = vunpack.c.h.b16 %v572
  %v2509 = vunpack.c.l.b16 %v573
  %v2510 = vunpack.c.h.b16 %v573
  %v2511 = vunpack.c.l.b16 %v574
  %v2512 = vunpack.c.h.b16 %v574
  %v2513 = vunpack.c.l.b16 %v575
  %v2514 = vunpack.c.h.b16 %v575
  %v2515 = vunpack.c.l.b16 %v576
  %v2516 = vunpack.c.h.b16 %v576
  %v2517 = vunpack.c.l.b16 %v577
  %v2518 = vunpack.c.h.b16 %v577
  %v2519 = vunpack.c.l.b16 %v578
  %v2520 = vunpack.c.h.b16 %v578
  %v2521 = vunpack.c.l.b16 %v579
  %v2522 = vunpack.c.h.b16 %v579
  %v2523 = vunpack.c.l.b16 %v580
  %v2524 = vunpack.c.h.b16 %v580
  %v2525 = vunpack.c.l.b16 %v581
  %v2526 = vunpack.c.h.b16 %v581
  %v2527 = vunpack.c.l.b16 %v582
  %v2528 = vunpack.c.h.b16 %v582
  %v2529 = vunpack.c.l.b16 %v583
  %v2530 = vunpack.c.h.b16 %v583
  %v2531 = vunpack.c.l.b16 %v584
  %v2532 = vunpack.c.h.b16 %v584
  %v2533 = vunpack.c.l.b16 %v585
  %v2534 = vunpack.c.h.b16 %v585
  %v2535 = vunpack.c.l.b16 %v586
  %v2536 = vunpack.c.h.b16 %v586
  %v2537 = vunpack.c.l.b16 %v587
  %v2538 = vunpack.c.h.b16 %v587
  %v2539 = vunpack.c.l.b16 %v588
  %v2540 = vunpack.c.h.b16 %v588
  %v2541 = vunpack.c.l.b16 %v589
  %v2542 = vunpack.c.h.b16 %v589
  %v2543 = vunpack.c.l.b16 %v590
  %v2544 = vunpack.c.h.b16 %v590
  %v2545 = vunpack.c.l.b16 %v591
  %v2546 = vunpack.c.h.b16 %v591
  %v2547 = vunpack.c.l.b16 %v592
  %v2548 = vunpack.c.h.b16 %v592
  %v2549 = vunpack.c.l.b16 %v593
  %v2550 = vunpack.c.h.b16 %v593
  %v2551 = vunpack.c.l.b16 %v594
  %v2552 = vunpack.c.h.b16 %v594
  %v2553 = vunpack.c.l.b16 %v595
  %v2554 = vunpack.c.h.b16 %v595
  %v2555 = vunpack.c.l.b16 %v596
  %v2556 = vunpack.c.h.b16 %v596
  %v2557 = vunpack.c.l.b16 %v597
  %v2558 = vunpack.c.h.b16 %v597
  %v2559 = vunpack.c.l.b16 %v598
  %v2560 = vunpack.c.h.b16 %v598
  %v2561 = vunpack.c.l.b16 %v599
  %v2562 = vunpack.c.h.b16 %v599
  %v2563 = vunpack.c.l.b16 %v600
  %v2564 = vunpack.c.h.b16 %v600
  %v2565 = vunpack.c.l.b16 %v601
  %v2566 = vunpack.c.h.b16 %v601
  %v2567 = vunpack.c.l.b16 %v602
  %v2568 = vunpack.c.h.b16 %v602
  %v2569 = vunpack.c.l.b16 %v603
  %v2570 = vunpack.c.h.b16 %v603
  %v2571 = vunpack.c.l.b16 %v604
  %v2572 = vunpack.c.h.b16 %v604
  %v2573 = vunpack.c.l.b16 %v605
  %v2574 = vunpack.c.h.b16 %v605
  %v2575 = vunpack.c.l.b16 %v606
  %v2576 = vunpack.c.h.b16 %v606
  %v2577 = vunpack.c.l.b16 %v607
  %v2578 = vunpack.c.h.b16 %v607
  %v2579 = vunpack.c.l.b16 %v608
  %v2580 = vunpack.c.h.b16 %v608
  %v2581 = vunpack.c.l.b16 %v609
  %v2582 = vunpack.c.h.b16 %v609
  %v2583 = vunpack.c.l.b16 %v610
  %v2584 = vunpack.c.h.b16 %v610
  %v2585 = vunpack.c.l.b16 %v611
  %v2586 = vunpack.c.h.b16 %v611
  %v2587 = vunpack.c.l.b16 %v612
  %v2588 = vunpack.c.h.b16 %v612
  %v2589 = vunpack.c.l.b16 %v613
  %v2590 = vunpack.c.h.b16 %v613
  %v2591 = vunpack.c.l.b16 %v614
  %v2592 = vunpack.c.h.b16 %v614
  %v2593 = vunpack.c.l.b16 %v615
  %v2594 = vunpack.c.h.b16 %v615
  %v2595 = vunpack.c.l.b16 %v616
  %v2596 = vunpack.c.h.b16 %v616
  %v2597 = vunpack.c.l.b16 %v617
  %v2598 = vunpack.c.h.b16 %v617
  %v2599 = vunpack.c.l.b16 %v618
  %v2600 = vunpack.c.h.b16 %v618
  %v2601 = vunpack.c.l.b16 %v619
  %v2602 = vunpack.c.h.b16 %v619
  %v2603 = vunpack.c.l.b16 %v620
  %v2604 = vunpack.c.h.b16 %v620
  %v2605 = vunpack.c.l.b16 %v621
  %v2606 = vunpack.c.h.b16 %v621
  %v2607 = vunpack.c.l.b16 %v622
  %v2608 = vunpack.c.h.b16 %v622
  %v2609 = vunpack.c.l.b16 %v623
  %v2610 = vunpack.c.h.b16 %v623
  %v2611 = vunpack.c.l.b16 %v624
  %v2612 = vunpack.c.h.b16 %v624
  %v2613 = vunpack.c.l.b16 %v625
  %v2614 = vunpack.c.h.b16 %v625
  %v2615 = vunpack.c.l.b16 %v626
  %v2616 = vunpack.c.h.b16 %v626
  %v2617 = vunpack.c.l.b16 %v627
  %v2618 = vunpack.c.h.b16 %v627
  %v2619 = vunpack.c.l.b16 %v628
  %v2620 = vunpack.c.h.b16 %v628
  %v2621 = vunpack.c.l.b16 %v629
  %v2622 = vunpack.c.h.b16 %v629
  %v2623 = vunpack.c.l.b16 %v630
  %v2624 = vunpack.c.h.b16 %v630
  %v2625 = vunpack.c.l.b16 %v631
  %v2626 = vunpack.c.h.b16 %v631
  %v2627 = vunpack.c.l.b16 %v632
  %v2628 = vunpack.c.h.b16 %v632
  %v2629 = vunpack.c.l.b16 %v633
  %v2630 = vunpack.c.h.b16 %v633
  %v2631 = vunpack.c.l.b16 %v634
  %v2632 = vunpack.c.h.b16 %v634
  %v2633 = vunpack.c.l.b16 %v635
  %v2634 = vunpack.c.h.b16 %v635
  %v2635 = vunpack.c.l.b16 %v636
  %v2636 = vunpack.c.h.b16 %v636
  %v2637 = vunpack.c.l.b16 %v637
  %v2638 = vunpack.c.h.b16 %v637
  %v2639 = vunpack.c.l.b16 %v638
  %v2640 = vunpack.c.h.b16 %v638
  %v2641 = vunpack.c.l.b16 %v639
  %v2642 = vunpack.c.h.b16 %v639
  %v2643 = vunpack.c.l.b16 %v640
  %v2644 = vunpack.c.h.b16 %v640
  %v2645 = vunpack.c.l.b16 %v641
  %v2646 = vunpack.c.h.b16 %v641
  %v2647 = vunpack.c.l.b16 %v642
  %v2648 = vunpack.c.h.b16 %v642
  %v2649 = vunpack.c.l.b16 %v643
  %v2650 = vunpack.c.h.b16 %v643
  %v2651 = vunpack.c.l.b16 %v644
  %v2652 = vunpack.c.h.b16 %v644
  %v2653 = vunpack.c.l.b16 %v645
  %v2654 = vunpack.c.h.b16 %v645
  %v2655 = vunpack.c.l.b16 %v646
  %v2656 = vunpack.c.h.b16 %v646
  %v2657 = vunpack.c.l.b16 %v647
  %v2658 = vunpack.c.h.b16 %v647
  %v2659 = vunpack.c.l.b16 %v648
  %v2660 = vunpack.c.h.b16 %v648
  %v2661 = vunpack.c.l.b16 %v649
  %v2662 = vunpack.c.h.b16 %v649
  %v2663 = vunpack.c.l.b16 %v650
  %v2664 = vunpack.c.h.b16 %v650
  %v2665 = vunpack.c.l.b16 %v651
  %v2666 = vunpack.c.h.b16 %v651
  %v2667 = vunpack.c.l.b16 %v652
  %v2668 = vunpack.c.h.b16 %v652
  %v2669 = vunpack.c.l.b16 %v653
  %v2670 = vunpack.c.h.b16 %v653
  %v2671 = vunpack.c.l.b16 %v654
  %v2672 = vunpack.c.h.b16 %v654
  %v2673 = vunpack.c.l.b16 %v655
  %v2674 = vunpack.c.h.b16 %v655
  %v2675 = vunpack.c.l.b16 %v656
  %v2676 = vunpack.c.h.b16 %v656
  %v2677 = vunpack.c.l.b16 %v657
  %v2678 = vunpack.c.h.b16 %v657
  %v2679 = vunpack.c.l.b16 %v658
  %v2680 = vunpack.c.h.b16 %v658
  %v2681 = vunpack.c.l.b16 %v659
  %v2682 = vunpack.c.h.b16 %v659
  %v2683 = vunpack.c.l.b16 %v660
  %v2684 = vunpack.c.h.b16 %v660
  %v2685 = vunpack.c.l.b16 %v661
  %v2686 = vunpack.c.h.b16 %v661
  %v2687 = vunpack.c.l.b16 %v662
  %v2688 = vunpack.c.h.b16 %v662
  %v2689 = vunpack.c.l.b16 %v663
  %v2690 = vunpack.c.h.b16 %v663
  %v2691 = vunpack.c.l.b16 %v664
  %v2692 = vunpack.c.h.b16 %v664
  %v2693 = vunpack.c.l.b16 %v665
  %v2694 = vunpack.c.h.b16 %v665
  %v2695 = vunpack.c.l.b16 %v666
  %v2696 = vunpack.c.h.b16 %v666
  %v2697 = vpack.c.b16 %v1433, %v1417
  %v2698 = vpack.c.b16 %v1434, %v1418
  %v2699 = vpack.c.b16 %v1435, %v1419
  %v2700 = vpack.c.b16 %v1436, %v1420
  %v2701 = vpack.c.b16 %v1437, %v1421
  %v2702 = vpack.c.b16 %v1438, %v1422
  %v2703 = vpack.c.b16 %v1439, %v1423
  %v2704 = vpack.c.b16 %v1440, %v1424
  %v2705 = vpack.c.b16 %v1441, %v1425
  %v2706 = vpack.c.b16 %v1442, %v1426
  %v2707 = vpack.c.b16 %v1443, %v1427
  %v2708 = vpack.c.b16 %v1444, %v1428
  %v2709 = vpack.c.b16 %v1445, %v1429
  %v2710 = vpack.c.b16 %v1446, %v1430
  %v2711 = vpack.c.b16 %v1447, %v1431
  %v2712 = vpack.c.b16 %v1448, %v1432
  %v2713 = vpack.c.b16 %v1465, %v1449
  %v2714 = vpack.c.b16 %v1466, %v1450
  %v2715 = vpack.c.b16 %v1467, %v1451
  %v2716 = vpack.c.b16 %v1468, %v1452
  %v2717 = vpack.c.b16 %v1469, %v1453
  %v2718 = vpack.c.b16 %v1470, %v1454
  %v2719 = vpack.c.b16 %v1471, %v1455
  %v2720 = vpack.c.b16 %v1472, %v1456
  %v2721 = vpack.c.b16 %v1473, %v1457
  %v2722 = vpack.c.b16 %v1474, %v1458
  %v2723 = vpack.c.b16 %v1475, %v1459
  %v2724 = vpack.c.b16 %v1476, %v1460
  %v2725 = vpack.c.b16 %v1477, %v1461
  %v2726 = vpack.c.b16 %v1478, %v1462
  %v2727 = vpack.c.b16 %v1479, %v1463
  %v2728 = vpack.c.b16 %v1480, %v1464
  %v2729 = vpack.c.b16 %v1497, %v1481
  %v2730 = vpack.c.b16 %v1498, %v1482
  %v2731 = vpack.c.b16 %v1499, %v1483
  %v2732 = vpack.c.b16 %v1500, %v1484
  %v2733 = vpack.c.b16 %v1501, %v1485
  %v2734 = vpack.c.b16 %v1502, %v1486
  %v2735 = vpack.c.b16 %v1503, %v1487
  %v2736 = vpack.c.b16 %v1504, %v1488
  %v2737 = vpack.c.b16 %v1505, %v1489
  %v2738 = vpack.c.b16 %v1506, %v1490
  %v2739 = vpack.c.b16 %v1507, %v1491
  %v2740 = vpack.c.b16 %v1508, %v1492
  %v2741 = vpack.c.b16 %v1509, %v1493
  %v2742 = vpack.c.b16 %v1510, %v1494
  %v2743 = vpack.c.b16 %v1511, %v1495
  %v2744 = vpack.c.b16 %v1512, %v1496
  %v2745 = vpack.c.b16 %v1529, %v1513
  %v2746 = vpack.c.b16 %v1530, %v1514
  %v2747 = vpack.c.b16 %v1531, %v1515
  %v2748 = vpack.c.b16 %v1532, %v1516
  %v2749 = vpack.c.b16 %v1533, %v1517
  %v2750 = vpack.c.b16 %v1534, %v1518
  %v2751 = vpack.c.b16 %v1535, %v1519
  %v2752 = vpack.c.b16 %v1536, %v1520
  %v2753 = vpack.c.b16 %v1537, %v1521
  %v2754 = vpack.c.b16 %v1538, %v1522
  %v2755 = vpack.c.b16 %v1539, %v1523
  %v2756 = vpack.c.b16 %v1540, %v1524
  %v2757 = vpack.c.b16 %v1541, %v1525
  %v2758 = vpack.c.b16 %v1542, %v1526
  %v2759 = vpack.c.b16 %v1543, %v1527
  %v2760 = vpack.c.b16 %v1544, %v1528
  %v2761 = vpack.c.b16 %v1561, %v1545
  %v2762 = vpack.c.b16 %v1562, %v1546
  %v2763 = vpack.c.b16 %v1563, %v1547
  %v2764 = vpack.c.b16 %v1564, %v1548
  %v2765 = vpack.c.b16 %v1565, %v1549
  %v2766 = vpack.c.b16 %v1566, %v1550
  %v2767 = vpack.c.b16 %v1567, %v1551
  %v2768 = vpack.c.b16 %v1568, %v1552
  %v2769 = vpack.c.b16 %v1569, %v1553
  %v2770 = vpack.c.b16 %v1570, %v1554
  %v2771 = vpack.c.b16 %v1571, %v1555
  %v2772 = vpack.c.b16 %v1572, %v1556
  %v2773 = vpack.c.b16 %v1573, %v1557
  %v2774 = vpack.c.b16 %v1574, %v1558
  %v2775 = vpack.c.b16 %v1575, %v1559
  %v2776 = vpack.c.b16 %v1576, %v1560
  %v2777 = vpack.c.b16 %v1593, %v1577
  %v2778 = vpack.c.b16 %v1594, %v1578
  %v2779 = vpack.c.b16 %v1595, %v1579
  %v2780 = vpack.c.b16 %v1596, %v1580
  %v2781 = vpack.c.b16 %v1597, %v1581
  %v2782 = vpack.c.b16 %v1598, %v1582
  %v2783 = vpack.c.b16 %v1599, %v1583
  %v2784 = vpack.c.b16 %v1600, %v1584
  %v2785 = vpack.c.b16 %v1601, %v1585
  %v2786 = vpack.c.b16 %v1602, %v1586
  %v2787 = vpack.c.b16 %v1603, %v1587
  %v2788 = vpack.c.b16 %v1604, %v1588
  %v2789 = vpack.c.b16 %v1605, %v1589
  %v2790 = vpack.c.b16 %v1606, %v1590
  %v2791 = vpack.c.b16 %v1607, %v1591
  %v2792 = vpack.c.b16 %v1608, %v1592
  %v2793 = vpack.c.b16 %v1625, %v1609
  %v2794 = vpack.c.b16 %v1626, %v1610
  %v2795 = vpack.c.b16 %v1627, %v1611
  %v2796 = vpack.c.b16 %v1628, %v1612
  %v2797 = vpack.c.b16 %v1629, %v1613
  %v2798 = vpack.c.b16 %v1630, %v1614
  %v2799 = vpack.c.b16 %v1631, %v1615
  %v2800 = vpack.c.b16 %v1632, %v1616
  %v2801 = vpack.c.b16 %v1633, %v1617
  %v2802 = vpack.c.b16 %v1634, %v1618
  %v2803 = vpack.c.b16 %v1635, %v1619
  %v2804 = vpack.c.b16 %v1636, %v1620
  %v2805 = vpack.c.b16 %v1637, %v1621
  %v2806 = vpack.c.b16 %v1638, %v1622
  %v2807 = vpack.c.b16 %v1639, %v1623
  %v2808 = vpack.c.b16 %v1640, %v1624
  %v2809 = vpack.c.b16 %v1657, %v1641
  %v2810 = vpack.c.b16 %v1658, %v1642
  %v2811 = vpack.c.b16 %v1659, %v1643
  %v2812 = vpack.c.b16 %v1660, %v1644
  %v2813 = vpack.c.b16 %v1661, %v1645
  %v2814 = vpack.c.b16 %v1662, %v1646
  %v2815 = vpack.c.b16 %v1663, %v1647
  %v2816 = vpack.c.b16 %v1664, %v1648
  %v2817 = vpack.c.b16 %v1665, %v1649
  %v2818 = vpack.c.b16 %v1666, %v1650
  %v2819 = vpack.c.b16 %v1667, %v1651
  %v2820 = vpack.c.b16 %v1668, %v1652
  %v2821 = vpack.c.b16 %v1669, %v1653
  %v2822 = vpack.c.b16 %v1670, %v1654
  %v2823 = vpack.c.b16 %v1671, %v1655
  %v2824 = vpack.c.b16 %v1672, %v1656
  %v2825 = vpack.c.b16 %v1689, %v1673
  %v2826 = vpack.c.b16 %v1690, %v1674
  %v2827 = vpack.c.b16 %v1691, %v1675
  %v2828 = vpack.c.b16 %v1692, %v1676
  %v2829 = vpack.c.b16 %v1693, %v1677
  %v2830 = vpack.c.b16 %v1694, %v1678
  %v2831 = vpack.c.b16 %v1695, %v1679
  %v2832 = vpack.c.b16 %v1696, %v1680
  %v2833 = vpack.c.b16 %v1697, %v1681
  %v2834 = vpack.c.b16 %v1698, %v1682
  %v2835 = vpack.c.b16 %v1699, %v1683
  %v2836 = vpack.c.b16 %v1700, %v1684
  %v2837 = vpack.c.b16 %v1701, %v1685
  %v2838 = vpack.c.b16 %v1702, %v1686
  %v2839 = vpack.c.b16 %v1703, %v1687
  %v2840 = vpack.c.b16 %v1704, %v1688
  %v2841 = vpack.c.b16 %v1721, %v1705
  %v2842 = vpack.c.b16 %v1722, %v1706
  %v2843 = vpack.c.b16 %v1723, %v1707
  %v2844 = vpack.c.b16 %v1724, %v1708
  %v2845 = vpack.c.b16 %v1725, %v1709
  %v2846 = vpack.c.b16 %v1726, %v1710
  %v2847 = vpack.c.b16 %v1727, %v1711
  %v2848 = vpack.c.b16 %v1728, %v1712
  %v2849 = vpack.c.b16 %v1729, %v1713
  %v2850 = vpack.c.b16 %v1730, %v1714
  %v2851 = vpack.c.b16 %v1731, %v1715
  %v2852 = vpack.c.b16 %v1732, %v1716
  %v2853 = vpack.c.b16 %v1733, %v1717
  %v2854 = vpack.c.b16 %v1734, %v1718
  %v2855 = vpack.c.b16 %v1735, %v1719
  %v2856 = vpack.c.b16 %v1736, %v1720
  %v2857 = vpack.c.b16 %v1753, %v1737
  %v2858 = vpack.c.b16 %v1754, %v1738
  %v2859 = vpack.c.b16 %v1755, %v1739
  %v2860 = vpack.c.b16 %v1756, %v1740
  %v2861 = vpack.c.b16 %v1757, %v1741
  %v2862 = vpack.c.b16 %v1758, %v1742
  %v2863 = vpack.c.b16 %v1759, %v1743
  %v2864 = vpack.c.b16 %v1760, %v1744
  %v2865 = vpack.c.b16 %v1761, %v1745
  %v2866 = vpack.c.b16 %v1762, %v1746
  %v2867 = vpack.c.b16 %v1763, %v1747
  %v2868 = vpack.c.b16 %v1764, %v1748
  %v2869 = vpack.c.b16 %v1765, %v1749
  %v2870 = vpack.c.b16 %v1766, %v1750
  %v2871 = vpack.c.b16 %v1767, %v1751
  %v2872 = vpack.c.b16 %v1768, %v1752
  %v2873 = vpack.c.b16 %v1785, %v1769
  %v2874 = vpack.c.b16 %v1786, %v1770
  %v2875 = vpack.c.b16 %v1787, %v1771
  %v2876 = vpack.c.b16 %v1788, %v1772
  %v2877 = vpack.c.b16 %v1789, %v1773
  %v2878 = vpack.c.b16 %v1790, %v1774
  %v2879 = vpack.c.b16 %v1791, %v1775
  %v2880 = vpack.c.b16 %v1792, %v1776
  %v2881 = vpack.c.b16 %v1793, %v1777
  %v2882 = vpack.c.b16 %v1794, %v1778
  %v2883 = vpack.c.b16 %v1795, %v1779
  %v2884 = vpack.c.b16 %v1796, %v1780
  %v2885 = vpack.c.b16 %v1797, %v1781
  %v2886 = vpack.c.b16 %v1798, %v1782
  %v2887 = vpack.c.b16 %v1799, %v1783
  %v2888 = vpack.c.b16 %v1800, %v1784
  %v2889 = vpack.c.b16 %v1817, %v1801
  %v2890 = vpack.c.b16 %v1818, %v1802
  %v2891 = vpack.c.b16 %v1819, %v1803
  %v2892 = vpack.c.b16 %v1820, %v1804
  %v2893 = vpack.c.b16 %v1821, %v1805
  %v2894 = vpack.c.b16 %v1822, %v1806
  %v2895 = vpack.c.b16 %v1823, %v1807
  %v2896 = vpack.c.b16 %v1824, %v1808
  %v2897 = vpack.c.b16 %v1825, %v1809
  %v2898 = vpack.c.b16 %v1826, %v1810
  %v2899 = vpack.c.b16 %v1827, %v1811
  %v2900 = vpack.c.b16 %v1828, %v1812
  %v2901 = vpack.c.b16 %v1829, %v1813
  %v2902 = vpack.c.b16 %v1830, %v1814
  %v2903 = vpack.c.b16 %v1831, %v1815
  %v2904 = vpack.c.b16 %v1832, %v1816
  %v2905 = vpack.c.b16 %v1849, %v1833
  %v2906 = vpack.c.b16 %v1850, %v1834
  %v2907 = vpack.c.b16 %v1851, %v1835
  %v2908 = vpack.c.b16 %v1852, %v1836
  %v2909 = vpack.c.b16 %v1853, %v1837
  %v2910 = vpack.c.b16 %v1854, %v1838
  %v2911 = vpack.c.b16 %v1855, %v1839
  %v2912 = vpack.c.b16 %v1856, %v1840
  %v2913 = vpack.c.b16 %v1857, %v1841
  %v2914 = vpack.c.b16 %v1858, %v1842
  %v2915 = vpack.c.b16 %v1859, %v1843
  %v2916 = vpack.c.b16 %v1860, %v1844
  %v2917 = vpack.c.b16 %v1861, %v1845
  %v2918 = vpack.c.b16 %v1862, %v1846
  %v2919 = vpack.c.b16 %v1863, %v1847
  %v2920 = vpack.c.b16 %v1864, %v1848
  %v2921 = vpack.c.b16 %v1881, %v1865
  %v2922 = vpack.c.b16 %v1882, %v1866
  %v2923 = vpack.c.b16 %v1883, %v1867
  %v2924 = vpack.c.b16 %v1884, %v1868
  %v2925 = vpack.c.b16 %v1885, %v1869
  %v2926 = vpack.c.b16 %v1886, %v1870
  %v2927 = vpack.c.b16 %v1887, %v1871
  %v2928 = vpack.c.b16 %v1888, %v1872
  %v2929 = vpack.c.b16 %v1889, %v1873
  %v2930 = vpack.c.b16 %v1890, %v1874
  %v2931 = vpack.c.b16 %v1891, %v1875
  %v2932 = vpack.c.b16 %v1892, %v1876
  %v2933 = vpack.c.b16 %v1893, %v1877
  %v2934 = vpack.c.b16 %v1894, %v1878
  %v2935 = vpack.c.b16 %v1895, %v1879
  %v2936 = vpack.c.b16 %v1896, %v1880
  %v2937 = vpack.c.b16 %v1913, %v1897
  %v2938 = vpack.c.b16 %v1914, %v1898
  %v2939 = vpack.c.b16 %v1915, %v1899
  %v2940 = vpack.c.b16 %v1916, %v1900
  %v2941 = vpack.c.b16 %v1917, %v1901
  %v2942 = vpack.c.b16 %v1918, %v1902
  %v2943 = vpack.c.b16 %v1919, %v1903
  %v2944 = vpack.c.b16 %v1920, %v1904
  %v2945 = vpack.c.b16 %v1921, %v1905
  %v2946 = vpack.c.b16 %v1922, %v1906
  %v2947 = vpack.c.b16 %v1923, %v1907
  %v2948 = vpack.c.b16 %v1924, %v1908
  %v2949 = vpack.c.b16 %v1925, %v1909
  %v2950 = vpack.c.b16 %v1926, %v1910
  %v2951 = vpack.c.b16 %v1927, %v1911
  %v2952 = vpack.c.b16 %v1928, %v1912
  %v2953 = vpack.c.b16 %v1945, %v1929
  %v2954 = vpack.c.b16 %v1946, %v1930
  %v2955 = vpack.c.b16 %v1947, %v1931
  %v2956 = vpack.c.b16 %v1948, %v1932
  %v2957 = vpack.c.b16 %v1949, %v1933
  %v2958 = vpack.c.b16 %v1950, %v1934
  %v2959 = vpack.c.b16 %v1951, %v1935
  %v2960 = vpack.c.b16 %v1952, %v1936
  %v2961 = vpack.c.b16 %v1953, %v1937
  %v2962 = vpack.c.b16 %v1954, %v1938
  %v2963 = vpack.c.b16 %v1955, %v1939
  %v2964 = vpack.c.b16 %v1956, %v1940
  %v2965 = vpack.c.b16 %v1957, %v1941
  %v2966 = vpack.c.b16 %v1958, %v1942
  %v2967 = vpack.c.b16 %v1959, %v1943
  %v2968 = vpack.c.b16 %v1960, %v1944
  %v2969 = vpack.c.b16 %v1977, %v1961
  %v2970 = vpack.c.b16 %v1978, %v1962
  %v2971 = vpack.c.b16 %v1979, %v1963
  %v2972 = vpack.c.b16 %v1980, %v1964
  %v2973 = vpack.c.b16 %v1981, %v1965
  %v2974 = vpack.c.b16 %v1982, %v1966
  %v2975 = vpack.c.b16 %v1983, %v1967
  %v2976 = vpack.c.b16 %v1984, %v1968
  %v2977 = vpack.c.b16 %v1985, %v1969
  %v2978 = vpack.c.b16 %v1986, %v1970
  %v2979 = vpack.c.b16 %v1987, %v1971
  %v2980 = vpack.c.b16 %v1988, %v1972
  %v2981 = vpack.c.b16 %v1989, %v1973
  %v2982 = vpack.c.b16 %v1990, %v1974
  %v2983 = vpack.c.b16 %v1991, %v1975
  %v2984 = vpack.c.b16 %v1992, %v1976
  %v2985 = vpack.c.b16 %v2009, %v1993
  %v2986 = vpack.c.b16 %v2010, %v1994
  %v2987 = vpack.c.b16 %v2011, %v1995
  %v2988 = vpack.c.b16 %v2012, %v1996
  %v2989 = vpack.c.b16 %v2013, %v1997
  %v2990 = vpack.c.b16 %v2014, %v1998
  %v2991 = vpack.c.b16 %v2015, %v1999
  %v2992 = vpack.c.b16 %v2016, %v2000
  %v2993 = vpack.c.b16 %v2017, %v2001
  %v2994 = vpack.c.b16 %v2018, %v2002
  %v2995 = vpack.c.b16 %v2019, %v2003
  %v2996 = vpack.c.b16 %v2020, %v2004
  %v2997 = vpack.c.b16 %v2021, %v2005
  %v2998 = vpack.c.b16 %v2022, %v2006
  %v2999 = vpack.c.b16 %v2023, %v2007
  %v3000 = vpack.c.b16 %v2024, %v2008
  %v3001 = vpack.c.b16 %v2041, %v2025
  %v3002 = vpack.c.b16 %v2042, %v2026
  %v3003 = vpack.c.b16 %v2043, %v2027
  %v3004 = vpack.c.b16 %v2044, %v2028
  %v3005 = vpack.c.b16 %v2045, %v2029
  %v3006 = vpack.c.b16 %v2046, %v2030
  %v3007 = vpack.c.b16 %v2047, %v2031
  %v3008 = vpack.c.b16 %v2048, %v2032
  %v3009 = vpack.c.b16 %v2049, %v2033
  %v3010 = vpack.c.b16 %v2050, %v2034
  %v3011 = vpack.c.b16 %v2051, %v2035
  %v3012 = vpack.c.b16 %v2052, %v2036
  %v3013 = vpack.c.b16 %v2053, %v2037
  %v3014 = vpack.c.b16 %v2054, %v2038
  %v3015 = vpack.c.b16 %v2055, %v2039
  %v3016 = vpack.c.b16 %v2056, %v2040
  %v3017 = vpack.c.b16 %v2073, %v2057
  %v3018 = vpack.c.b16 %v2074, %v2058
  %v3019 = vpack.c.b16 %v2075, %v2059
  %v3020 = vpack.c.b16 %v2076, %v2060
  %v3021 = vpack.c.b16 %v2077, %v2061
  %v3022 = vpack.c.b16 %v2078, %v2062
  %v3023 = vpack.c.b16 %v2079, %v2063
  %v3024 = vpack.c.b16 %v2080, %v2064
  %v3025 = vpack.c.b16 %v2081, %v2065
  %v3026 = vpack.c.b16 %v2082, %v2066
  %v3027 = vpack.c.b16 %v2083, %v2067
  %v3028 = vpack.c.b16 %v2084, %v2068
  %v3029 = vpack.c.b16 %v2085, %v2069
  %v3030 = vpack.c.b16 %v2086, %v2070
  %v3031 = vpack.c.b16 %v2087, %v2071
  %v3032 = vpack.c.b16 %v2088, %v2072
  %v3033 = vpack.c.b16 %v2105, %v2089
  %v3034 = vpack.c.b16 %v2106, %v2090
  %v3035 = vpack.c.b16 %v2107, %v2091
  %v3036 = vpack.c.b16 %v2108, %v2092
  %v3037 = vpack.c.b16 %v2109, %v2093
  %v3038 = vpack.c.b16 %v2110, %v2094
  %v3039 = vpack.c.b16 %v2111, %v2095
  %v3040 = vpack.c.b16 %v2112, %v2096
  %v3041 = vpack.c.b16 %v2113, %v2097
  %v3042 = vpack.c.b16 %v2114, %v2098
  %v3043 = vpack.c.b16 %v2115, %v2099
  %v3044 = vpack.c.b16 %v2116, %v2100
  %v3045 = vpack.c.b16 %v2117, %v2101
  %v3046 = vpack.c.b16 %v2118, %v2102
  %v3047 = vpack.c.b16 %v2119, %v2103
  %v3048 = vpack.c.b16 %v2120, %v2104
  %v3049 = vpack.c.b16 %v2137, %v2121
  %v3050 = vpack.c.b16 %v2138, %v2122
  %v3051 = vpack.c.b16 %v2139, %v2123
  %v3052 = vpack.c.b16 %v2140, %v2124
  %v3053 = vpack.c.b16 %v2141, %v2125
  %v3054 = vpack.c.b16 %v2142, %v2126
  %v3055 = vpack.c.b16 %v2143, %v2127
  %v3056 = vpack.c.b16 %v2144, %v2128
  %v3057 = vpack.c.b16 %v2145, %v2129
  %v3058 = vpack.c.b16 %v2146, %v2130
  %v3059 = vpack.c.b16 %v2147, %v2131
  %v3060 = vpack.c.b16 %v2148, %v2132
  %v3061 = vpack.c.b16 %v2149, %v2133
  %v3062 = vpack.c.b16 %v2150, %v2134
  %v3063 = vpack.c.b16 %v2151, %v2135
  %v3064 = vpack.c.b16 %v2152, %v2136
  %v3065 = vpack.c.b16 %v2169, %v2153
  %v3066 = vpack.c.b16 %v2170, %v2154
  %v3067 = vpack.c.b16 %v2171, %v2155
  %v3068 = vpack.c.b16 %v2172, %v2156
  %v3069 = vpack.c.b16 %v2173, %v2157
  %v3070 = vpack.c.b16 %v2174, %v2158
  %v3071 = vpack.c.b16 %v2175, %v2159
  %v3072 = vpack.c.b16 %v2176, %v2160
  %v3073 = vpack.c.b16 %v2177, %v2161
  %v3074 = vpack.c.b16 %v2178, %v2162
  %v3075 = vpack.c.b16 %v2179, %v2163
  %v3076 = vpack.c.b16 %v2180, %v2164
  %v3077 = vpack.c.b16 %v2181, %v2165
  %v3078 = vpack.c.b16 %v2182, %v2166
  %v3079 = vpack.c.b16 %v2183, %v2167
  %v3080 = vpack.c.b16 %v2184, %v2168
  %v3081 = vpack.c.b16 %v2201, %v2185
  %v3082 = vpack.c.b16 %v2202, %v2186
  %v3083 = vpack.c.b16 %v2203, %v2187
  %v3084 = vpack.c.b16 %v2204, %v2188
  %v3085 = vpack.c.b16 %v2205, %v2189
  %v3086 = vpack.c.b16 %v2206, %v2190
  %v3087 = vpack.c.b16 %v2207, %v2191
  %v3088 = vpack.c.b16 %v2208, %v2192
  %v3089 = vpack.c.b16 %v2209, %v2193
  %v3090 = vpack.c.b16 %v2210, %v2194
  %v3091 = vpack.c.b16 %v2211, %v2195
  %v3092 = vpack.c.b16 %v2212, %v2196
  %v3093 = vpack.c.b16 %v2213, %v2197
  %v3094 = vpack.c.b16 %v2214, %v2198
  %v3095 = vpack.c.b16 %v2215, %v2199
  %v3096 = vpack.c.b16 %v2216, %v2200
  %v3097 = vpack.c.b16 %v2233, %v2217
  %v3098 = vpack.c.b16 %v2234, %v2218
  %v3099 = vpack.c.b16 %v2235, %v2219
  %v3100 = vpack.c.b16 %v2236, %v2220
  %v3101 = vpack.c.b16 %v2237, %v2221
  %v3102 = vpack.c.b16 %v2238, %v2222
  %v3103 = vpack.c.b16 %v2239, %v2223
  %v3104 = vpack.c.b16 %v2240, %v2224
  %v3105 = vpack.c.b16 %v2241, %v2225
  %v3106 = vpack.c.b16 %v2242, %v2226
  %v3107 = vpack.c.b16 %v2243, %v2227
  %v3108 = vpack.c.b16 %v2244, %v2228
  %v3109 = vpack.c.b16 %v2245, %v2229
  %v3110 = vpack.c.b16 %v2246, %v2230
  %v3111 = vpack.c.b16 %v2247, %v2231
  %v3112 = vpack.c.b16 %v2248, %v2232
  %v3113 = vpack.c.b16 %v2265, %v2249
  %v3114 = vpack.c.b16 %v2266, %v2250
  %v3115 = vpack.c.b16 %v2267, %v2251
  %v3116 = vpack.c.b16 %v2268, %v2252
  %v3117 = vpack.c.b16 %v2269, %v2253
  %v3118 = vpack.c.b16 %v2270, %v2254
  %v3119 = vpack.c.b16 %v2271, %v2255
  %v3120 = vpack.c.b16 %v2272, %v2256
  %v3121 = vpack.c.b16 %v2273, %v2257
  %v3122 = vpack.c.b16 %v2274, %v2258
  %v3123 = vpack.c.b16 %v2275, %v2259
  %v3124 = vpack.c.b16 %v2276, %v2260
  %v3125 = vpack.c.b16 %v2277, %v2261
  %v3126 = vpack.c.b16 %v2278, %v2262
  %v3127 = vpack.c.b16 %v2279, %v2263
  %v3128 = vpack.c.b16 %v2280, %v2264
  %v3129 = vpack.c.b16 %v2297, %v2281
  %v3130 = vpack.c.b16 %v2298, %v2282
  %v3131 = vpack.c.b16 %v2299, %v2283
  %v3132 = vpack.c.b16 %v2300, %v2284
  %v3133 = vpack.c.b16 %v2301, %v2285
  %v3134 = vpack.c.b16 %v2302, %v2286
  %v3135 = vpack.c.b16 %v2303, %v2287
  %v3136 = vpack.c.b16 %v2304, %v2288
  %v3137 = vpack.c.b16 %v2305, %v2289
  %v3138 = vpack.c.b16 %v2306, %v2290
  %v3139 = vpack.c.b16 %v2307, %v2291
  %v3140 = vpack.c.b16 %v2308, %v2292
  %v3141 = vpack.c.b16 %v2309, %v2293
  %v3142 = vpack.c.b16 %v2310, %v2294
  %v3143 = vpack.c.b16 %v2311, %v2295
  %v3144 = vpack.c.b16 %v2312, %v2296
  %v3145 = vpack.c.b16 %v2329, %v2313
  %v3146 = vpack.c.b16 %v2330, %v2314
  %v3147 = vpack.c.b16 %v2331, %v2315
  %v3148 = vpack.c.b16 %v2332, %v2316
  %v3149 = vpack.c.b16 %v2333, %v2317
  %v3150 = vpack.c.b16 %v2334, %v2318
  %v3151 = vpack.c.b16 %v2335, %v2319
  %v3152 = vpack.c.b16 %v2336, %v2320
  %v3153 = vpack.c.b16 %v2337, %v2321
  %v3154 = vpack.c.b16 %v2338, %v2322
  %v3155 = vpack.c.b16 %v2339, %v2323
  %v3156 = vpack.c.b16 %v2340, %v2324
  %v3157 = vpack.c.b16 %v2341, %v2325
  %v3158 = vpack.c.b16 %v2342, %v2326
  %v3159 = vpack.c.b16 %v2343, %v2327
  %v3160 = vpack.c.b16 %v2344, %v2328
  %v3161 = vpack.c.b16 %v2361, %v2345
  %v3162 = vpack.c.b16 %v2362, %v2346
  %v3163 = vpack.c.b16 %v2363, %v2347
  %v3164 = vpack.c.b16 %v2364, %v2348
  %v3165 = vpack.c.b16 %v2365, %v2349
  %v3166 = vpack.c.b16 %v2366, %v2350
  %v3167 = vpack.c.b16 %v2367, %v2351
  %v3168 = vpack.c.b16 %v2368, %v2352
  %v3169 = vpack.c.b16 %v2369, %v2353
  %v3170 = vpack.c.b16 %v2370, %v2354
  %v3171 = vpack.c.b16 %v2371, %v2355
  %v3172 = vpack.c.b16 %v2372, %v2356
  %v3173 = vpack.c.b16 %v2373, %v2357
  %v3174 = vpack.c.b16 %v2374, %v2358
  %v3175 = vpack.c.b16 %v2375, %v2359
  %v3176 = vpack.c.b16 %v2376, %v2360
  %v3177 = vpack.c.b16 %v2393, %v2377
  %v3178 = vpack.c.b16 %v2394, %v2378
  %v3179 = vpack.c.b16 %v2395, %v2379
  %v3180 = vpack.c.b16 %v2396, %v2380
  %v3181 = vpack.c.b16 %v2397, %v2381
  %v3182 = vpack.c.b16 %v2398, %v2382
  %v3183 = vpack.c.b16 %v2399, %v2383
  %v3184 = vpack.c.b16 %v2400, %v2384
  %v3185 = vpack.c.b16 %v2401, %v2385
  %v3186 = vpack.c.b16 %v2402, %v2386
  %v3187 = vpack.c.b16 %v2403, %v2387
  %v3188 = vpack.c.b16 %v2404, %v2388
  %v3189 = vpack.c.b16 %v2405, %v2389
  %v3190 = vpack.c.b16 %v2406, %v2390
  %v3191 = vpack.c.b16 %v2407, %v2391
  %v3192 = vpack.c.b16 %v2408, %v2392
  %v3193 = vpack.c.b16 %v2425, %v2409
  %v3194 = vpack.c.b16 %v2426, %v2410
  %v3195 = vpack.c.b16 %v2427, %v2411
  %v3196 = vpack.c.b16 %v2428, %v2412
  %v3197 = vpack.c.b16 %v2429, %v2413
  %v3198 = vpack.c.b16 %v2430, %v2414
  %v3199 = vpack.c.b16 %v2431, %v2415
  %v3200 = vpack.c.b16 %v2432, %v2416
  %v3201 = vpack.c.b16 %v2433, %v2417
  %v3202 = vpack.c.b16 %v2434, %v2418
  %v3203 = vpack.c.b16 %v2435, %v2419
  %v3204 = vpack.c.b16 %v2436, %v2420
  %v3205 = vpack.c.b16 %v2437, %v2421
  %v3206 = vpack.c.b16 %v2438, %v2422
  %v3207 = vpack.c.b16 %v2439, %v2423
  %v3208 = vpack.c.b16 %v2440, %v2424
  %v3209 = vpack.c.b16 %v2457, %v2441
  %v3210 = vpack.c.b16 %v2458, %v2442
  %v3211 = vpack.c.b16 %v2459, %v2443
  %v3212 = vpack.c.b16 %v2460, %v2444
  %v3213 = vpack.c.b16 %v2461, %v2445
  %v3214 = vpack.c.b16 %v2462, %v2446
  %v3215 = vpack.c.b16 %v2463, %v2447
  %v3216 = vpack.c.b16 %v2464, %v2448
  %v3217 = vpack.c.b16 %v2465, %v2449
  %v3218 = vpack.c.b16 %v2466, %v2450
  %v3219 = vpack.c.b16 %v2467, %v2451
  %v3220 = vpack.c.b16 %v2468, %v2452
  %v3221 = vpack.c.b16 %v2469, %v2453
  %v3222 = vpack.c.b16 %v2470, %v2454
  %v3223 = vpack.c.b16 %v2471, %v2455
  %v3224 = vpack.c.b16 %v2472, %v2456
  %v3225 = vpack.c.b16 %v2489, %v2473
  %v3226 = vpack.c.b16 %v2490, %v2474
  %v3227 = vpack.c.b16 %v2491, %v2475
  %v3228 = vpack.c.b16 %v2492, %v2476
  %v3229 = vpack.c.b16 %v2493, %v2477
  %v3230 = vpack.c.b16 %v2494, %v2478
  %v3231 = vpack.c.b16 %v2495, %v2479
  %v3232 = vpack.c.b16 %v2496, %v2480
  %v3233 = vpack.c.b16 %v2497, %v2481
  %v3234 = vpack.c.b16 %v2498, %v2482
  %v3235 = vpack.c.b16 %v2499, %v2483
  %v3236 = vpack.c.b16 %v2500, %v2484
  %v3237 = vpack.c.b16 %v2501, %v2485
  %v3238 = vpack.c.b16 %v2502, %v2486
  %v3239 = vpack.c.b16 %v2503, %v2487
  %v3240 = vpack.c.b16 %v2504, %v2488
  %v3241 = vpack.c.b16 %v2521, %v2505
  %v3242 = vpack.c.b16 %v2522, %v2506
  %v3243 = vpack.c.b16 %v2523, %v2507
  %v3244 = vpack.c.b16 %v2524, %v2508
  %v3245 = vpack.c.b16 %v2525, %v2509
  %v3246 = vpack.c.b16 %v2526, %v2510
  %v3247 = vpack.c.b16 %v2527, %v2511
  %v3248 = vpack.c.b16 %v2528, %v2512
  %v3249 = vpack.c.b16 %v2529, %v2513
  %v3250 = vpack.c.b16 %v2530, %v2514
  %v3251 = vpack.c.b16 %v2531, %v2515
  %v3252 = vpack.c.b16 %v2532, %v2516
  %v3253 = vpack.c.b16 %v2533, %v2517
  %v3254 = vpack.c.b16 %v2534, %v2518
  %v3255 = vpack.c.b16 %v2535, %v2519
  %v3256 = vpack.c.b16 %v2536, %v2520
  %v3257 = vpack.c.b16 %v2553, %v2537
  %v3258 = vpack.c.b16 %v2554, %v2538
  %v3259 = vpack.c.b16 %v2555, %v2539
  %v3260 = vpack.c.b16 %v2556, %v2540
  %v3261 = vpack.c.b16 %v2557, %v2541
  %v3262 = vpack.c.b16 %v2558, %v2542
  %v3263 = vpack.c.b16 %v2559, %v2543
  %v3264 = vpack.c.b16 %v2560, %v2544
  %v3265 = vpack.c.b16 %v2561, %v2545
  %v3266 = vpack.c.b16 %v2562, %v2546
  %v3267 = vpack.c.b16 %v2563, %v2547
  %v3268 = vpack.c.b16 %v2564, %v2548
  %v3269 = vpack.c.b16 %v2565, %v2549
  %v3270 = vpack.c.b16 %v2566, %v2550
  %v3271 = vpack.c.b16 %v2567, %v2551
  %v3272 = vpack.c.b16 %v2568, %v2552
  %v3273 = vpack.c.b16 %v2585, %v2569
  %v3274 = vpack.c.b16 %v2586, %v2570
  %v3275 = vpack.c.b16 %v2587, %v2571
  %v3276 = vpack.c.b16 %v2588, %v2572
  %v3277 = vpack.c.b16 %v2589, %v2573
  %v3278 = vpack.c.b16 %v2590, %v2574
  %v3279 = vpack.c.b16 %v2591, %v2575
  %v3280 = vpack.c.b16 %v2592, %v2576
  %v3281 = vpack.c.b16 %v2593, %v2577
  %v3282 = vpack.c.b16 %v2594, %v2578
  %v3283 = vpack.c.b16 %v2595, %v2579
  %v3284 = vpack.c.b16 %v2596, %v2580
  %v3285 = vpack.c.b16 %v2597, %v2581
  %v3286 = vpack.c.b16 %v2598, %v2582
  %v3287 = vpack.c.b16 %v2599, %v2583
  %v3288 = vpack.c.b16 %v2600, %v2584
  %v3289 = vpack.c.b16 %v2617, %v2601
  %v3290 = vpack.c.b16 %v2618, %v2602
  %v3291 = vpack.c.b16 %v2619, %v2603
  %v3292 = vpack.c.b16 %v2620, %v2604
  %v3293 = vpack.c.b16 %v2621, %v2605
  %v3294 = vpack.c.b16 %v2622, %v2606
  %v3295 = vpack.c.b16 %v2623, %v2607
  %v3296 = vpack.c.b16 %v2624, %v2608
  %v3297 = vpack.c.b16 %v2625, %v2609
  %v3298 = vpack.c.b16 %v2626, %v2610
  %v3299 = vpack.c.b16 %v2627, %v2611
  %v3300 = vpack.c.b16 %v2628, %v2612
  %v3301 = vpack.c.b16 %v2629, %v2613
  %v3302 = vpack.c.b16 %v2630, %v2614
  %v3303 = vpack.c.b16 %v2631, %v2615
  %v3304 = vpack.c.b16 %v2632, %v2616
  %v3305 = vpack.c.b16 %v2649, %v2633
  %v3306 = vpack.c.b16 %v2650, %v2634
  %v3307 = vpack.c.b16 %v2651, %v2635
  %v3308 = vpack.c.b16 %v2652, %v2636
  %v3309 = vpack.c.b16 %v2653, %v2637
  %v3310 = vpack.c.b16 %v2654, %v2638
  %v3311 = vpack.c.b16 %v2655, %v2639
  %v3312 = vpack.c.b16 %v2656, %v2640
  %v3313 = vpack.c.b16 %v2657, %v2641
  %v3314 = vpack.c.b16 %v2658, %v2642
  %v3315 = vpack.c.b16 %v2659, %v2643
  %v3316 = vpack.c.b16 %v2660, %v2644
  %v3317 = vpack.c.b16 %v2661, %v2645
  %v3318 = vpack.c.b16 %v2662, %v2646
  %v3319 = vpack.c.b16 %v2663, %v2647
  %v3320 = vpack.c.b16 %v2664, %v2648
  %v3321 = vpack.c.b16 %v2681, %v2665
  %v3322 = vpack.c.b16 %v2682, %v2666
  %v3323 = vpack.c.b16 %v2683, %v2667
  %v3324 = vpack.c.b16 %v2684, %v2668
  %v3325 = vpack.c.b16 %v2685, %v2669
  %v3326 = vpack.c.b16 %v2686, %v2670
  %v3327 = vpack.c.b16 %v2687, %v2671
  %v3328 = vpack.c.b16 %v2688, %v2672
  %v3329 = vpack.c.b16 %v2689, %v2673
  %v3330 = vpack.c.b16 %v2690, %v2674
  %v3331 = vpack.c.b16 %v2691, %v2675
  %v3332 = vpack.c.b16 %v2692, %v2676
  %v3333 = vpack.c.b16 %v2693, %v2677
  %v3334 = vpack.c.b16 %v2694, %v2678
  %v3335 = vpack.c.b16 %v2695, %v2679
  %v3336 = vpack.c.b16 %v2696, %v2680
  %3977 = vmatprep.subr.bf16.mxu0 %v2698
  %3978 = vmatpush1.bf16.msra.mxu0 %v2697
  %3979 = vmatprep.subr.bf16.mxu0 %v2714
  %3980 = vmatpush1.bf16.msra.mxu0 %v2713
  %3981 = vmatprep.subr.bf16.mxu0 %v2730
  %3982 = vmatpush1.bf16.msra.mxu0 %v2729
  %3983 = vmatprep.subr.bf16.mxu0 %v2746
  %3984 = vmatpush1.bf16.msra.mxu0 %v2745
  %3985 = vmatprep.subr.bf16.mxu0 %v2762
  %3986 = vmatpush1.bf16.msra.mxu0 %v2761
  %3987 = vmatprep.subr.bf16.mxu0 %v2778
  %3988 = vmatpush1.bf16.msra.mxu0 %v2777
  %3989 = vmatprep.subr.bf16.mxu0 %v2794
  %3990 = vmatpush1.bf16.msra.mxu0 %v2793
  %3991 = vmatprep.subr.bf16.mxu0 %v2810
  %3992 = vmatpush1.bf16.msra.mxu0 %v2809
  %3993 = vmatprep.subr.bf16.mxu0 %v2826
  %3994 = vmatpush1.bf16.msra.mxu0 %v2825
  %3995 = vmatprep.subr.bf16.mxu0 %v2842
  %3996 = vmatpush1.bf16.msra.mxu0 %v2841
  %3997 = vmatprep.subr.bf16.mxu0 %v2858
  %3998 = vmatpush1.bf16.msra.mxu0 %v2857
  %3999 = vmatprep.subr.bf16.mxu0 %v2874
  %4000 = vmatpush1.bf16.msra.mxu0 %v2873
  %4001 = vmatprep.subr.bf16.mxu0 %v2890
  %4002 = vmatpush1.bf16.msra.mxu0 %v2889
  %4003 = vmatprep.subr.bf16.mxu0 %v2906
  %4004 = vmatpush1.bf16.msra.mxu0 %v2905
  %4005 = vmatprep.subr.bf16.mxu0 %v2922
  %4006 = vmatpush1.bf16.msra.mxu0 %v2921
  %4007 = vmatprep.subr.bf16.mxu0 %v2938
  %4008 = vmatpush1.bf16.msra.mxu0 %v2937
  %4009 = vmatprep.mubr.bf16.mxu0 %v768
  %4010 = vmatmul.mubr.bf16.gmra.mrb[0].mxu0 %v767
  %v4011 = vpop.f32.mrb[0].mxu0
  %v4012 = vadd.f32 %v674, %v4011
  %v4013 = vpop.f32.mrb[0].mxu0
  %v4014 = vadd.f32 %v678, %v4013
  %v4015 = vpop.f32.mrb[0].mxu0
  %v4016 = vadd.f32 %v674, %v4015
  %v4017 = vpop.f32.mrb[0].mxu0
  %v4018 = vadd.f32 %v678, %v4017
  %4019 = vdwg.mxu0
  %4020 = vmatprep.subr.bf16.mxu0 %v2954
  %4021 = vmatpush1.bf16.msra.mxu0 %v2953
  %4022 = vmatprep.subr.bf16.mxu0 %v2970
  %4023 = vmatpush1.bf16.msra.mxu0 %v2969
  %4024 = vmatprep.subr.bf16.mxu0 %v2986
  %4025 = vmatpush1.bf16.msra.mxu0 %v2985
  %4026 = vmatprep.subr.bf16.mxu0 %v3002
  %4027 = vmatpush1.bf16.msra.mxu0 %v3001
  %4028 = vmatprep.subr.bf16.mxu0 %v3018
  %4029 = vmatpush1.bf16.msra.mxu0 %v3017
  %4030 = vmatprep.subr.bf16.mxu0 %v3034
  %4031 = vmatpush1.bf16.msra.mxu0 %v3033
  %4032 = vmatprep.subr.bf16.mxu0 %v3050
  %4033 = vmatpush1.bf16.msra.mxu0 %v3049
  %4034 = vmatprep.subr.bf16.mxu0 %v3066
  %4035 = vmatpush1.bf16.msra.mxu0 %v3065
  %4036 = vmatprep.subr.bf16.mxu0 %v3082
  %4037 = vmatpush1.bf16.msra.mxu0 %v3081
  %4038 = vmatprep.subr.bf16.mxu0 %v3098
  %4039 = vmatpush1.bf16.msra.mxu0 %v3097
  %4040 = vmatprep.subr.bf16.mxu0 %v3114
  %4041 = vmatpush1.bf16.msra.mxu0 %v3113
  %4042 = vmatprep.subr.bf16.mxu0 %v3130
  %4043 = vmatpush1.bf16.msra.mxu0 %v3129
  %4044 = vmatprep.subr.bf16.mxu0 %v3146
  %4045 = vmatpush1.bf16.msra.mxu0 %v3145
  %4046 = vmatprep.subr.bf16.mxu0 %v3162
  %4047 = vmatpush1.bf16.msra.mxu0 %v3161
  %4048 = vmatprep.subr.bf16.mxu0 %v3178
  %4049 = vmatpush1.bf16.msra.mxu0 %v3177
  %4050 = vmatprep.subr.bf16.mxu0 %v3194
  %4051 = vmatpush1.bf16.msra.mxu0 %v3193
  %4052 = vmatprep.mubr.bf16.mxu0 %v770
  %4053 = vmatmul.mubr.bf16.gmra.mrb[0].mxu0 %v769
  %v4054 = vpop.f32.mrb[0].mxu0
  %v4055 = vadd.f32 %v4012, %v4054
  %v4056 = vpop.f32.mrb[0].mxu0
  %v4057 = vadd.f32 %v4014, %v4056
  %v4058 = vpop.f32.mrb[0].mxu0
  %v4059 = vadd.f32 %v4016, %v4058
  %v4060 = vpop.f32.mrb[0].mxu0
  %v4061 = vadd.f32 %v4018, %v4060
  %4062 = vdwg.mxu0
  %4063 = vmatprep.subr.bf16.mxu0 %v3210
  %4064 = vmatpush1.bf16.msra.mxu0 %v3209
  %4065 = vmatprep.subr.bf16.mxu0 %v3226
  %4066 = vmatpush1.bf16.msra.mxu0 %v3225
  %4067 = vmatprep.subr.bf16.mxu0 %v3242
  %4068 = vmatpush1.bf16.msra.mxu0 %v3241
  %4069 = vmatprep.subr.bf16.mxu0 %v3258
  %4070 = vmatpush1.bf16.msra.mxu0 %v3257
  %4071 = vmatprep.subr.bf16.mxu0 %v3274
  %4072 = vmatpush1.bf16.msra.mxu0 %v3273
  %4073 = vmatprep.subr.bf16.mxu0 %v3290
  %4074 = vmatpush1.bf16.msra.mxu0 %v3289
  %4075 = vmatprep.subr.bf16.mxu0 %v3306
  %4076 = vmatpush1.bf16.msra.mxu0 %v3305
  %4077 = vmatprep.subr.bf16.mxu0 %v3322
  %4078 = vmatpush1.bf16.msra.mxu0 %v3321
  %4079 = vmatprep.subr.bf16.mxu0 0
  %4080 = vmatpush1.bf16.msra.mxu0 0
  %4081 = vmatprep.subr.bf16.mxu0 0
  %4082 = vmatpush1.bf16.msra.mxu0 0
  %4083 = vmatprep.subr.bf16.mxu0 0
  %4084 = vmatpush1.bf16.msra.mxu0 0
  %4085 = vmatprep.subr.bf16.mxu0 0
  %4086 = vmatpush1.bf16.msra.mxu0 0
  %4087 = vmatprep.subr.bf16.mxu0 0
  %4088 = vmatpush1.bf16.msra.mxu0 0
  %4089 = vmatprep.subr.bf16.mxu0 0
  %4090 = vmatpush1.bf16.msra.mxu0 0
  %4091 = vmatprep.subr.bf16.mxu0 0
  %4092 = vmatpush1.bf16.msra.mxu0 0
  %4093 = vmatprep.subr.bf16.mxu0 0
  %4094 = vmatpush1.bf16.msra.mxu0 0
  %4095 = vmatprep.mubr.bf16.mxu0 0
  %4096 = vmatmul.mubr.bf16.gmra.mrb[0].mxu0 %v771
  %v4097 = vpop.f32.mrb[0].mxu0
  %v4098 = vadd.f32 %v4055, %v4097
  %v4099 = vpop.f32.mrb[0].mxu0
  %v4100 = vadd.f32 %v4057, %v4099
  %v4101 = vpop.f32.mrb[0].mxu0
  %v4102 = vadd.f32 %v4059, %v4101
  %v4103 = vpop.f32.mrb[0].mxu0
  %v4104 = vadd.f32 %v4061, %v4103
  %4105 = vdwg.mxu0
  %4106 = vmatprep.subr.bf16.mxu0 %v2700
  %4107 = vmatpush1.bf16.msra.mxu0 %v2699
  %4108 = vmatprep.subr.bf16.mxu0 %v2716
  %4109 = vmatpush1.bf16.msra.mxu0 %v2715
  %4110 = vmatprep.subr.bf16.mxu0 %v2732
  %4111 = vmatpush1.bf16.msra.mxu0 %v2731
  %4112 = vmatprep.subr.bf16.mxu0 %v2748
  %4113 = vmatpush1.bf16.msra.mxu0 %v2747
  %4114 = vmatprep.subr.bf16.mxu0 %v2764
  %4115 = vmatpush1.bf16.msra.mxu0 %v2763
  %4116 = vmatprep.subr.bf16.mxu0 %v2780
  %4117 = vmatpush1.bf16.msra.mxu0 %v2779
  %4118 = vmatprep.subr.bf16.mxu0 %v2796
  %4119 = vmatpush1.bf16.msra.mxu0 %v2795
  %4120 = vmatprep.subr.bf16.mxu0 %v2812
  %4121 = vmatpush1.bf16.msra.mxu0 %v2811
  %4122 = vmatprep.subr.bf16.mxu0 %v2828
  %4123 = vmatpush1.bf16.msra.mxu0 %v2827
  %4124 = vmatprep.subr.bf16.mxu0 %v2844
  %4125 = vmatpush1.bf16.msra.mxu0 %v2843
  %4126 = vmatprep.subr.bf16.mxu0 %v2860
  %4127 = vmatpush1.bf16.msra.mxu0 %v2859
  %4128 = vmatprep.subr.bf16.mxu0 %v2876
  %4129 = vmatpush1.bf16.msra.mxu0 %v2875
  %4130 = vmatprep.subr.bf16.mxu0 %v2892
  %4131 = vmatpush1.bf16.msra.mxu0 %v2891
  %4132 = vmatprep.subr.bf16.mxu0 %v2908
  %4133 = vmatpush1.bf16.msra.mxu0 %v2907
  %4134 = vmatprep.subr.bf16.mxu0 %v2924
  %4135 = vmatpush1.bf16.msra.mxu0 %v2923
  %4136 = vmatprep.subr.bf16.mxu0 %v2940
  %4137 = vmatpush1.bf16.msra.mxu0 %v2939
  %4138 = vmatprep.mubr.bf16.mxu0 %v768
  %4139 = vmatmul.mubr.bf16.gmra.mrb[0].mxu0 %v767
  %v4140 = vpop.f32.mrb[0].mxu0
  %v4141 = vadd.f32 %v682, %v4140
  %v4142 = vpop.f32.mrb[0].mxu0
  %v4143 = vadd.f32 %v686, %v4142
  %v4144 = vpop.f32.mrb[0].mxu0
  %v4145 = vadd.f32 %v682, %v4144
  %v4146 = vpop.f32.mrb[0].mxu0
  %v4147 = vadd.f32 %v686, %v4146
  %4148 = vdwg.mxu0
  %4149 = vmatprep.subr.bf16.mxu0 %v2956
  %4150 = vmatpush1.bf16.msra.mxu0 %v2955
  %4151 = vmatprep.subr.bf16.mxu0 %v2972
  %4152 = vmatpush1.bf16.msra.mxu0 %v2971
  %4153 = vmatprep.subr.bf16.mxu0 %v2988
  %4154 = vmatpush1.bf16.msra.mxu0 %v2987
  %4155 = vmatprep.subr.bf16.mxu0 %v3004
  %4156 = vmatpush1.bf16.msra.mxu0 %v3003
  %4157 = vmatprep.subr.bf16.mxu0 %v3020
  %4158 = vmatpush1.bf16.msra.mxu0 %v3019
  %4159 = vmatprep.subr.bf16.mxu0 %v3036
  %4160 = vmatpush1.bf16.msra.mxu0 %v3035
  %4161 = vmatprep.subr.bf16.mxu0 %v3052
  %4162 = vmatpush1.bf16.msra.mxu0 %v3051
  %4163 = vmatprep.subr.bf16.mxu0 %v3068
  %4164 = vmatpush1.bf16.msra.mxu0 %v3067
  %4165 = vmatprep.subr.bf16.mxu0 %v3084
  %4166 = vmatpush1.bf16.msra.mxu0 %v3083
  %4167 = vmatprep.subr.bf16.mxu0 %v3100
  %4168 = vmatpush1.bf16.msra.mxu0 %v3099
  %4169 = vmatprep.subr.bf16.mxu0 %v3116
  %4170 = vmatpush1.bf16.msra.mxu0 %v3115
  %4171 = vmatprep.subr.bf16.mxu0 %v3132
  %4172 = vmatpush1.bf16.msra.mxu0 %v3131
  %4173 = vmatprep.subr.bf16.mxu0 %v3148
  %4174 = vmatpush1.bf16.msra.mxu0 %v3147
  %4175 = vmatprep.subr.bf16.mxu0 %v3164
  %4176 = vmatpush1.bf16.msra.mxu0 %v3163
  %4177 = vmatprep.subr.bf16.mxu0 %v3180
  %4178 = vmatpush1.bf16.msra.mxu0 %v3179
  %4179 = vmatprep.subr.bf16.mxu0 %v3196
  %4180 = vmatpush1.bf16.msra.mxu0 %v3195
  %4181 = vmatprep.mubr.bf16.mxu0 %v770
  %4182 = vmatmul.mubr.bf16.gmra.mrb[0].mxu0 %v769
  %v4183 = vpop.f32.mrb[0].mxu0
  %v4184 = vadd.f32 %v4141, %v4183
  %v4185 = vpop.f32.mrb[0].mxu0
  %v4186 = vadd.f32 %v4143, %v4185
  %v4187 = vpop.f32.mrb[0].mxu0
  %v4188 = vadd.f32 %v4145, %v4187
  %v4189 = vpop.f32.mrb[0].mxu0
  %v4190 = vadd.f32 %v4147, %v4189
  %4191 = vdwg.mxu0
  %4192 = vmatprep.subr.bf16.mxu0 %v3212
  %4193 = vmatpush1.bf16.msra.mxu0 %v3211
  %4194 = vmatprep.subr.bf16.mxu0 %v3228
  %4195 = vmatpush1.bf16.msra.mxu0 %v3227
  %4196 = vmatprep.subr.bf16.mxu0 %v3244
  %4197 = vmatpush1.bf16.msra.mxu0 %v3243
  %4198 = vmatprep.subr.bf16.mxu0 %v3260
  %4199 = vmatpush1.bf16.msra.mxu0 %v3259
  %4200 = vmatprep.subr.bf16.mxu0 %v3276
  %4201 = vmatpush1.bf16.msra.mxu0 %v3275
  %4202 = vmatprep.subr.bf16.mxu0 %v3292
  %4203 = vmatpush1.bf16.msra.mxu0 %v3291
  %4204 = vmatprep.subr.bf16.mxu0 %v3308
  %4205 = vmatpush1.bf16.msra.mxu0 %v3307
  %4206 = vmatprep.subr.bf16.mxu0 %v3324
  %4207 = vmatpush1.bf16.msra.mxu0 %v3323
  %4208 = vmatprep.subr.bf16.mxu0 0
  %4209 = vmatpush1.bf16.msra.mxu0 0
  %4210 = vmatprep.subr.bf16.mxu0 0
  %4211 = vmatpush1.bf16.msra.mxu0 0
  %4212 = vmatprep.subr.bf16.mxu0 0
  %4213 = vmatpush1.bf16.msra.mxu0 0
  %4214 = vmatprep.subr.bf16.mxu0 0
  %4215 = vmatpush1.bf16.msra.mxu0 0
  %4216 = vmatprep.subr.bf16.mxu0 0
  %4217 = vmatpush1.bf16.msra.mxu0 0
  %4218 = vmatprep.subr.bf16.mxu0 0
  %4219 = vmatpush1.bf16.msra.mxu0 0
  %4220 = vmatprep.subr.bf16.mxu0 0
  %4221 = vmatpush1.bf16.msra.mxu0 0
  %4222 = vmatprep.subr.bf16.mxu0 0
  %4223 = vmatpush1.bf16.msra.mxu0 0
  %4224 = vmatprep.mubr.bf16.mxu0 0
  %4225 = vmatmul.mubr.bf16.gmra.mrb[0].mxu0 %v771
  %v4226 = vpop.f32.mrb[0].mxu0
  %v4227 = vadd.f32 %v4184, %v4226
  %v4228 = vpop.f32.mrb[0].mxu0
  %v4229 = vadd.f32 %v4186, %v4228
  %v4230 = vpop.f32.mrb[0].mxu0
  %v4231 = vadd.f32 %v4188, %v4230
  %v4232 = vpop.f32.mrb[0].mxu0
  %v4233 = vadd.f32 %v4190, %v4232
  %4234 = vdwg.mxu0
  %4235 = vmatprep.subr.bf16.mxu0 %v2702
  %4236 = vmatpush1.bf16.msra.mxu0 %v2701
  %4237 = vmatprep.subr.bf16.mxu0 %v2718
  %4238 = vmatpush1.bf16.msra.mxu0 %v2717
  %4239 = vmatprep.subr.bf16.mxu0 %v2734
  %4240 = vmatpush1.bf16.msra.mxu0 %v2733
  %4241 = vmatprep.subr.bf16.mxu0 %v2750
  %4242 = vmatpush1.bf16.msra.mxu0 %v2749
  %4243 = vmatprep.subr.bf16.mxu0 %v2766
  %4244 = vmatpush1.bf16.msra.mxu0 %v2765
  %4245 = vmatprep.subr.bf16.mxu0 %v2782
  %4246 = vmatpush1.bf16.msra.mxu0 %v2781
  %4247 = vmatprep.subr.bf16.mxu0 %v2798
  %4248 = vmatpush1.bf16.msra.mxu0 %v2797
  %4249 = vmatprep.subr.bf16.mxu0 %v2814
  %4250 = vmatpush1.bf16.msra.mxu0 %v2813
  %4251 = vmatprep.subr.bf16.mxu0 %v2830
  %4252 = vmatpush1.bf16.msra.mxu0 %v2829
  %4253 = vmatprep.subr.bf16.mxu0 %v2846
  %4254 = vmatpush1.bf16.msra.mxu0 %v2845
  %4255 = vmatprep.subr.bf16.mxu0 %v2862
  %4256 = vmatpush1.bf16.msra.mxu0 %v2861
  %4257 = vmatprep.subr.bf16.mxu0 %v2878
  %4258 = vmatpush1.bf16.msra.mxu0 %v2877
  %4259 = vmatprep.subr.bf16.mxu0 %v2894
  %4260 = vmatpush1.bf16.msra.mxu0 %v2893
  %4261 = vmatprep.subr.bf16.mxu0 %v2910
  %4262 = vmatpush1.bf16.msra.mxu0 %v2909
  %4263 = vmatprep.subr.bf16.mxu0 %v2926
  %4264 = vmatpush1.bf16.msra.mxu0 %v2925
  %4265 = vmatprep.subr.bf16.mxu0 %v2942
  %4266 = vmatpush1.bf16.msra.mxu0 %v2941
  %4267 = vmatprep.mubr.bf16.mxu0 %v768
  %4268 = vmatmul.mubr.bf16.gmra.mrb[0].mxu0 %v767
  %v4269 = vpop.f32.mrb[0].mxu0
  %v4270 = vadd.f32 %v690, %v4269
  %v4271 = vpop.f32.mrb[0].mxu0
  %v4272 = vadd.f32 %v694, %v4271
  %v4273 = vpop.f32.mrb[0].mxu0
  %v4274 = vadd.f32 %v690, %v4273
  %v4275 = vpop.f32.mrb[0].mxu0
  %v4276 = vadd.f32 %v694, %v4275
  %4277 = vdwg.mxu0
  %4278 = vmatprep.subr.bf16.mxu0 %v2958
  %4279 = vmatpush1.bf16.msra.mxu0 %v2957
  %4280 = vmatprep.subr.bf16.mxu0 %v2974
  %4281 = vmatpush1.bf16.msra.mxu0 %v2973
  %4282 = vmatprep.subr.bf16.mxu0 %v2990
  %4283 = vmatpush1.bf16.msra.mxu0 %v2989
  %4284 = vmatprep.subr.bf16.mxu0 %v3006
  %4285 = vmatpush1.bf16.msra.mxu0 %v3005
  %4286 = vmatprep.subr.bf16.mxu0 %v3022
  %4287 = vmatpush1.bf16.msra.mxu0 %v3021
  %4288 = vmatprep.subr.bf16.mxu0 %v3038
  %4289 = vmatpush1.bf16.msra.mxu0 %v3037
  %4290 = vmatprep.subr.bf16.mxu0 %v3054
  %4291 = vmatpush1.bf16.msra.mxu0 %v3053
  %4292 = vmatprep.subr.bf16.mxu0 %v3070
  %4293 = vmatpush1.bf16.msra.mxu0 %v3069
  %4294 = vmatprep.subr.bf16.mxu0 %v3086
  %4295 = vmatpush1.bf16.msra.mxu0 %v3085
  %4296 = vmatprep.subr.bf16.mxu0 %v3102
  %4297 = vmatpush1.bf16.msra.mxu0 %v3101
  %4298 = vmatprep.subr.bf16.mxu0 %v3118
  %4299 = vmatpush1.bf16.msra.mxu0 %v3117
  %4300 = vmatprep.subr.bf16.mxu0 %v3134
  %4301 = vmatpush1.bf16.msra.mxu0 %v3133
  %4302 = vmatprep.subr.bf16.mxu0 %v3150
  %4303 = vmatpush1.bf16.msra.mxu0 %v3149
  %4304 = vmatprep.subr.bf16.mxu0 %v3166
  %4305 = vmatpush1.bf16.msra.mxu0 %v3165
  %4306 = vmatprep.subr.bf16.mxu0 %v3182
  %4307 = vmatpush1.bf16.msra.mxu0 %v3181
  %4308 = vmatprep.subr.bf16.mxu0 %v3198
  %4309 = vmatpush1.bf16.msra.mxu0 %v3197
  %4310 = vmatprep.mubr.bf16.mxu0 %v770
  %4311 = vmatmul.mubr.bf16.gmra.mrb[0].mxu0 %v769
  %v4312 = vpop.f32.mrb[0].mxu0
  %v4313 = vadd.f32 %v4270, %v4312
  %v4314 = vpop.f32.mrb[0].mxu0
  %v4315 = vadd.f32 %v4272, %v4314
  %v4316 = vpop.f32.mrb[0].mxu0
  %v4317 = vadd.f32 %v4274, %v4316
  %v4318 = vpop.f32.mrb[0].mxu0
  %v4319 = vadd.f32 %v4276, %v4318
  %4320 = vdwg.mxu0
  %4321 = vmatprep.subr.bf16.mxu0 %v3214
  %4322 = vmatpush1.bf16.msra.mxu0 %v3213
  %4323 = vmatprep.subr.bf16.mxu0 %v3230
  %4324 = vmatpush1.bf16.msra.mxu0 %v3229
  %4325 = vmatprep.subr.bf16.mxu0 %v3246
  %4326 = vmatpush1.bf16.msra.mxu0 %v3245
  %4327 = vmatprep.subr.bf16.mxu0 %v3262
  %4328 = vmatpush1.bf16.msra.mxu0 %v3261
  %4329 = vmatprep.subr.bf16.mxu0 %v3278
  %4330 = vmatpush1.bf16.msra.mxu0 %v3277
  %4331 = vmatprep.subr.bf16.mxu0 %v3294
  %4332 = vmatpush1.bf16.msra.mxu0 %v3293
  %4333 = vmatprep.subr.bf16.mxu0 %v3310
  %4334 = vmatpush1.bf16.msra.mxu0 %v3309
  %4335 = vmatprep.subr.bf16.mxu0 %v3326
  %4336 = vmatpush1.bf16.msra.mxu0 %v3325
  %4337 = vmatprep.subr.bf16.mxu0 0
  %4338 = vmatpush1.bf16.msra.mxu0 0
  %4339 = vmatprep.subr.bf16.mxu0 0
  %4340 = vmatpush1.bf16.msra.mxu0 0
  %4341 = vmatprep.subr.bf16.mxu0 0
  %4342 = vmatpush1.bf16.msra.mxu0 0
  %4343 = vmatprep.subr.bf16.mxu0 0
  %4344 = vmatpush1.bf16.msra.mxu0 0
  %4345 = vmatprep.subr.bf16.mxu0 0
  %4346 = vmatpush1.bf16.msra.mxu0 0
  %4347 = vmatprep.subr.bf16.mxu0 0
  %4348 = vmatpush1.bf16.msra.mxu0 0
  %4349 = vmatprep.subr.bf16.mxu0 0
  %4350 = vmatpush1.bf16.msra.mxu0 0
  %4351 = vmatprep.subr.bf16.mxu0 0
  %4352 = vmatpush1.bf16.msra.mxu0 0
  %4353 = vmatprep.mubr.bf16.mxu0 0
  %4354 = vmatmul.mubr.bf16.gmra.mrb[0].mxu0 %v771
  %v4355 = vpop.f32.mrb[0].mxu0
  %v4356 = vadd.f32 %v4313, %v4355
  %v4357 = vpop.f32.mrb[0].mxu0
  %v4358 = vadd.f32 %v4315, %v4357
  %v4359 = vpop.f32.mrb[0].mxu0
  %v4360 = vadd.f32 %v4317, %v4359
  %v4361 = vpop.f32.mrb[0].mxu0
  %v4362 = vadd.f32 %v4319, %v4361
  %4363 = vdwg.mxu0
  %4364 = vmatprep.subr.bf16.mxu0 %v2704
  %4365 = vmatpush1.bf16.msra.mxu0 %v2703
  %4366 = vmatprep.subr.bf16.mxu0 %v2720
  %4367 = vmatpush1.bf16.msra.mxu0 %v2719
  %4368 = vmatprep.subr.bf16.mxu0 %v2736
  %4369 = vmatpush1.bf16.msra.mxu0 %v2735
  %4370 = vmatprep.subr.bf16.mxu0 %v2752
  %4371 = vmatpush1.bf16.msra.mxu0 %v2751
  %4372 = vmatprep.subr.bf16.mxu0 %v2768
  %4373 = vmatpush1.bf16.msra.mxu0 %v2767
  %4374 = vmatprep.subr.bf16.mxu0 %v2784
  %4375 = vmatpush1.bf16.msra.mxu0 %v2783
  %4376 = vmatprep.subr.bf16.mxu0 %v2800
  %4377 = vmatpush1.bf16.msra.mxu0 %v2799
  %4378 = vmatprep.subr.bf16.mxu0 %v2816
  %4379 = vmatpush1.bf16.msra.mxu0 %v2815
  %4380 = vmatprep.subr.bf16.mxu0 %v2832
  %4381 = vmatpush1.bf16.msra.mxu0 %v2831
  %4382 = vmatprep.subr.bf16.mxu0 %v2848
  %4383 = vmatpush1.bf16.msra.mxu0 %v2847
  %4384 = vmatprep.subr.bf16.mxu0 %v2864
  %4385 = vmatpush1.bf16.msra.mxu0 %v2863
  %4386 = vmatprep.subr.bf16.mxu0 %v2880
  %4387 = vmatpush1.bf16.msra.mxu0 %v2879
  %4388 = vmatprep.subr.bf16.mxu0 %v2896
  %4389 = vmatpush1.bf16.msra.mxu0 %v2895
  %4390 = vmatprep.subr.bf16.mxu0 %v2912
  %4391 = vmatpush1.bf16.msra.mxu0 %v2911
  %4392 = vmatprep.subr.bf16.mxu0 %v2928
  %4393 = vmatpush1.bf16.msra.mxu0 %v2927
  %4394 = vmatprep.subr.bf16.mxu0 %v2944
  %4395 = vmatpush1.bf16.msra.mxu0 %v2943
  %4396 = vmatprep.mubr.bf16.mxu0 %v768
  %4397 = vmatmul.mubr.bf16.gmra.mrb[0].mxu0 %v767
  %v4398 = vpop.f32.mrb[0].mxu0
  %v4399 = vadd.f32 %v698, %v4398
  %v4400 = vpop.f32.mrb[0].mxu0
  %v4401 = vadd.f32 %v702, %v4400
  %v4402 = vpop.f32.mrb[0].mxu0
  %v4403 = vadd.f32 %v698, %v4402
  %v4404 = vpop.f32.mrb[0].mxu0
  %v4405 = vadd.f32 %v702, %v4404
  %4406 = vdwg.mxu0
  %4407 = vmatprep.subr.bf16.mxu0 %v2960
  %4408 = vmatpush1.bf16.msra.mxu0 %v2959
  %4409 = vmatprep.subr.bf16.mxu0 %v2976
  %4410 = vmatpush1.bf16.msra.mxu0 %v2975
  %4411 = vmatprep.subr.bf16.mxu0 %v2992
  %4412 = vmatpush1.bf16.msra.mxu0 %v2991
  %4413 = vmatprep.subr.bf16.mxu0 %v3008
  %4414 = vmatpush1.bf16.msra.mxu0 %v3007
  %4415 = vmatprep.subr.bf16.mxu0 %v3024
  %4416 = vmatpush1.bf16.msra.mxu0 %v3023
  %4417 = vmatprep.subr.bf16.mxu0 %v3040
  %4418 = vmatpush1.bf16.msra.mxu0 %v3039
  %4419 = vmatprep.subr.bf16.mxu0 %v3056
  %4420 = vmatpush1.bf16.msra.mxu0 %v3055
  %4421 = vmatprep.subr.bf16.mxu0 %v3072
  %4422 = vmatpush1.bf16.msra.mxu0 %v3071
  %4423 = vmatprep.subr.bf16.mxu0 %v3088
  %4424 = vmatpush1.bf16.msra.mxu0 %v3087
  %4425 = vmatprep.subr.bf16.mxu0 %v3104
  %4426 = vmatpush1.bf16.msra.mxu0 %v3103
  %4427 = vmatprep.subr.bf16.mxu0 %v3120
  %4428 = vmatpush1.bf16.msra.mxu0 %v3119
  %4429 = vmatprep.subr.bf16.mxu0 %v3136
  %4430 = vmatpush1.bf16.msra.mxu0 %v3135
  %4431 = vmatprep.subr.bf16.mxu0 %v3152
  %4432 = vmatpush1.bf16.msra.mxu0 %v3151
  %4433 = vmatprep.subr.bf16.mxu0 %v3168
  %4434 = vmatpush1.bf16.msra.mxu0 %v3167
  %4435 = vmatprep.subr.bf16.mxu0 %v3184
  %4436 = vmatpush1.bf16.msra.mxu0 %v3183
  %4437 = vmatprep.subr.bf16.mxu0 %v3200
  %4438 = vmatpush1.bf16.msra.mxu0 %v3199
  %4439 = vmatprep.mubr.bf16.mxu0 %v770
  %4440 = vmatmul.mubr.bf16.gmra.mrb[0].mxu0 %v769
  %v4441 = vpop.f32.mrb[0].mxu0
  %v4442 = vadd.f32 %v4399, %v4441
  %v4443 = vpop.f32.mrb[0].mxu0
  %v4444 = vadd.f32 %v4401, %v4443
  %v4445 = vpop.f32.mrb[0].mxu0
  %v4446 = vadd.f32 %v4403, %v4445
  %v4447 = vpop.f32.mrb[0].mxu0
  %v4448 = vadd.f32 %v4405, %v4447
  %4449 = vdwg.mxu0
  %4450 = vmatprep.subr.bf16.mxu0 %v3216
  %4451 = vmatpush1.bf16.msra.mxu0 %v3215
  %4452 = vmatprep.subr.bf16.mxu0 %v3232
  %4453 = vmatpush1.bf16.msra.mxu0 %v3231
  %4454 = vmatprep.subr.bf16.mxu0 %v3248
  %4455 = vmatpush1.bf16.msra.mxu0 %v3247
  %4456 = vmatprep.subr.bf16.mxu0 %v3264
  %4457 = vmatpush1.bf16.msra.mxu0 %v3263
  %4458 = vmatprep.subr.bf16.mxu0 %v3280
  %4459 = vmatpush1.bf16.msra.mxu0 %v3279
  %4460 = vmatprep.subr.bf16.mxu0 %v3296
  %4461 = vmatpush1.bf16.msra.mxu0 %v3295
  %4462 = vmatprep.subr.bf16.mxu0 %v3312
  %4463 = vmatpush1.bf16.msra.mxu0 %v3311
  %4464 = vmatprep.subr.bf16.mxu0 %v3328
  %4465 = vmatpush1.bf16.msra.mxu0 %v3327
  %4466 = vmatprep.subr.bf16.mxu0 0
  %4467 = vmatpush1.bf16.msra.mxu0 0
  %4468 = vmatprep.subr.bf16.mxu0 0
  %4469 = vmatpush1.bf16.msra.mxu0 0
  %4470 = vmatprep.subr.bf16.mxu0 0
  %4471 = vmatpush1.bf16.msra.mxu0 0
  %4472 = vmatprep.subr.bf16.mxu0 0
  %4473 = vmatpush1.bf16.msra.mxu0 0
  %4474 = vmatprep.subr.bf16.mxu0 0
  %4475 = vmatpush1.bf16.msra.mxu0 0
  %4476 = vmatprep.subr.bf16.mxu0 0
  %4477 = vmatpush1.bf16.msra.mxu0 0
  %4478 = vmatprep.subr.bf16.mxu0 0
  %4479 = vmatpush1.bf16.msra.mxu0 0
  %4480 = vmatprep.subr.bf16.mxu0 0
  %4481 = vmatpush1.bf16.msra.mxu0 0
  %4482 = vmatprep.mubr.bf16.mxu0 0
  %4483 = vmatmul.mubr.bf16.gmra.mrb[0].mxu0 %v771
  %v4484 = vpop.f32.mrb[0].mxu0
  %v4485 = vadd.f32 %v4442, %v4484
  %v4486 = vpop.f32.mrb[0].mxu0
  %v4487 = vadd.f32 %v4444, %v4486
  %v4488 = vpop.f32.mrb[0].mxu0
  %v4489 = vadd.f32 %v4446, %v4488
  %v4490 = vpop.f32.mrb[0].mxu0
  %v4491 = vadd.f32 %v4448, %v4490
  %4492 = vdwg.mxu0
  %4493 = vmatprep.subr.bf16.mxu0 %v2706
  %4494 = vmatpush1.bf16.msra.mxu0 %v2705
  %4495 = vmatprep.subr.bf16.mxu0 %v2722
  %4496 = vmatpush1.bf16.msra.mxu0 %v2721
  %4497 = vmatprep.subr.bf16.mxu0 %v2738
  %4498 = vmatpush1.bf16.msra.mxu0 %v2737
  %4499 = vmatprep.subr.bf16.mxu0 %v2754
  %4500 = vmatpush1.bf16.msra.mxu0 %v2753
  %4501 = vmatprep.subr.bf16.mxu0 %v2770
  %4502 = vmatpush1.bf16.msra.mxu0 %v2769
  %4503 = vmatprep.subr.bf16.mxu0 %v2786
  %4504 = vmatpush1.bf16.msra.mxu0 %v2785
  %4505 = vmatprep.subr.bf16.mxu0 %v2802
  %4506 = vmatpush1.bf16.msra.mxu0 %v2801
  %4507 = vmatprep.subr.bf16.mxu0 %v2818
  %4508 = vmatpush1.bf16.msra.mxu0 %v2817
  %4509 = vmatprep.subr.bf16.mxu0 %v2834
  %4510 = vmatpush1.bf16.msra.mxu0 %v2833
  %4511 = vmatprep.subr.bf16.mxu0 %v2850
  %4512 = vmatpush1.bf16.msra.mxu0 %v2849
  %4513 = vmatprep.subr.bf16.mxu0 %v2866
  %4514 = vmatpush1.bf16.msra.mxu0 %v2865
  %4515 = vmatprep.subr.bf16.mxu0 %v2882
  %4516 = vmatpush1.bf16.msra.mxu0 %v2881
  %4517 = vmatprep.subr.bf16.mxu0 %v2898
  %4518 = vmatpush1.bf16.msra.mxu0 %v2897
  %4519 = vmatprep.subr.bf16.mxu0 %v2914
  %4520 = vmatpush1.bf16.msra.mxu0 %v2913
  %4521 = vmatprep.subr.bf16.mxu0 %v2930
  %4522 = vmatpush1.bf16.msra.mxu0 %v2929
  %4523 = vmatprep.subr.bf16.mxu0 %v2946
  %4524 = vmatpush1.bf16.msra.mxu0 %v2945
  %4525 = vmatprep.mubr.bf16.mxu0 %v768
  %4526 = vmatmul.mubr.bf16.gmra.mrb[0].mxu0 %v767
  %v4527 = vpop.f32.mrb[0].mxu0
  %v4528 = vadd.f32 %v706, %v4527
  %v4529 = vpop.f32.mrb[0].mxu0
  %v4530 = vadd.f32 %v710, %v4529
  %v4531 = vpop.f32.mrb[0].mxu0
  %v4532 = vadd.f32 %v706, %v4531
  %v4533 = vpop.f32.mrb[0].mxu0
  %v4534 = vadd.f32 %v710, %v4533
  %4535 = vdwg.mxu0
  %4536 = vmatprep.subr.bf16.mxu0 %v2962
  %4537 = vmatpush1.bf16.msra.mxu0 %v2961
  %4538 = vmatprep.subr.bf16.mxu0 %v2978
  %4539 = vmatpush1.bf16.msra.mxu0 %v2977
  %4540 = vmatprep.subr.bf16.mxu0 %v2994
  %4541 = vmatpush1.bf16.msra.mxu0 %v2993
  %4542 = vmatprep.subr.bf16.mxu0 %v3010
  %4543 = vmatpush1.bf16.msra.mxu0 %v3009
  %4544 = vmatprep.subr.bf16.mxu0 %v3026
  %4545 = vmatpush1.bf16.msra.mxu0 %v3025
  %4546 = vmatprep.subr.bf16.mxu0 %v3042
  %4547 = vmatpush1.bf16.msra.mxu0 %v3041
  %4548 = vmatprep.subr.bf16.mxu0 %v3058
  %4549 = vmatpush1.bf16.msra.mxu0 %v3057
  %4550 = vmatprep.subr.bf16.mxu0 %v3074
  %4551 = vmatpush1.bf16.msra.mxu0 %v3073
  %4552 = vmatprep.subr.bf16.mxu0 %v3090
  %4553 = vmatpush1.bf16.msra.mxu0 %v3089
  %4554 = vmatprep.subr.bf16.mxu0 %v3106
  %4555 = vmatpush1.bf16.msra.mxu0 %v3105
  %4556 = vmatprep.subr.bf16.mxu0 %v3122
  %4557 = vmatpush1.bf16.msra.mxu0 %v3121
  %4558 = vmatprep.subr.bf16.mxu0 %v3138
  %4559 = vmatpush1.bf16.msra.mxu0 %v3137
  %4560 = vmatprep.subr.bf16.mxu0 %v3154
  %4561 = vmatpush1.bf16.msra.mxu0 %v3153
  %4562 = vmatprep.subr.bf16.mxu0 %v3170
  %4563 = vmatpush1.bf16.msra.mxu0 %v3169
  %4564 = vmatprep.subr.bf16.mxu0 %v3186
  %4565 = vmatpush1.bf16.msra.mxu0 %v3185
  %4566 = vmatprep.subr.bf16.mxu0 %v3202
  %4567 = vmatpush1.bf16.msra.mxu0 %v3201
  %4568 = vmatprep.mubr.bf16.mxu0 %v770
  %4569 = vmatmul.mubr.bf16.gmra.mrb[0].mxu0 %v769
  %v4570 = vpop.f32.mrb[0].mxu0
  %v4571 = vadd.f32 %v4528, %v4570
  %v4572 = vpop.f32.mrb[0].mxu0
  %v4573 = vadd.f32 %v4530, %v4572
  %v4574 = vpop.f32.mrb[0].mxu0
  %v4575 = vadd.f32 %v4532, %v4574
  %v4576 = vpop.f32.mrb[0].mxu0
  %v4577 = vadd.f32 %v4534, %v4576
  %4578 = vdwg.mxu0
  %4579 = vmatprep.subr.bf16.mxu0 %v3218
  %4580 = vmatpush1.bf16.msra.mxu0 %v3217
  %4581 = vmatprep.subr.bf16.mxu0 %v3234
  %4582 = vmatpush1.bf16.msra.mxu0 %v3233
  %4583 = vmatprep.subr.bf16.mxu0 %v3250
  %4584 = vmatpush1.bf16.msra.mxu0 %v3249
  %4585 = vmatprep.subr.bf16.mxu0 %v3266
  %4586 = vmatpush1.bf16.msra.mxu0 %v3265
  %4587 = vmatprep.subr.bf16.mxu0 %v3282
  %4588 = vmatpush1.bf16.msra.mxu0 %v3281
  %4589 = vmatprep.subr.bf16.mxu0 %v3298
  %4590 = vmatpush1.bf16.msra.mxu0 %v3297
  %4591 = vmatprep.subr.bf16.mxu0 %v3314
  %4592 = vmatpush1.bf16.msra.mxu0 %v3313
  %4593 = vmatprep.subr.bf16.mxu0 %v3330
  %4594 = vmatpush1.bf16.msra.mxu0 %v3329
  %4595 = vmatprep.subr.bf16.mxu0 0
  %4596 = vmatpush1.bf16.msra.mxu0 0
  %4597 = vmatprep.subr.bf16.mxu0 0
  %4598 = vmatpush1.bf16.msra.mxu0 0
  %4599 = vmatprep.subr.bf16.mxu0 0
  %4600 = vmatpush1.bf16.msra.mxu0 0
  %4601 = vmatprep.subr.bf16.mxu0 0
  %4602 = vmatpush1.bf16.msra.mxu0 0
  %4603 = vmatprep.subr.bf16.mxu0 0
  %4604 = vmatpush1.bf16.msra.mxu0 0
  %4605 = vmatprep.subr.bf16.mxu0 0
  %4606 = vmatpush1.bf16.msra.mxu0 0
  %4607 = vmatprep.subr.bf16.mxu0 0
  %4608 = vmatpush1.bf16.msra.mxu0 0
  %4609 = vmatprep.subr.bf16.mxu0 0
  %4610 = vmatpush1.bf16.msra.mxu0 0
  %4611 = vmatprep.mubr.bf16.mxu0 0
  %4612 = vmatmul.mubr.bf16.gmra.mrb[0].mxu0 %v771
  %v4613 = vpop.f32.mrb[0].mxu0
  %v4614 = vadd.f32 %v4571, %v4613
  %v4615 = vpop.f32.mrb[0].mxu0
  %v4616 = vadd.f32 %v4573, %v4615
  %v4617 = vpop.f32.mrb[0].mxu0
  %v4618 = vadd.f32 %v4575, %v4617
  %v4619 = vpop.f32.mrb[0].mxu0
  %v4620 = vadd.f32 %v4577, %v4619
  %4621 = vdwg.mxu0
  %4622 = vmatprep.subr.bf16.mxu0 %v2708
  %4623 = vmatpush1.bf16.msra.mxu0 %v2707
  %4624 = vmatprep.subr.bf16.mxu0 %v2724
  %4625 = vmatpush1.bf16.msra.mxu0 %v2723
  %4626 = vmatprep.subr.bf16.mxu0 %v2740
  %4627 = vmatpush1.bf16.msra.mxu0 %v2739
  %4628 = vmatprep.subr.bf16.mxu0 %v2756
  %4629 = vmatpush1.bf16.msra.mxu0 %v2755
  %4630 = vmatprep.subr.bf16.mxu0 %v2772
  %4631 = vmatpush1.bf16.msra.mxu0 %v2771
  %4632 = vmatprep.subr.bf16.mxu0 %v2788
  %4633 = vmatpush1.bf16.msra.mxu0 %v2787
  %4634 = vmatprep.subr.bf16.mxu0 %v2804
  %4635 = vmatpush1.bf16.msra.mxu0 %v2803
  %4636 = vmatprep.subr.bf16.mxu0 %v2820
  %4637 = vmatpush1.bf16.msra.mxu0 %v2819
  %4638 = vmatprep.subr.bf16.mxu0 %v2836
  %4639 = vmatpush1.bf16.msra.mxu0 %v2835
  %4640 = vmatprep.subr.bf16.mxu0 %v2852
  %4641 = vmatpush1.bf16.msra.mxu0 %v2851
  %4642 = vmatprep.subr.bf16.mxu0 %v2868
  %4643 = vmatpush1.bf16.msra.mxu0 %v2867
  %4644 = vmatprep.subr.bf16.mxu0 %v2884
  %4645 = vmatpush1.bf16.msra.mxu0 %v2883
  %4646 = vmatprep.subr.bf16.mxu0 %v2900
  %4647 = vmatpush1.bf16.msra.mxu0 %v2899
  %4648 = vmatprep.subr.bf16.mxu0 %v2916
  %4649 = vmatpush1.bf16.msra.mxu0 %v2915
  %4650 = vmatprep.subr.bf16.mxu0 %v2932
  %4651 = vmatpush1.bf16.msra.mxu0 %v2931
  %4652 = vmatprep.subr.bf16.mxu0 %v2948
  %4653 = vmatpush1.bf16.msra.mxu0 %v2947
  %4654 = vmatprep.mubr.bf16.mxu0 %v768
  %4655 = vmatmul.mubr.bf16.gmra.mrb[0].mxu0 %v767
  %v4656 = vpop.f32.mrb[0].mxu0
  %v4657 = vadd.f32 %v714, %v4656
  %v4658 = vpop.f32.mrb[0].mxu0
  %v4659 = vadd.f32 %v718, %v4658
  %v4660 = vpop.f32.mrb[0].mxu0
  %v4661 = vadd.f32 %v714, %v4660
  %v4662 = vpop.f32.mrb[0].mxu0
  %v4663 = vadd.f32 %v718, %v4662
  %4664 = vdwg.mxu0
  %4665 = vmatprep.subr.bf16.mxu0 %v2964
  %4666 = vmatpush1.bf16.msra.mxu0 %v2963
  %4667 = vmatprep.subr.bf16.mxu0 %v2980
  %4668 = vmatpush1.bf16.msra.mxu0 %v2979
  %4669 = vmatprep.subr.bf16.mxu0 %v2996
  %4670 = vmatpush1.bf16.msra.mxu0 %v2995
  %4671 = vmatprep.subr.bf16.mxu0 %v3012
  %4672 = vmatpush1.bf16.msra.mxu0 %v3011
  %4673 = vmatprep.subr.bf16.mxu0 %v3028
  %4674 = vmatpush1.bf16.msra.mxu0 %v3027
  %4675 = vmatprep.subr.bf16.mxu0 %v3044
  %4676 = vmatpush1.bf16.msra.mxu0 %v3043
  %4677 = vmatprep.subr.bf16.mxu0 %v3060
  %4678 = vmatpush1.bf16.msra.mxu0 %v3059
  %4679 = vmatprep.subr.bf16.mxu0 %v3076
  %4680 = vmatpush1.bf16.msra.mxu0 %v3075
  %4681 = vmatprep.subr.bf16.mxu0 %v3092
  %4682 = vmatpush1.bf16.msra.mxu0 %v3091
  %4683 = vmatprep.subr.bf16.mxu0 %v3108
  %4684 = vmatpush1.bf16.msra.mxu0 %v3107
  %4685 = vmatprep.subr.bf16.mxu0 %v3124
  %4686 = vmatpush1.bf16.msra.mxu0 %v3123
  %4687 = vmatprep.subr.bf16.mxu0 %v3140
  %4688 = vmatpush1.bf16.msra.mxu0 %v3139
  %4689 = vmatprep.subr.bf16.mxu0 %v3156
  %4690 = vmatpush1.bf16.msra.mxu0 %v3155
  %4691 = vmatprep.subr.bf16.mxu0 %v3172
  %4692 = vmatpush1.bf16.msra.mxu0 %v3171
  %4693 = vmatprep.subr.bf16.mxu0 %v3188
  %4694 = vmatpush1.bf16.msra.mxu0 %v3187
  %4695 = vmatprep.subr.bf16.mxu0 %v3204
  %4696 = vmatpush1.bf16.msra.mxu0 %v3203
  %4697 = vmatprep.mubr.bf16.mxu0 %v770
  %4698 = vmatmul.mubr.bf16.gmra.mrb[0].mxu0 %v769
  %v4699 = vpop.f32.mrb[0].mxu0
  %v4700 = vadd.f32 %v4657, %v4699
  %v4701 = vpop.f32.mrb[0].mxu0
  %v4702 = vadd.f32 %v4659, %v4701
  %v4703 = vpop.f32.mrb[0].mxu0
  %v4704 = vadd.f32 %v4661, %v4703
  %v4705 = vpop.f32.mrb[0].mxu0
  %v4706 = vadd.f32 %v4663, %v4705
  %4707 = vdwg.mxu0
  %4708 = vmatprep.subr.bf16.mxu0 %v3220
  %4709 = vmatpush1.bf16.msra.mxu0 %v3219
  %4710 = vmatprep.subr.bf16.mxu0 %v3236
  %4711 = vmatpush1.bf16.msra.mxu0 %v3235
  %4712 = vmatprep.subr.bf16.mxu0 %v3252
  %4713 = vmatpush1.bf16.msra.mxu0 %v3251
  %4714 = vmatprep.subr.bf16.mxu0 %v3268
  %4715 = vmatpush1.bf16.msra.mxu0 %v3267
  %4716 = vmatprep.subr.bf16.mxu0 %v3284
  %4717 = vmatpush1.bf16.msra.mxu0 %v3283
  %4718 = vmatprep.subr.bf16.mxu0 %v3300
  %4719 = vmatpush1.bf16.msra.mxu0 %v3299
  %4720 = vmatprep.subr.bf16.mxu0 %v3316
  %4721 = vmatpush1.bf16.msra.mxu0 %v3315
  %4722 = vmatprep.subr.bf16.mxu0 %v3332
  %4723 = vmatpush1.bf16.msra.mxu0 %v3331
  %4724 = vmatprep.subr.bf16.mxu0 0
  %4725 = vmatpush1.bf16.msra.mxu0 0
  %4726 = vmatprep.subr.bf16.mxu0 0
  %4727 = vmatpush1.bf16.msra.mxu0 0
  %4728 = vmatprep.subr.bf16.mxu0 0
  %4729 = vmatpush1.bf16.msra.mxu0 0
  %4730 = vmatprep.subr.bf16.mxu0 0
  %4731 = vmatpush1.bf16.msra.mxu0 0
  %4732 = vmatprep.subr.bf16.mxu0 0
  %4733 = vmatpush1.bf16.msra.mxu0 0
  %4734 = vmatprep.subr.bf16.mxu0 0
  %4735 = vmatpush1.bf16.msra.mxu0 0
  %4736 = vmatprep.subr.bf16.mxu0 0
  %4737 = vmatpush1.bf16.msra.mxu0 0
  %4738 = vmatprep.subr.bf16.mxu0 0
  %4739 = vmatpush1.bf16.msra.mxu0 0
  %4740 = vmatprep.mubr.bf16.mxu0 0
  %4741 = vmatmul.mubr.bf16.gmra.mrb[0].mxu0 %v771
  %v4742 = vpop.f32.mrb[0].mxu0
  %v4743 = vadd.f32 %v4700, %v4742
  %v4744 = vpop.f32.mrb[0].mxu0
  %v4745 = vadd.f32 %v4702, %v4744
  %v4746 = vpop.f32.mrb[0].mxu0
  %v4747 = vadd.f32 %v4704, %v4746
  %v4748 = vpop.f32.mrb[0].mxu0
  %v4749 = vadd.f32 %v4706, %v4748
  %4750 = vdwg.mxu0
  %4751 = vmatprep.subr.bf16.mxu0 %v2710
  %4752 = vmatpush1.bf16.msra.mxu0 %v2709
  %4753 = vmatprep.subr.bf16.mxu0 %v2726
  %4754 = vmatpush1.bf16.msra.mxu0 %v2725
  %4755 = vmatprep.subr.bf16.mxu0 %v2742
  %4756 = vmatpush1.bf16.msra.mxu0 %v2741
  %4757 = vmatprep.subr.bf16.mxu0 %v2758
  %4758 = vmatpush1.bf16.msra.mxu0 %v2757
  %4759 = vmatprep.subr.bf16.mxu0 %v2774
  %4760 = vmatpush1.bf16.msra.mxu0 %v2773
  %4761 = vmatprep.subr.bf16.mxu0 %v2790
  %4762 = vmatpush1.bf16.msra.mxu0 %v2789
  %4763 = vmatprep.subr.bf16.mxu0 %v2806
  %4764 = vmatpush1.bf16.msra.mxu0 %v2805
  %4765 = vmatprep.subr.bf16.mxu0 %v2822
  %4766 = vmatpush1.bf16.msra.mxu0 %v2821
  %4767 = vmatprep.subr.bf16.mxu0 %v2838
  %4768 = vmatpush1.bf16.msra.mxu0 %v2837
  %4769 = vmatprep.subr.bf16.mxu0 %v2854
  %4770 = vmatpush1.bf16.msra.mxu0 %v2853
  %4771 = vmatprep.subr.bf16.mxu0 %v2870
  %4772 = vmatpush1.bf16.msra.mxu0 %v2869
  %4773 = vmatprep.subr.bf16.mxu0 %v2886
  %4774 = vmatpush1.bf16.msra.mxu0 %v2885
  %4775 = vmatprep.subr.bf16.mxu0 %v2902
  %4776 = vmatpush1.bf16.msra.mxu0 %v2901
  %4777 = vmatprep.subr.bf16.mxu0 %v2918
  %4778 = vmatpush1.bf16.msra.mxu0 %v2917
  %4779 = vmatprep.subr.bf16.mxu0 %v2934
  %4780 = vmatpush1.bf16.msra.mxu0 %v2933
  %4781 = vmatprep.subr.bf16.mxu0 %v2950
  %4782 = vmatpush1.bf16.msra.mxu0 %v2949
  %4783 = vmatprep.mubr.bf16.mxu0 %v768
  %4784 = vmatmul.mubr.bf16.gmra.mrb[0].mxu0 %v767
  %v4785 = vpop.f32.mrb[0].mxu0
  %v4786 = vadd.f32 %v722, %v4785
  %v4787 = vpop.f32.mrb[0].mxu0
  %v4788 = vadd.f32 %v726, %v4787
  %v4789 = vpop.f32.mrb[0].mxu0
  %v4790 = vadd.f32 %v722, %v4789
  %v4791 = vpop.f32.mrb[0].mxu0
  %v4792 = vadd.f32 %v726, %v4791
  %4793 = vdwg.mxu0
  %4794 = vmatprep.subr.bf16.mxu0 %v2966
  %4795 = vmatpush1.bf16.msra.mxu0 %v2965
  %4796 = vmatprep.subr.bf16.mxu0 %v2982
  %4797 = vmatpush1.bf16.msra.mxu0 %v2981
  %4798 = vmatprep.subr.bf16.mxu0 %v2998
  %4799 = vmatpush1.bf16.msra.mxu0 %v2997
  %4800 = vmatprep.subr.bf16.mxu0 %v3014
  %4801 = vmatpush1.bf16.msra.mxu0 %v3013
  %4802 = vmatprep.subr.bf16.mxu0 %v3030
  %4803 = vmatpush1.bf16.msra.mxu0 %v3029
  %4804 = vmatprep.subr.bf16.mxu0 %v3046
  %4805 = vmatpush1.bf16.msra.mxu0 %v3045
  %4806 = vmatprep.subr.bf16.mxu0 %v3062
  %4807 = vmatpush1.bf16.msra.mxu0 %v3061
  %4808 = vmatprep.subr.bf16.mxu0 %v3078
  %4809 = vmatpush1.bf16.msra.mxu0 %v3077
  %4810 = vmatprep.subr.bf16.mxu0 %v3094
  %4811 = vmatpush1.bf16.msra.mxu0 %v3093
  %4812 = vmatprep.subr.bf16.mxu0 %v3110
  %4813 = vmatpush1.bf16.msra.mxu0 %v3109
  %4814 = vmatprep.subr.bf16.mxu0 %v3126
  %4815 = vmatpush1.bf16.msra.mxu0 %v3125
  %4816 = vmatprep.subr.bf16.mxu0 %v3142
  %4817 = vmatpush1.bf16.msra.mxu0 %v3141
  %4818 = vmatprep.subr.bf16.mxu0 %v3158
  %4819 = vmatpush1.bf16.msra.mxu0 %v3157
  %4820 = vmatprep.subr.bf16.mxu0 %v3174
  %4821 = vmatpush1.bf16.msra.mxu0 %v3173
  %4822 = vmatprep.subr.bf16.mxu0 %v3190
  %4823 = vmatpush1.bf16.msra.mxu0 %v3189
  %4824 = vmatprep.subr.bf16.mxu0 %v3206
  %4825 = vmatpush1.bf16.msra.mxu0 %v3205
  %4826 = vmatprep.mubr.bf16.mxu0 %v770
  %4827 = vmatmul.mubr.bf16.gmra.mrb[0].mxu0 %v769
  %v4828 = vpop.f32.mrb[0].mxu0
  %v4829 = vadd.f32 %v4786, %v4828
  %v4830 = vpop.f32.mrb[0].mxu0
  %v4831 = vadd.f32 %v4788, %v4830
  %v4832 = vpop.f32.mrb[0].mxu0
  %v4833 = vadd.f32 %v4790, %v4832
  %v4834 = vpop.f32.mrb[0].mxu0
  %v4835 = vadd.f32 %v4792, %v4834
  %4836 = vdwg.mxu0
  %4837 = vmatprep.subr.bf16.mxu0 %v3222
  %4838 = vmatpush1.bf16.msra.mxu0 %v3221
  %4839 = vmatprep.subr.bf16.mxu0 %v3238
  %4840 = vmatpush1.bf16.msra.mxu0 %v3237
  %4841 = vmatprep.subr.bf16.mxu0 %v3254
  %4842 = vmatpush1.bf16.msra.mxu0 %v3253
  %4843 = vmatprep.subr.bf16.mxu0 %v3270
  %4844 = vmatpush1.bf16.msra.mxu0 %v3269
  %4845 = vmatprep.subr.bf16.mxu0 %v3286
  %4846 = vmatpush1.bf16.msra.mxu0 %v3285
  %4847 = vmatprep.subr.bf16.mxu0 %v3302
  %4848 = vmatpush1.bf16.msra.mxu0 %v3301
  %4849 = vmatprep.subr.bf16.mxu0 %v3318
  %4850 = vmatpush1.bf16.msra.mxu0 %v3317
  %4851 = vmatprep.subr.bf16.mxu0 %v3334
  %4852 = vmatpush1.bf16.msra.mxu0 %v3333
  %4853 = vmatprep.subr.bf16.mxu0 0
  %4854 = vmatpush1.bf16.msra.mxu0 0
  %4855 = vmatprep.subr.bf16.mxu0 0
  %4856 = vmatpush1.bf16.msra.mxu0 0
  %4857 = vmatprep.subr.bf16.mxu0 0
  %4858 = vmatpush1.bf16.msra.mxu0 0
  %4859 = vmatprep.subr.bf16.mxu0 0
  %4860 = vmatpush1.bf16.msra.mxu0 0
  %4861 = vmatprep.subr.bf16.mxu0 0
  %4862 = vmatpush1.bf16.msra.mxu0 0
  %4863 = vmatprep.subr.bf16.mxu0 0
  %4864 = vmatpush1.bf16.msra.mxu0 0
  %4865 = vmatprep.subr.bf16.mxu0 0
  %4866 = vmatpush1.bf16.msra.mxu0 0
  %4867 = vmatprep.subr.bf16.mxu0 0
  %4868 = vmatpush1.bf16.msra.mxu0 0
  %4869 = vmatprep.mubr.bf16.mxu0 0
  %4870 = vmatmul.mubr.bf16.gmra.mrb[0].mxu0 %v771
  %v4871 = vpop.f32.mrb[0].mxu0
  %v4872 = vadd.f32 %v4829, %v4871
  %v4873 = vpop.f32.mrb[0].mxu0
  %v4874 = vadd.f32 %v4831, %v4873
  %v4875 = vpop.f32.mrb[0].mxu0
  %v4876 = vadd.f32 %v4833, %v4875
  %v4877 = vpop.f32.mrb[0].mxu0
  %v4878 = vadd.f32 %v4835, %v4877
  %4879 = vdwg.mxu0
  %4880 = vmatprep.subr.bf16.mxu0 %v2712
  %4881 = vmatpush1.bf16.msra.mxu0 %v2711
  %4882 = vmatprep.subr.bf16.mxu0 %v2728
  %4883 = vmatpush1.bf16.msra.mxu0 %v2727
  %4884 = vmatprep.subr.bf16.mxu0 %v2744
  %4885 = vmatpush1.bf16.msra.mxu0 %v2743
  %4886 = vmatprep.subr.bf16.mxu0 %v2760
  %4887 = vmatpush1.bf16.msra.mxu0 %v2759
  %4888 = vmatprep.subr.bf16.mxu0 %v2776
  %4889 = vmatpush1.bf16.msra.mxu0 %v2775
  %4890 = vmatprep.subr.bf16.mxu0 %v2792
  %4891 = vmatpush1.bf16.msra.mxu0 %v2791
  %4892 = vmatprep.subr.bf16.mxu0 %v2808
  %4893 = vmatpush1.bf16.msra.mxu0 %v2807
  %4894 = vmatprep.subr.bf16.mxu0 %v2824
  %4895 = vmatpush1.bf16.msra.mxu0 %v2823
  %4896 = vmatprep.subr.bf16.mxu0 %v2840
  %4897 = vmatpush1.bf16.msra.mxu0 %v2839
  %4898 = vmatprep.subr.bf16.mxu0 %v2856
  %4899 = vmatpush1.bf16.msra.mxu0 %v2855
  %4900 = vmatprep.subr.bf16.mxu0 %v2872
  %4901 = vmatpush1.bf16.msra.mxu0 %v2871
  %4902 = vmatprep.subr.bf16.mxu0 %v2888
  %4903 = vmatpush1.bf16.msra.mxu0 %v2887
  %4904 = vmatprep.subr.bf16.mxu0 %v2904
  %4905 = vmatpush1.bf16.msra.mxu0 %v2903
  %4906 = vmatprep.subr.bf16.mxu0 %v2920
  %4907 = vmatpush1.bf16.msra.mxu0 %v2919
  %4908 = vmatprep.subr.bf16.mxu0 %v2936
  %4909 = vmatpush1.bf16.msra.mxu0 %v2935
  %4910 = vmatprep.subr.bf16.mxu0 %v2952
  %4911 = vmatpush1.bf16.msra.mxu0 %v2951
  %4912 = vmatprep.mubr.bf16.mxu0 %v768
  %4913 = vmatmul.mubr.bf16.gmra.mrb[0].mxu0 %v767
  %v4914 = vpop.f32.mrb[0].mxu0
  %v4915 = vadd.f32 %v730, %v4914
  %v4916 = vpop.f32.mrb[0].mxu0
  %v4917 = vadd.f32 %v734, %v4916
  %v4918 = vpop.f32.mrb[0].mxu0
  %v4919 = vadd.f32 %v730, %v4918
  %v4920 = vpop.f32.mrb[0].mxu0
  %v4921 = vadd.f32 %v734, %v4920
  %4922 = vdwg.mxu0
  %4923 = vmatprep.subr.bf16.mxu0 %v2968
  %4924 = vmatpush1.bf16.msra.mxu0 %v2967
  %4925 = vmatprep.subr.bf16.mxu0 %v2984
  %4926 = vmatpush1.bf16.msra.mxu0 %v2983
  %4927 = vmatprep.subr.bf16.mxu0 %v3000
  %4928 = vmatpush1.bf16.msra.mxu0 %v2999
  %4929 = vmatprep.subr.bf16.mxu0 %v3016
  %4930 = vmatpush1.bf16.msra.mxu0 %v3015
  %4931 = vmatprep.subr.bf16.mxu0 %v3032
  %4932 = vmatpush1.bf16.msra.mxu0 %v3031
  %4933 = vmatprep.subr.bf16.mxu0 %v3048
  %4934 = vmatpush1.bf16.msra.mxu0 %v3047
  %4935 = vmatprep.subr.bf16.mxu0 %v3064
  %4936 = vmatpush1.bf16.msra.mxu0 %v3063
  %4937 = vmatprep.subr.bf16.mxu0 %v3080
  %4938 = vmatpush1.bf16.msra.mxu0 %v3079
  %4939 = vmatprep.subr.bf16.mxu0 %v3096
  %4940 = vmatpush1.bf16.msra.mxu0 %v3095
  %4941 = vmatprep.subr.bf16.mxu0 %v3112
  %4942 = vmatpush1.bf16.msra.mxu0 %v3111
  %4943 = vmatprep.subr.bf16.mxu0 %v3128
  %4944 = vmatpush1.bf16.msra.mxu0 %v3127
  %4945 = vmatprep.subr.bf16.mxu0 %v3144
  %4946 = vmatpush1.bf16.msra.mxu0 %v3143
  %4947 = vmatprep.subr.bf16.mxu0 %v3160
  %4948 = vmatpush1.bf16.msra.mxu0 %v3159
  %4949 = vmatprep.subr.bf16.mxu0 %v3176
  %4950 = vmatpush1.bf16.msra.mxu0 %v3175
  %4951 = vmatprep.subr.bf16.mxu0 %v3192
  %4952 = vmatpush1.bf16.msra.mxu0 %v3191
  %4953 = vmatprep.subr.bf16.mxu0 %v3208
  %4954 = vmatpush1.bf16.msra.mxu0 %v3207
  %4955 = vmatprep.mubr.bf16.mxu0 %v770
  %4956 = vmatmul.mubr.bf16.gmra.mrb[0].mxu0 %v769
  %v4957 = vpop.f32.mrb[0].mxu0
  %v4958 = vadd.f32 %v4915, %v4957
  %v4959 = vpop.f32.mrb[0].mxu0
  %v4960 = vadd.f32 %v4917, %v4959
  %v4961 = vpop.f32.mrb[0].mxu0
  %v4962 = vadd.f32 %v4919, %v4961
  %v4963 = vpop.f32.mrb[0].mxu0
  %v4964 = vadd.f32 %v4921, %v4963
  %4965 = vdwg.mxu0
  %4966 = vmatprep.subr.bf16.mxu0 %v3224
  %4967 = vmatpush1.bf16.msra.mxu0 %v3223
  %4968 = vmatprep.subr.bf16.mxu0 %v3240
  %4969 = vmatpush1.bf16.msra.mxu0 %v3239
  %4970 = vmatprep.subr.bf16.mxu0 %v3256
  %4971 = vmatpush1.bf16.msra.mxu0 %v3255
  %4972 = vmatprep.subr.bf16.mxu0 %v3272
  %4973 = vmatpush1.bf16.msra.mxu0 %v3271
  %4974 = vmatprep.subr.bf16.mxu0 %v3288
  %4975 = vmatpush1.bf16.msra.mxu0 %v3287
  %4976 = vmatprep.subr.bf16.mxu0 %v3304
  %4977 = vmatpush1.bf16.msra.mxu0 %v3303
  %4978 = vmatprep.subr.bf16.mxu0 %v3320
  %4979 = vmatpush1.bf16.msra.mxu0 %v3319
  %4980 = vmatprep.subr.bf16.mxu0 %v3336
  %4981 = vmatpush1.bf16.msra.mxu0 %v3335
  %4982 = vmatprep.subr.bf16.mxu0 0
  %4983 = vmatpush1.bf16.msra.mxu0 0
  %4984 = vmatprep.subr.bf16.mxu0 0
  %4985 = vmatpush1.bf16.msra.mxu0 0
  %4986 = vmatprep.subr.bf16.mxu0 0
  %4987 = vmatpush1.bf16.msra.mxu0 0
  %4988 = vmatprep.subr.bf16.mxu0 0
  %4989 = vmatpush1.bf16.msra.mxu0 0
  %4990 = vmatprep.subr.bf16.mxu0 0
  %4991 = vmatpush1.bf16.msra.mxu0 0
  %4992 = vmatprep.subr.bf16.mxu0 0
  %4993 = vmatpush1.bf16.msra.mxu0 0
  %4994 = vmatprep.subr.bf16.mxu0 0
  %4995 = vmatpush1.bf16.msra.mxu0 0
  %4996 = vmatprep.subr.bf16.mxu0 0
  %4997 = vmatpush1.bf16.msra.mxu0 0
  %4998 = vmatprep.mubr.bf16.mxu0 0
  %4999 = vmatmul.mubr.bf16.gmra.mrb[0].mxu0 %v771
  %v5000 = vpop.f32.mrb[0].mxu0
  %v5001 = vadd.f32 %v4958, %v5000
  %v5002 = vpop.f32.mrb[0].mxu0
  %v5003 = vadd.f32 %v4960, %v5002
  %v5004 = vpop.f32.mrb[0].mxu0
  %v5005 = vadd.f32 %v4962, %v5004
  %v5006 = vpop.f32.mrb[0].mxu0
  %v5007 = vadd.f32 %v4964, %v5006
  %5008 = vdwg.mxu0
  %v5009 = vmax.f32 %v4098, 0.0
  %v5010 = vmax.f32 %v4100, 0.0
  %v5011 = vmax.f32 %v4227, 0.0
  %v5012 = vmax.f32 %v4229, 0.0
  %v5013 = vmax.f32 %v4356, 0.0
  %v5014 = vmax.f32 %v4358, 0.0
  %v5015 = vmax.f32 %v4485, 0.0
  %v5016 = vmax.f32 %v4487, 0.0
  %v5017 = vmax.f32 %v4614, 0.0
  %v5018 = vmax.f32 %v4616, 0.0
  %v5019 = vmax.f32 %v4743, 0.0
  %v5020 = vmax.f32 %v4745, 0.0
  %v5021 = vmax.f32 %v4872, 0.0
  %v5022 = vmax.f32 %v4874, 0.0
  %v5023 = vmax.f32 %v5001, 0.0
  %v5024 = vmax.f32 %v5003, 0.0
  %v5025 = vmax.f32 %v4102, 0.0
  %v5026 = vmax.f32 %v4104, 0.0
  %v5027 = vmax.f32 %v4231, 0.0
  %v5028 = vmax.f32 %v4233, 0.0
  %v5029 = vmax.f32 %v4360, 0.0
  %v5030 = vmax.f32 %v4362, 0.0
  %v5031 = vmax.f32 %v4489, 0.0
  %v5032 = vmax.f32 %v4491, 0.0
  %v5033 = vmax.f32 %v4618, 0.0
  %v5034 = vmax.f32 %v4620, 0.0
  %v5035 = vmax.f32 %v4747, 0.0
  %v5036 = vmax.f32 %v4749, 0.0
  %v5037 = vmax.f32 %v4876, 0.0
  %v5038 = vmax.f32 %v4878, 0.0
  %v5039 = vmax.f32 %v5005, 0.0
  %v5040 = vmax.f32 %v5007, 0.0
  %v5041 = vpack.c.bf16 %v5025, %v5009
  %v5042 = vpack.c.bf16 %v5026, %v5010
  %v5043 = vpack.c.bf16 %v5027, %v5011
  %v5044 = vpack.c.bf16 %v5028, %v5012
  %v5045 = vpack.c.bf16 %v5029, %v5013
  %v5046 = vpack.c.bf16 %v5030, %v5014
  %v5047 = vpack.c.bf16 %v5031, %v5015
  %v5048 = vpack.c.bf16 %v5032, %v5016
  %v5049 = vpack.c.bf16 %v5033, %v5017
  %v5050 = vpack.c.bf16 %v5034, %v5018
  %v5051 = vpack.c.bf16 %v5035, %v5019
  %v5052 = vpack.c.bf16 %v5036, %v5020
  %v5053 = vpack.c.bf16 %v5037, %v5021
  %v5054 = vpack.c.bf16 %v5038, %v5022
  %v5055 = vpack.c.bf16 %v5039, %v5023
  %v5056 = vpack.c.bf16 %v5040, %v5024
  %v5057 = vld [vmem:[%s3] sm:$0xf]
  %v5058 = vld [vmem:[%s3 + $0x4] sm:$0xf]
  %v5059 = vld [vmem:[%s3 + $0x8] sm:$0xf]
  %v5060 = vld [vmem:[%s3 + $0xc] sm:$0xf]
  %v5061 = vld [vmem:[%s3 + $0x10] sm:$0xf]
  %v5062 = vld [vmem:[%s3 + $0x14] sm:$0xf]
  %v5063 = vld [vmem:[%s3 + $0x18] sm:$0xf]
  %v5064 = vld [vmem:[%s3 + $0x1c] sm:$0xf]
  %v5065 = vld [vmem:[%s3 + $0x20] sm:$0xf]
  %v5066 = vld [vmem:[%s3 + $0x24] sm:$0xf]
  %v5067 = vld [vmem:[%s3 + $0x28] sm:$0xf]
  %v5068 = vld [vmem:[%s3 + $0x2c] sm:$0xf]
  %v5069 = vld [vmem:[%s3 + $0x30] sm:$0xf]
  %v5070 = vld [vmem:[%s3 + $0x34] sm:$0xf]
  %v5071 = vld [vmem:[%s3 + $0x38] sm:$0xf]
  %v5072 = vld [vmem:[%s3 + $0x3c] sm:$0xf]
  %v5073 = vld [vmem:[%s3 + $0x40] sm:$0xf]
  %v5074 = vld [vmem:[%s3 + $0x44] sm:$0xf]
  %v5075 = vld [vmem:[%s3 + $0x48] sm:$0xf]
  %v5076 = vld [vmem:[%s3 + $0x4c] sm:$0xf]
  %v5077 = vld [vmem:[%s3 + $0x50] sm:$0xf]
  %v5078 = vld [vmem:[%s3 + $0x54] sm:$0xf]
  %v5079 = vld [vmem:[%s3 + $0x58] sm:$0xf]
  %v5080 = vld [vmem:[%s3 + $0x5c] sm:$0xf]
  %v5081 = vld [vmem:[%s3 + $0x60] sm:$0xf]
  %v5082 = vld [vmem:[%s3 + $0x64] sm:$0xf]
  %v5083 = vld [vmem:[%s3 + $0x68] sm:$0xf]
  %v5084 = vld [vmem:[%s3 + $0x6c] sm:$0xf]
  %v5085 = vld [vmem:[%s3 + $0x70] sm:$0xf]
  %v5086 = vld [vmem:[%s3 + $0x74] sm:$0xf]
  %v5087 = vld [vmem:[%s3 + $0x78] sm:$0xf]
  %v5088 = vld [vmem:[%s3 + $0x7c] sm:$0xf]
  %v5089 = vld [vmem:[%s3 + $0x80] sm:$0xf]
  %v5090 = vld [vmem:[%s3 + $0x84] sm:$0xf]
  %v5091 = vld [vmem:[%s3 + $0x88] sm:$0xf]
  %v5092 = vld [vmem:[%s3 + $0x8c] sm:$0xf]
  %v5093 = vld [vmem:[%s3 + $0x90] sm:$0xf]
  %v5094 = vld [vmem:[%s3 + $0x94] sm:$0xf]
  %v5095 = vld [vmem:[%s3 + $0x98] sm:$0xf]
  %v5096 = vld [vmem:[%s3 + $0x9c] sm:$0xf]
  %v5097 = vld [vmem:[%s3 + $0xa0] sm:$0xf]
  %v5098 = vld [vmem:[%s3 + $0xa4] sm:$0xf]
  %v5099 = vld [vmem:[%s3 + $0xa8] sm:$0xf]
  %v5100 = vld [vmem:[%s3 + $0xac] sm:$0xf]
  %v5101 = vld [vmem:[%s3 + $0xb0] sm:$0xf]
  %v5102 = vld [vmem:[%s3 + $0xb4] sm:$0xf]
  %v5103 = vld [vmem:[%s3 + $0xb8] sm:$0xf]
  %v5104 = vld [vmem:[%s3 + $0xbc] sm:$0xf]
  %v5105 = vld [vmem:[%s3 + $0xc0] sm:$0xf]
  %v5106 = vld [vmem:[%s3 + $0xc4] sm:$0xf]
  %v5107 = vld [vmem:[%s3 + $0xc8] sm:$0xf]
  %v5108 = vld [vmem:[%s3 + $0xcc] sm:$0xf]
  %v5109 = vld [vmem:[%s3 + $0xd0] sm:$0xf]
  %v5110 = vld [vmem:[%s3 + $0xd4] sm:$0xf]
  %v5111 = vld [vmem:[%s3 + $0xd8] sm:$0xf]
  %v5112 = vld [vmem:[%s3 + $0xdc] sm:$0xf]
  %v5113 = vld [vmem:[%s3 + $0xe0] sm:$0xf]
  %v5114 = vld [vmem:[%s3 + $0xe4] sm:$0xf]
  %v5115 = vld [vmem:[%s3 + $0xe8] sm:$0xf]
  %v5116 = vld [vmem:[%s3 + $0xec] sm:$0xf]
  %v5117 = vld [vmem:[%s3 + $0xf0] sm:$0xf]
  %v5118 = vld [vmem:[%s3 + $0xf4] sm:$0xf]
  %v5119 = vld [vmem:[%s3 + $0xf8] sm:$0xf]
  %v5120 = vld [vmem:[%s3 + $0xfc] sm:$0xf]
  %v5121 = vld [vmem:[%s3 + $0x100] sm:$0xf]
  %v5122 = vld [vmem:[%s3 + $0x104] sm:$0xf]
  %v5123 = vld [vmem:[%s3 + $0x108] sm:$0xf]
  %v5124 = vld [vmem:[%s3 + $0x10c] sm:$0xf]
  %v5125 = vld [vmem:[%s3 + $0x110] sm:$0xf]
  %v5126 = vld [vmem:[%s3 + $0x114] sm:$0xf]
  %v5127 = vld [vmem:[%s3 + $0x118] sm:$0xf]
  %v5128 = vld [vmem:[%s3 + $0x11c] sm:$0xf]
  %v5129 = vld [vmem:[%s3 + $0x120] sm:$0xf]
  %v5130 = vld [vmem:[%s3 + $0x124] sm:$0xf]
  %v5131 = vld [vmem:[%s3 + $0x128] sm:$0xf]
  %v5132 = vld [vmem:[%s3 + $0x12c] sm:$0xf]
  %v5133 = vld [vmem:[%s3 + $0x130] sm:$0xf]
  %v5134 = vld [vmem:[%s3 + $0x134] sm:$0xf]
  %v5135 = vld [vmem:[%s3 + $0x138] sm:$0xf]
  %v5136 = vld [vmem:[%s3 + $0x13c] sm:$0xf]
  %v5137 = vld [vmem:[%s3 + $0x140] sm:$0xf]
  %v5138 = vld [vmem:[%s3 + $0x144] sm:$0xf]
  %v5139 = vld [vmem:[%s3 + $0x148] sm:$0xf]
  %v5140 = vld [vmem:[%s3 + $0x14c] sm:$0xf]
  %v5141 = vld [vmem:[%s3 + $0x150] sm:$0xf]
  %v5142 = vld [vmem:[%s3 + $0x154] sm:$0xf]
  %v5143 = vld [vmem:[%s3 + $0x158] sm:$0xf]
  %v5144 = vld [vmem:[%s3 + $0x15c] sm:$0xf]
  %v5145 = vld [vmem:[%s3 + $0x160] sm:$0xf]
  %v5146 = vld [vmem:[%s3 + $0x164] sm:$0xf]
  %v5147 = vld [vmem:[%s3 + $0x168] sm:$0xf]
  %v5148 = vld [vmem:[%s3 + $0x16c] sm:$0xf]
  %v5149 = vld [vmem:[%s3 + $0x170] sm:$0xf]
  %v5150 = vld [vmem:[%s3 + $0x174] sm:$0xf]
  %v5151 = vld [vmem:[%s3 + $0x178] sm:$0xf]
  %v5152 = vld [vmem:[%s3 + $0x17c] sm:$0xf]
  %v5153 = vld [vmem:[%s3 + $0x180] sm:$0xf]
  %v5154 = vld [vmem:[%s3 + $0x184] sm:$0xf]
  %v5155 = vld [vmem:[%s3 + $0x188] sm:$0xf]
  %v5156 = vld [vmem:[%s3 + $0x18c] sm:$0xf]
  %v5157 = vld [vmem:[%s3 + $0x190] sm:$0xf]
  %v5158 = vld [vmem:[%s3 + $0x194] sm:$0xf]
  %v5159 = vld [vmem:[%s3 + $0x198] sm:$0xf]
  %v5160 = vld [vmem:[%s3 + $0x19c] sm:$0xf]
  %v5161 = vld [vmem:[%s3 + $0x1a0] sm:$0xf]
  %v5162 = vld [vmem:[%s3 + $0x1a4] sm:$0xf]
  %v5163 = vld [vmem:[%s3 + $0x1a8] sm:$0xf]
  %v5164 = vld [vmem:[%s3 + $0x1ac] sm:$0xf]
  %v5165 = vld [vmem:[%s3 + $0x1b0] sm:$0xf]
  %v5166 = vld [vmem:[%s3 + $0x1b4] sm:$0xf]
  %v5167 = vld [vmem:[%s3 + $0x1b8] sm:$0xf]
  %v5168 = vld [vmem:[%s3 + $0x1bc] sm:$0xf]
  %v5169 = vld [vmem:[%s3 + $0x1c0] sm:$0xf]
  %v5170 = vld [vmem:[%s3 + $0x1c4] sm:$0xf]
  %v5171 = vld [vmem:[%s3 + $0x1c8] sm:$0xf]
  %v5172 = vld [vmem:[%s3 + $0x1cc] sm:$0xf]
  %v5173 = vld [vmem:[%s3 + $0x1d0] sm:$0xf]
  %v5174 = vld [vmem:[%s3 + $0x1d4] sm:$0xf]
  %v5175 = vld [vmem:[%s3 + $0x1d8] sm:$0xf]
  %v5176 = vld [vmem:[%s3 + $0x1dc] sm:$0xf]
  %v5177 = vld [vmem:[%s3 + $0x1e0] sm:$0xf]
  %v5178 = vld [vmem:[%s3 + $0x1e4] sm:$0xf]
  %v5179 = vld [vmem:[%s3 + $0x1e8] sm:$0xf]
  %v5180 = vld [vmem:[%s3 + $0x1ec] sm:$0xf]
  %v5181 = vld [vmem:[%s3 + $0x1f0] sm:$0xf]
  %v5182 = vld [vmem:[%s3 + $0x1f4] sm:$0xf]
  %v5183 = vld [vmem:[%s3 + $0x1f8] sm:$0xf]
  %v5184 = vld [vmem:[%s3 + $0x1fc] sm:$0xf]
  %v5185 = vld [vmem:[%s3 + $0x200] sm:$0xf]
  %v5186 = vld [vmem:[%s3 + $0x204] sm:$0xf]
  %v5187 = vld [vmem:[%s3 + $0x208] sm:$0xf]
  %v5188 = vld [vmem:[%s3 + $0x20c] sm:$0xf]
  %v5189 = vld [vmem:[%s3 + $0x210] sm:$0xf]
  %v5190 = vld [vmem:[%s3 + $0x214] sm:$0xf]
  %v5191 = vld [vmem:[%s3 + $0x218] sm:$0xf]
  %v5192 = vld [vmem:[%s3 + $0x21c] sm:$0xf]
  %v5193 = vld [vmem:[%s3 + $0x220] sm:$0xf]
  %v5194 = vld [vmem:[%s3 + $0x224] sm:$0xf]
  %v5195 = vld [vmem:[%s3 + $0x228] sm:$0xf]
  %v5196 = vld [vmem:[%s3 + $0x22c] sm:$0xf]
  %v5197 = vld [vmem:[%s3 + $0x230] sm:$0xf]
  %v5198 = vld [vmem:[%s3 + $0x234] sm:$0xf]
  %v5199 = vld [vmem:[%s3 + $0x238] sm:$0xf]
  %v5200 = vld [vmem:[%s3 + $0x23c] sm:$0xf]
  %v5201 = vld [vmem:[%s3 + $0x240] sm:$0xf]
  %v5202 = vld [vmem:[%s3 + $0x244] sm:$0xf]
  %v5203 = vld [vmem:[%s3 + $0x248] sm:$0xf]
  %v5204 = vld [vmem:[%s3 + $0x24c] sm:$0xf]
  %v5205 = vld [vmem:[%s3 + $0x250] sm:$0xf]
  %v5206 = vld [vmem:[%s3 + $0x254] sm:$0xf]
  %v5207 = vld [vmem:[%s3 + $0x258] sm:$0xf]
  %v5208 = vld [vmem:[%s3 + $0x25c] sm:$0xf]
  %v5209 = vld [vmem:[%s3 + $0x260] sm:$0xf]
  %v5210 = vld [vmem:[%s3 + $0x264] sm:$0xf]
  %v5211 = vld [vmem:[%s3 + $0x268] sm:$0xf]
  %v5212 = vld [vmem:[%s3 + $0x26c] sm:$0xf]
  %v5213 = vld [vmem:[%s3 + $0x270] sm:$0xf]
  %v5214 = vld [vmem:[%s3 + $0x274] sm:$0xf]
  %v5215 = vld [vmem:[%s3 + $0x278] sm:$0xf]
  %v5216 = vld [vmem:[%s3 + $0x27c] sm:$0xf]
  %v5217 = vld [vmem:[%s3 + $0x280] sm:$0xf]
  %v5218 = vld [vmem:[%s3 + $0x284] sm:$0xf]
  %v5219 = vld [vmem:[%s3 + $0x288] sm:$0xf]
  %v5220 = vld [vmem:[%s3 + $0x28c] sm:$0xf]
  %v5221 = vld [vmem:[%s3 + $0x290] sm:$0xf]
  %v5222 = vld [vmem:[%s3 + $0x294] sm:$0xf]
  %v5223 = vld [vmem:[%s3 + $0x298] sm:$0xf]
  %v5224 = vld [vmem:[%s3 + $0x29c] sm:$0xf]
  %v5225 = vld [vmem:[%s3 + $0x2a0] sm:$0xf]
  %v5226 = vld [vmem:[%s3 + $0x2a4] sm:$0xf]
  %v5227 = vld [vmem:[%s3 + $0x2a8] sm:$0xf]
  %v5228 = vld [vmem:[%s3 + $0x2ac] sm:$0xf]
  %v5229 = vld [vmem:[%s3 + $0x2b0] sm:$0xf]
  %v5230 = vld [vmem:[%s3 + $0x2b4] sm:$0xf]
  %v5231 = vld [vmem:[%s3 + $0x2b8] sm:$0xf]
  %v5232 = vld [vmem:[%s3 + $0x2bc] sm:$0xf]
  %v5233 = vld [vmem:[%s3 + $0x2c0] sm:$0xf]
  %v5234 = vld [vmem:[%s3 + $0x2c4] sm:$0xf]
  %v5235 = vld [vmem:[%s3 + $0x2c8] sm:$0xf]
  %v5236 = vld [vmem:[%s3 + $0x2cc] sm:$0xf]
  %v5237 = vld [vmem:[%s3 + $0x2d0] sm:$0xf]
  %v5238 = vld [vmem:[%s3 + $0x2d4] sm:$0xf]
  %v5239 = vld [vmem:[%s3 + $0x2d8] sm:$0xf]
  %v5240 = vld [vmem:[%s3 + $0x2dc] sm:$0xf]
  %v5241 = vld [vmem:[%s3 + $0x2e0] sm:$0xf]
  %v5242 = vld [vmem:[%s3 + $0x2e4] sm:$0xf]
  %v5243 = vld [vmem:[%s3 + $0x2e8] sm:$0xf]
  %v5244 = vld [vmem:[%s3 + $0x2ec] sm:$0xf]
  %v5245 = vld [vmem:[%s3 + $0x2f0] sm:$0xf]
  %v5246 = vld [vmem:[%s3 + $0x2f4] sm:$0xf]
  %v5247 = vld [vmem:[%s3 + $0x2f8] sm:$0xf]
  %v5248 = vld [vmem:[%s3 + $0x2fc] sm:$0xf]
  %v5249 = vld [vmem:[%s3 + $0x300] sm:$0xf]
  %v5250 = vld [vmem:[%s3 + $0x304] sm:$0xf]
  %v5251 = vld [vmem:[%s3 + $0x308] sm:$0xf]
  %v5252 = vld [vmem:[%s3 + $0x30c] sm:$0xf]
  %v5253 = vld [vmem:[%s3 + $0x310] sm:$0xf]
  %v5254 = vld [vmem:[%s3 + $0x314] sm:$0xf]
  %v5255 = vld [vmem:[%s3 + $0x318] sm:$0xf]
  %v5256 = vld [vmem:[%s3 + $0x31c] sm:$0xf]
  %v5257 = vld [vmem:[%s3 + $0x320] sm:$0xf]
  %v5258 = vld [vmem:[%s3 + $0x324] sm:$0xf]
  %v5259 = vld [vmem:[%s3 + $0x328] sm:$0xf]
  %v5260 = vld [vmem:[%s3 + $0x32c] sm:$0xf]
  %v5261 = vld [vmem:[%s3 + $0x330] sm:$0xf]
  %v5262 = vld [vmem:[%s3 + $0x334] sm:$0xf]
  %v5263 = vld [vmem:[%s3 + $0x338] sm:$0xf]
  %v5264 = vld [vmem:[%s3 + $0x33c] sm:$0xf]
  %v5265 = vld [vmem:[%s3 + $0x340] sm:$0xf]
  %v5266 = vld [vmem:[%s3 + $0x344] sm:$0xf]
  %v5267 = vld [vmem:[%s3 + $0x348] sm:$0xf]
  %v5268 = vld [vmem:[%s3 + $0x34c] sm:$0xf]
  %v5269 = vld [vmem:[%s3 + $0x350] sm:$0xf]
  %v5270 = vld [vmem:[%s3 + $0x354] sm:$0xf]
  %v5271 = vld [vmem:[%s3 + $0x358] sm:$0xf]
  %v5272 = vld [vmem:[%s3 + $0x35c] sm:$0xf]
  %v5273 = vld [vmem:[%s3 + $0x360] sm:$0xf]
  %v5274 = vld [vmem:[%s3 + $0x364] sm:$0xf]
  %v5275 = vld [vmem:[%s3 + $0x368] sm:$0xf]
  %v5276 = vld [vmem:[%s3 + $0x36c] sm:$0xf]
  %v5277 = vld [vmem:[%s3 + $0x370] sm:$0xf]
  %v5278 = vld [vmem:[%s3 + $0x374] sm:$0xf]
  %v5279 = vld [vmem:[%s3 + $0x378] sm:$0xf]
  %v5280 = vld [vmem:[%s3 + $0x37c] sm:$0xf]
  %v5281 = vld [vmem:[%s3 + $0x380] sm:$0xf]
  %v5282 = vld [vmem:[%s3 + $0x384] sm:$0xf]
  %v5283 = vld [vmem:[%s3 + $0x388] sm:$0xf]
  %v5284 = vld [vmem:[%s3 + $0x38c] sm:$0xf]
  %v5285 = vld [vmem:[%s3 + $0x390] sm:$0xf]
  %v5286 = vld [vmem:[%s3 + $0x394] sm:$0xf]
  %v5287 = vld [vmem:[%s3 + $0x398] sm:$0xf]
  %v5288 = vld [vmem:[%s3 + $0x39c] sm:$0xf]
  %v5289 = vld [vmem:[%s3 + $0x3a0] sm:$0xf]
  %v5290 = vld [vmem:[%s3 + $0x3a4] sm:$0xf]
  %v5291 = vld [vmem:[%s3 + $0x3a8] sm:$0xf]
  %v5292 = vld [vmem:[%s3 + $0x3ac] sm:$0xf]
  %v5293 = vld [vmem:[%s3 + $0x3b0] sm:$0xf]
  %v5294 = vld [vmem:[%s3 + $0x3b4] sm:$0xf]
  %v5295 = vld [vmem:[%s3 + $0x3b8] sm:$0xf]
  %v5296 = vld [vmem:[%s3 + $0x3bc] sm:$0xf]
  %v5297 = vld [vmem:[%s3 + $0x3c0] sm:$0xf]
  %v5298 = vld [vmem:[%s3 + $0x3c4] sm:$0xf]
  %v5299 = vld [vmem:[%s3 + $0x3c8] sm:$0xf]
  %v5300 = vld [vmem:[%s3 + $0x3cc] sm:$0xf]
  %v5301 = vld [vmem:[%s3 + $0x3d0] sm:$0xf]
  %v5302 = vld [vmem:[%s3 + $0x3d4] sm:$0xf]
  %v5303 = vld [vmem:[%s3 + $0x3d8] sm:$0xf]
  %v5304 = vld [vmem:[%s3 + $0x3dc] sm:$0xf]
  %v5305 = vld [vmem:[%s3 + $0x3e0] sm:$0xf]
  %v5306 = vld [vmem:[%s3 + $0x3e4] sm:$0xf]
  %v5307 = vld [vmem:[%s3 + $0x3e8] sm:$0xf]
  %v5308 = vld [vmem:[%s3 + $0x3ec] sm:$0xf]
  %v5309 = vld [vmem:[%s3 + $0x3f0] sm:$0xf]
  %v5310 = vld [vmem:[%s3 + $0x3f4] sm:$0xf]
  %v5311 = vld [vmem:[%s3 + $0x3f8] sm:$0xf]
  %v5312 = vld [vmem:[%s3 + $0x3fc] sm:$0xf]
  %v5313 = vld [vmem:[%s4] sm:$0x1]
  %v5315 = vlaneseq
  %v5316 = vshrl.u32 %v5315, 7
  %v5317 = vsub.s32 0, %v5316
  %v5318 = vrot.slane %v5313, %v5317
  %v5576 = vunpack.c.l.b16 %v5057
  %v5577 = vunpack.c.l.b16 %v5058
  %v5578 = vunpack.c.l.b16 %v5059
  %v5579 = vunpack.c.l.b16 %v5060
  %v5580 = vunpack.c.l.b16 %v5061
  %v5581 = vunpack.c.l.b16 %v5062
  %v5582 = vunpack.c.l.b16 %v5063
  %v5583 = vunpack.c.l.b16 %v5064
  %v5584 = vunpack.c.l.b16 %v5065
  %v5585 = vunpack.c.l.b16 %v5066
  %v5586 = vunpack.c.l.b16 %v5067
  %v5587 = vunpack.c.l.b16 %v5068
  %v5588 = vunpack.c.l.b16 %v5069
  %v5589 = vunpack.c.l.b16 %v5070
  %v5590 = vunpack.c.l.b16 %v5071
  %v5591 = vunpack.c.l.b16 %v5072
  %v5592 = vunpack.c.l.b16 %v5073
  %v5593 = vunpack.c.l.b16 %v5074
  %v5594 = vunpack.c.l.b16 %v5075
  %v5595 = vunpack.c.l.b16 %v5076
  %v5596 = vunpack.c.l.b16 %v5077
  %v5597 = vunpack.c.l.b16 %v5078
  %v5598 = vunpack.c.l.b16 %v5079
  %v5599 = vunpack.c.l.b16 %v5080
  %v5600 = vunpack.c.l.b16 %v5081
  %v5601 = vunpack.c.l.b16 %v5082
  %v5602 = vunpack.c.l.b16 %v5083
  %v5603 = vunpack.c.l.b16 %v5084
  %v5604 = vunpack.c.l.b16 %v5085
  %v5605 = vunpack.c.l.b16 %v5086
  %v5606 = vunpack.c.l.b16 %v5087
  %v5607 = vunpack.c.l.b16 %v5088
  %v5608 = vunpack.c.l.b16 %v5089
  %v5609 = vunpack.c.l.b16 %v5090
  %v5610 = vunpack.c.l.b16 %v5091
  %v5611 = vunpack.c.l.b16 %v5092
  %v5612 = vunpack.c.l.b16 %v5093
  %v5613 = vunpack.c.l.b16 %v5094
  %v5614 = vunpack.c.l.b16 %v5095
  %v5615 = vunpack.c.l.b16 %v5096
  %v5616 = vunpack.c.l.b16 %v5097
  %v5617 = vunpack.c.l.b16 %v5098
  %v5618 = vunpack.c.l.b16 %v5099
  %v5619 = vunpack.c.l.b16 %v5100
  %v5620 = vunpack.c.l.b16 %v5101
  %v5621 = vunpack.c.l.b16 %v5102
  %v5622 = vunpack.c.l.b16 %v5103
  %v5623 = vunpack.c.l.b16 %v5104
  %v5624 = vunpack.c.l.b16 %v5105
  %v5625 = vunpack.c.l.b16 %v5106
  %v5626 = vunpack.c.l.b16 %v5107
  %v5627 = vunpack.c.l.b16 %v5108
  %v5628 = vunpack.c.l.b16 %v5109
  %v5629 = vunpack.c.l.b16 %v5110
  %v5630 = vunpack.c.l.b16 %v5111
  %v5631 = vunpack.c.l.b16 %v5112
  %v5632 = vunpack.c.l.b16 %v5113
  %v5633 = vunpack.c.l.b16 %v5114
  %v5634 = vunpack.c.l.b16 %v5115
  %v5635 = vunpack.c.l.b16 %v5116
  %v5636 = vunpack.c.l.b16 %v5117
  %v5637 = vunpack.c.l.b16 %v5118
  %v5638 = vunpack.c.l.b16 %v5119
  %v5639 = vunpack.c.l.b16 %v5120
  %v5640 = vunpack.c.l.b16 %v5121
  %v5641 = vunpack.c.l.b16 %v5122
  %v5642 = vunpack.c.l.b16 %v5123
  %v5643 = vunpack.c.l.b16 %v5124
  %v5644 = vunpack.c.l.b16 %v5125
  %v5645 = vunpack.c.l.b16 %v5126
  %v5646 = vunpack.c.l.b16 %v5127
  %v5647 = vunpack.c.l.b16 %v5128
  %v5648 = vunpack.c.l.b16 %v5129
  %v5649 = vunpack.c.l.b16 %v5130
  %v5650 = vunpack.c.l.b16 %v5131
  %v5651 = vunpack.c.l.b16 %v5132
  %v5652 = vunpack.c.l.b16 %v5133
  %v5653 = vunpack.c.l.b16 %v5134
  %v5654 = vunpack.c.l.b16 %v5135
  %v5655 = vunpack.c.l.b16 %v5136
  %v5656 = vunpack.c.l.b16 %v5137
  %v5657 = vunpack.c.l.b16 %v5138
  %v5658 = vunpack.c.l.b16 %v5139
  %v5659 = vunpack.c.l.b16 %v5140
  %v5660 = vunpack.c.l.b16 %v5141
  %v5661 = vunpack.c.l.b16 %v5142
  %v5662 = vunpack.c.l.b16 %v5143
  %v5663 = vunpack.c.l.b16 %v5144
  %v5664 = vunpack.c.l.b16 %v5145
  %v5665 = vunpack.c.l.b16 %v5146
  %v5666 = vunpack.c.l.b16 %v5147
  %v5667 = vunpack.c.l.b16 %v5148
  %v5668 = vunpack.c.l.b16 %v5149
  %v5669 = vunpack.c.l.b16 %v5150
  %v5670 = vunpack.c.l.b16 %v5151
  %v5671 = vunpack.c.l.b16 %v5152
  %v5672 = vunpack.c.l.b16 %v5153
  %v5673 = vunpack.c.l.b16 %v5154
  %v5674 = vunpack.c.l.b16 %v5155
  %v5675 = vunpack.c.l.b16 %v5156
  %v5676 = vunpack.c.l.b16 %v5157
  %v5677 = vunpack.c.l.b16 %v5158
  %v5678 = vunpack.c.l.b16 %v5159
  %v5679 = vunpack.c.l.b16 %v5160
  %v5680 = vunpack.c.l.b16 %v5161
  %v5681 = vunpack.c.l.b16 %v5162
  %v5682 = vunpack.c.l.b16 %v5163
  %v5683 = vunpack.c.l.b16 %v5164
  %v5684 = vunpack.c.l.b16 %v5165
  %v5685 = vunpack.c.l.b16 %v5166
  %v5686 = vunpack.c.l.b16 %v5167
  %v5687 = vunpack.c.l.b16 %v5168
  %v5688 = vunpack.c.l.b16 %v5169
  %v5689 = vunpack.c.l.b16 %v5170
  %v5690 = vunpack.c.l.b16 %v5171
  %v5691 = vunpack.c.l.b16 %v5172
  %v5692 = vunpack.c.l.b16 %v5173
  %v5693 = vunpack.c.l.b16 %v5174
  %v5694 = vunpack.c.l.b16 %v5175
  %v5695 = vunpack.c.l.b16 %v5176
  %v5696 = vunpack.c.l.b16 %v5177
  %v5697 = vunpack.c.l.b16 %v5178
  %v5698 = vunpack.c.l.b16 %v5179
  %v5699 = vunpack.c.l.b16 %v5180
  %v5700 = vunpack.c.l.b16 %v5181
  %v5701 = vunpack.c.l.b16 %v5182
  %v5702 = vunpack.c.l.b16 %v5183
  %v5703 = vunpack.c.l.b16 %v5184
  %v5704 = vunpack.c.l.b16 %v5185
  %v5705 = vunpack.c.l.b16 %v5186
  %v5706 = vunpack.c.l.b16 %v5187
  %v5707 = vunpack.c.l.b16 %v5188
  %v5708 = vunpack.c.l.b16 %v5189
  %v5709 = vunpack.c.l.b16 %v5190
  %v5710 = vunpack.c.l.b16 %v5191
  %v5711 = vunpack.c.l.b16 %v5192
  %v5712 = vunpack.c.l.b16 %v5193
  %v5713 = vunpack.c.l.b16 %v5194
  %v5714 = vunpack.c.l.b16 %v5195
  %v5715 = vunpack.c.l.b16 %v5196
  %v5716 = vunpack.c.l.b16 %v5197
  %v5717 = vunpack.c.l.b16 %v5198
  %v5718 = vunpack.c.l.b16 %v5199
  %v5719 = vunpack.c.l.b16 %v5200
  %v5720 = vunpack.c.l.b16 %v5201
  %v5721 = vunpack.c.l.b16 %v5202
  %v5722 = vunpack.c.l.b16 %v5203
  %v5723 = vunpack.c.l.b16 %v5204
  %v5724 = vunpack.c.l.b16 %v5205
  %v5725 = vunpack.c.l.b16 %v5206
  %v5726 = vunpack.c.l.b16 %v5207
  %v5727 = vunpack.c.l.b16 %v5208
  %v5728 = vunpack.c.l.b16 %v5209
  %v5729 = vunpack.c.l.b16 %v5210
  %v5730 = vunpack.c.l.b16 %v5211
  %v5731 = vunpack.c.l.b16 %v5212
  %v5732 = vunpack.c.l.b16 %v5213
  %v5733 = vunpack.c.l.b16 %v5214
  %v5734 = vunpack.c.l.b16 %v5215
  %v5735 = vunpack.c.l.b16 %v5216
  %v5736 = vunpack.c.l.b16 %v5217
  %v5737 = vunpack.c.l.b16 %v5218
  %v5738 = vunpack.c.l.b16 %v5219
  %v5739 = vunpack.c.l.b16 %v5220
  %v5740 = vunpack.c.l.b16 %v5221
  %v5741 = vunpack.c.l.b16 %v5222
  %v5742 = vunpack.c.l.b16 %v5223
  %v5743 = vunpack.c.l.b16 %v5224
  %v5744 = vunpack.c.l.b16 %v5225
  %v5745 = vunpack.c.l.b16 %v5226
  %v5746 = vunpack.c.l.b16 %v5227
  %v5747 = vunpack.c.l.b16 %v5228
  %v5748 = vunpack.c.l.b16 %v5229
  %v5749 = vunpack.c.l.b16 %v5230
  %v5750 = vunpack.c.l.b16 %v5231
  %v5751 = vunpack.c.l.b16 %v5232
  %v5752 = vunpack.c.l.b16 %v5233
  %v5753 = vunpack.c.l.b16 %v5234
  %v5754 = vunpack.c.l.b16 %v5235
  %v5755 = vunpack.c.l.b16 %v5236
  %v5756 = vunpack.c.l.b16 %v5237
  %v5757 = vunpack.c.l.b16 %v5238
  %v5758 = vunpack.c.l.b16 %v5239
  %v5759 = vunpack.c.l.b16 %v5240
  %v5760 = vunpack.c.l.b16 %v5241
  %v5761 = vunpack.c.l.b16 %v5242
  %v5762 = vunpack.c.l.b16 %v5243
  %v5763 = vunpack.c.l.b16 %v5244
  %v5764 = vunpack.c.l.b16 %v5245
  %v5765 = vunpack.c.l.b16 %v5246
  %v5766 = vunpack.c.l.b16 %v5247
  %v5767 = vunpack.c.l.b16 %v5248
  %v5768 = vunpack.c.l.b16 %v5249
  %v5769 = vunpack.c.l.b16 %v5250
  %v5770 = vunpack.c.l.b16 %v5251
  %v5771 = vunpack.c.l.b16 %v5252
  %v5772 = vunpack.c.l.b16 %v5253
  %v5773 = vunpack.c.l.b16 %v5254
  %v5774 = vunpack.c.l.b16 %v5255
  %v5775 = vunpack.c.l.b16 %v5256
  %v5776 = vunpack.c.l.b16 %v5257
  %v5777 = vunpack.c.l.b16 %v5258
  %v5778 = vunpack.c.l.b16 %v5259
  %v5779 = vunpack.c.l.b16 %v5260
  %v5780 = vunpack.c.l.b16 %v5261
  %v5781 = vunpack.c.l.b16 %v5262
  %v5782 = vunpack.c.l.b16 %v5263
  %v5783 = vunpack.c.l.b16 %v5264
  %v5784 = vunpack.c.l.b16 %v5265
  %v5785 = vunpack.c.l.b16 %v5266
  %v5786 = vunpack.c.l.b16 %v5267
  %v5787 = vunpack.c.l.b16 %v5268
  %v5788 = vunpack.c.l.b16 %v5269
  %v5789 = vunpack.c.l.b16 %v5270
  %v5790 = vunpack.c.l.b16 %v5271
  %v5791 = vunpack.c.l.b16 %v5272
  %v5792 = vunpack.c.l.b16 %v5273
  %v5793 = vunpack.c.l.b16 %v5274
  %v5794 = vunpack.c.l.b16 %v5275
  %v5795 = vunpack.c.l.b16 %v5276
  %v5796 = vunpack.c.l.b16 %v5277
  %v5797 = vunpack.c.l.b16 %v5278
  %v5798 = vunpack.c.l.b16 %v5279
  %v5799 = vunpack.c.l.b16 %v5280
  %v5800 = vunpack.c.l.b16 %v5281
  %v5801 = vunpack.c.l.b16 %v5282
  %v5802 = vunpack.c.l.b16 %v5283
  %v5803 = vunpack.c.l.b16 %v5284
  %v5804 = vunpack.c.l.b16 %v5285
  %v5805 = vunpack.c.l.b16 %v5286
  %v5806 = vunpack.c.l.b16 %v5287
  %v5807 = vunpack.c.l.b16 %v5288
  %v5808 = vunpack.c.l.b16 %v5289
  %v5809 = vunpack.c.l.b16 %v5290
  %v5810 = vunpack.c.l.b16 %v5291
  %v5811 = vunpack.c.l.b16 %v5292
  %v5812 = vunpack.c.l.b16 %v5293
  %v5813 = vunpack.c.l.b16 %v5294
  %v5814 = vunpack.c.l.b16 %v5295
  %v5815 = vunpack.c.l.b16 %v5296
  %v5816 = vunpack.c.l.b16 %v5297
  %v5817 = vunpack.c.l.b16 %v5298
  %v5818 = vunpack.c.l.b16 %v5299
  %v5819 = vunpack.c.l.b16 %v5300
  %v5820 = vunpack.c.l.b16 %v5301
  %v5821 = vunpack.c.l.b16 %v5302
  %v5822 = vunpack.c.l.b16 %v5303
  %v5823 = vunpack.c.l.b16 %v5304
  %v5824 = vunpack.c.l.b16 %v5305
  %v5825 = vunpack.c.l.b16 %v5306
  %v5826 = vunpack.c.l.b16 %v5307
  %v5827 = vunpack.c.l.b16 %v5308
  %v5828 = vunpack.c.l.b16 %v5309
  %v5829 = vunpack.c.l.b16 %v5310
  %v5830 = vunpack.c.l.b16 %v5311
  %v5831 = vunpack.c.l.b16 %v5312
  %v5832 = vpack.c.b16 %v5577, %v5576
  %v5833 = vpack.c.b16 %v5579, %v5578
  %v5834 = vpack.c.b16 %v5581, %v5580
  %v5835 = vpack.c.b16 %v5583, %v5582
  %v5836 = vpack.c.b16 %v5585, %v5584
  %v5837 = vpack.c.b16 %v5587, %v5586
  %v5838 = vpack.c.b16 %v5589, %v5588
  %v5839 = vpack.c.b16 %v5591, %v5590
  %v5840 = vpack.c.b16 %v5593, %v5592
  %v5841 = vpack.c.b16 %v5595, %v5594
  %v5842 = vpack.c.b16 %v5597, %v5596
  %v5843 = vpack.c.b16 %v5599, %v5598
  %v5844 = vpack.c.b16 %v5601, %v5600
  %v5845 = vpack.c.b16 %v5603, %v5602
  %v5846 = vpack.c.b16 %v5605, %v5604
  %v5847 = vpack.c.b16 %v5607, %v5606
  %v5848 = vpack.c.b16 %v5609, %v5608
  %v5849 = vpack.c.b16 %v5611, %v5610
  %v5850 = vpack.c.b16 %v5613, %v5612
  %v5851 = vpack.c.b16 %v5615, %v5614
  %v5852 = vpack.c.b16 %v5617, %v5616
  %v5853 = vpack.c.b16 %v5619, %v5618
  %v5854 = vpack.c.b16 %v5621, %v5620
  %v5855 = vpack.c.b16 %v5623, %v5622
  %v5856 = vpack.c.b16 %v5625, %v5624
  %v5857 = vpack.c.b16 %v5627, %v5626
  %v5858 = vpack.c.b16 %v5629, %v5628
  %v5859 = vpack.c.b16 %v5631, %v5630
  %v5860 = vpack.c.b16 %v5633, %v5632
  %v5861 = vpack.c.b16 %v5635, %v5634
  %v5862 = vpack.c.b16 %v5637, %v5636
  %v5863 = vpack.c.b16 %v5639, %v5638
  %v5864 = vpack.c.b16 %v5641, %v5640
  %v5865 = vpack.c.b16 %v5643, %v5642
  %v5866 = vpack.c.b16 %v5645, %v5644
  %v5867 = vpack.c.b16 %v5647, %v5646
  %v5868 = vpack.c.b16 %v5649, %v5648
  %v5869 = vpack.c.b16 %v5651, %v5650
  %v5870 = vpack.c.b16 %v5653, %v5652
  %v5871 = vpack.c.b16 %v5655, %v5654
  %v5872 = vpack.c.b16 %v5657, %v5656
  %v5873 = vpack.c.b16 %v5659, %v5658
  %v5874 = vpack.c.b16 %v5661, %v5660
  %v5875 = vpack.c.b16 %v5663, %v5662
  %v5876 = vpack.c.b16 %v5665, %v5664
  %v5877 = vpack.c.b16 %v5667, %v5666
  %v5878 = vpack.c.b16 %v5669, %v5668
  %v5879 = vpack.c.b16 %v5671, %v5670
  %v5880 = vpack.c.b16 %v5673, %v5672
  %v5881 = vpack.c.b16 %v5675, %v5674
  %v5882 = vpack.c.b16 %v5677, %v5676
  %v5883 = vpack.c.b16 %v5679, %v5678
  %v5884 = vpack.c.b16 %v5681, %v5680
  %v5885 = vpack.c.b16 %v5683, %v5682
  %v5886 = vpack.c.b16 %v5685, %v5684
  %v5887 = vpack.c.b16 %v5687, %v5686
  %v5888 = vpack.c.b16 %v5689, %v5688
  %v5889 = vpack.c.b16 %v5691, %v5690
  %v5890 = vpack.c.b16 %v5693, %v5692
  %v5891 = vpack.c.b16 %v5695, %v5694
  %v5892 = vpack.c.b16 %v5697, %v5696
  %v5893 = vpack.c.b16 %v5699, %v5698
  %v5894 = vpack.c.b16 %v5701, %v5700
  %v5895 = vpack.c.b16 %v5703, %v5702
  %v5896 = vpack.c.b16 %v5705, %v5704
  %v5897 = vpack.c.b16 %v5707, %v5706
  %v5898 = vpack.c.b16 %v5709, %v5708
  %v5899 = vpack.c.b16 %v5711, %v5710
  %v5900 = vpack.c.b16 %v5713, %v5712
  %v5901 = vpack.c.b16 %v5715, %v5714
  %v5902 = vpack.c.b16 %v5717, %v5716
  %v5903 = vpack.c.b16 %v5719, %v5718
  %v5904 = vpack.c.b16 %v5721, %v5720
  %v5905 = vpack.c.b16 %v5723, %v5722
  %v5906 = vpack.c.b16 %v5725, %v5724
  %v5907 = vpack.c.b16 %v5727, %v5726
  %v5908 = vpack.c.b16 %v5729, %v5728
  %v5909 = vpack.c.b16 %v5731, %v5730
  %v5910 = vpack.c.b16 %v5733, %v5732
  %v5911 = vpack.c.b16 %v5735, %v5734
  %v5912 = vpack.c.b16 %v5737, %v5736
  %v5913 = vpack.c.b16 %v5739, %v5738
  %v5914 = vpack.c.b16 %v5741, %v5740
  %v5915 = vpack.c.b16 %v5743, %v5742
  %v5916 = vpack.c.b16 %v5745, %v5744
  %v5917 = vpack.c.b16 %v5747, %v5746
  %v5918 = vpack.c.b16 %v5749, %v5748
  %v5919 = vpack.c.b16 %v5751, %v5750
  %v5920 = vpack.c.b16 %v5753, %v5752
  %v5921 = vpack.c.b16 %v5755, %v5754
  %v5922 = vpack.c.b16 %v5757, %v5756
  %v5923 = vpack.c.b16 %v5759, %v5758
  %v5924 = vpack.c.b16 %v5761, %v5760
  %v5925 = vpack.c.b16 %v5763, %v5762
  %v5926 = vpack.c.b16 %v5765, %v5764
  %v5927 = vpack.c.b16 %v5767, %v5766
  %v5928 = vpack.c.b16 %v5769, %v5768
  %v5929 = vpack.c.b16 %v5771, %v5770
  %v5930 = vpack.c.b16 %v5773, %v5772
  %v5931 = vpack.c.b16 %v5775, %v5774
  %v5932 = vpack.c.b16 %v5777, %v5776
  %v5933 = vpack.c.b16 %v5779, %v5778
  %v5934 = vpack.c.b16 %v5781, %v5780
  %v5935 = vpack.c.b16 %v5783, %v5782
  %v5936 = vpack.c.b16 %v5785, %v5784
  %v5937 = vpack.c.b16 %v5787, %v5786
  %v5938 = vpack.c.b16 %v5789, %v5788
  %v5939 = vpack.c.b16 %v5791, %v5790
  %v5940 = vpack.c.b16 %v5793, %v5792
  %v5941 = vpack.c.b16 %v5795, %v5794
  %v5942 = vpack.c.b16 %v5797, %v5796
  %v5943 = vpack.c.b16 %v5799, %v5798
  %v5944 = vpack.c.b16 %v5801, %v5800
  %v5945 = vpack.c.b16 %v5803, %v5802
  %v5946 = vpack.c.b16 %v5805, %v5804
  %v5947 = vpack.c.b16 %v5807, %v5806
  %v5948 = vpack.c.b16 %v5809, %v5808
  %v5949 = vpack.c.b16 %v5811, %v5810
  %v5950 = vpack.c.b16 %v5813, %v5812
  %v5951 = vpack.c.b16 %v5815, %v5814
  %v5952 = vpack.c.b16 %v5817, %v5816
  %v5953 = vpack.c.b16 %v5819, %v5818
  %v5954 = vpack.c.b16 %v5821, %v5820
  %v5955 = vpack.c.b16 %v5823, %v5822
  %v5956 = vpack.c.b16 %v5825, %v5824
  %v5957 = vpack.c.b16 %v5827, %v5826
  %v5958 = vpack.c.b16 %v5829, %v5828
  %v5959 = vpack.c.b16 %v5831, %v5830
  %6088 = vmatprep.subr.bf16.mxu0 0
  %6089 = vmatpush1.bf16.msra.mxu0 %v5832
  %6090 = vmatprep.subr.bf16.mxu0 0
  %6091 = vmatpush1.bf16.msra.mxu0 %v5833
  %6092 = vmatprep.subr.bf16.mxu0 0
  %6093 = vmatpush1.bf16.msra.mxu0 %v5834
  %6094 = vmatprep.subr.bf16.mxu0 0
  %6095 = vmatpush1.bf16.msra.mxu0 %v5835
  %6096 = vmatprep.subr.bf16.mxu0 0
  %6097 = vmatpush1.bf16.msra.mxu0 %v5836
  %6098 = vmatprep.subr.bf16.mxu0 0
  %6099 = vmatpush1.bf16.msra.mxu0 %v5837
  %6100 = vmatprep.subr.bf16.mxu0 0
  %6101 = vmatpush1.bf16.msra.mxu0 %v5838
  %6102 = vmatprep.subr.bf16.mxu0 0
  %6103 = vmatpush1.bf16.msra.mxu0 %v5839
  %6104 = vmatprep.subr.bf16.mxu0 0
  %6105 = vmatpush1.bf16.msra.mxu0 %v5840
  %6106 = vmatprep.subr.bf16.mxu0 0
  %6107 = vmatpush1.bf16.msra.mxu0 %v5841
  %6108 = vmatprep.subr.bf16.mxu0 0
  %6109 = vmatpush1.bf16.msra.mxu0 %v5842
  %6110 = vmatprep.subr.bf16.mxu0 0
  %6111 = vmatpush1.bf16.msra.mxu0 %v5843
  %6112 = vmatprep.subr.bf16.mxu0 0
  %6113 = vmatpush1.bf16.msra.mxu0 %v5844
  %6114 = vmatprep.subr.bf16.mxu0 0
  %6115 = vmatpush1.bf16.msra.mxu0 %v5845
  %6116 = vmatprep.subr.bf16.mxu0 0
  %6117 = vmatpush1.bf16.msra.mxu0 %v5846
  %6118 = vmatprep.subr.bf16.mxu0 0
  %6119 = vmatpush1.bf16.msra.mxu0 %v5847
  %6120 = vmatprep.mubr.bf16.mxu0 %v5042
  %6121 = vmatmul.mubr.bf16.gmra.mrb[0].mxu0 %v5041
  %v6122 = vpop.f32.mrb[0].mxu0
  %v6123 = vadd.f32 %v5318, %v6122
  %v6124 = vpop.f32.mrb[0].mxu0
  %v6125 = vpop.f32.mrb[0].mxu0
  %v6126 = vadd.f32 %v5318, %v6125
  %v6127 = vpop.f32.mrb[0].mxu0
  %6128 = vdwg.mxu0
  %6129 = vmatprep.subr.bf16.mxu0 0
  %6130 = vmatpush1.bf16.msra.mxu0 %v5848
  %6131 = vmatprep.subr.bf16.mxu0 0
  %6132 = vmatpush1.bf16.msra.mxu0 %v5849
  %6133 = vmatprep.subr.bf16.mxu0 0
  %6134 = vmatpush1.bf16.msra.mxu0 %v5850
  %6135 = vmatprep.subr.bf16.mxu0 0
  %6136 = vmatpush1.bf16.msra.mxu0 %v5851
  %6137 = vmatprep.subr.bf16.mxu0 0
  %6138 = vmatpush1.bf16.msra.mxu0 %v5852
  %6139 = vmatprep.subr.bf16.mxu0 0
  %6140 = vmatpush1.bf16.msra.mxu0 %v5853
  %6141 = vmatprep.subr.bf16.mxu0 0
  %6142 = vmatpush1.bf16.msra.mxu0 %v5854
  %6143 = vmatprep.subr.bf16.mxu0 0
  %6144 = vmatpush1.bf16.msra.mxu0 %v5855
  %6145 = vmatprep.subr.bf16.mxu0 0
  %6146 = vmatpush1.bf16.msra.mxu0 %v5856
  %6147 = vmatprep.subr.bf16.mxu0 0
  %6148 = vmatpush1.bf16.msra.mxu0 %v5857
  %6149 = vmatprep.subr.bf16.mxu0 0
  %6150 = vmatpush1.bf16.msra.mxu0 %v5858
  %6151 = vmatprep.subr.bf16.mxu0 0
  %6152 = vmatpush1.bf16.msra.mxu0 %v5859
  %6153 = vmatprep.subr.bf16.mxu0 0
  %6154 = vmatpush1.bf16.msra.mxu0 %v5860
  %6155 = vmatprep.subr.bf16.mxu0 0
  %6156 = vmatpush1.bf16.msra.mxu0 %v5861
  %6157 = vmatprep.subr.bf16.mxu0 0
  %6158 = vmatpush1.bf16.msra.mxu0 %v5862
  %6159 = vmatprep.subr.bf16.mxu0 0
  %6160 = vmatpush1.bf16.msra.mxu0 %v5863
  %6161 = vmatprep.mubr.bf16.mxu0 %v5044
  %6162 = vmatmul.mubr.bf16.gmra.mrb[0].mxu0 %v5043
  %v6163 = vpop.f32.mrb[0].mxu0
  %v6164 = vadd.f32 %v6123, %v6163
  %v6165 = vpop.f32.mrb[0].mxu0
  %v6166 = vpop.f32.mrb[0].mxu0
  %v6167 = vadd.f32 %v6126, %v6166
  %v6168 = vpop.f32.mrb[0].mxu0
  %6169 = vdwg.mxu0
  %6170 = vmatprep.subr.bf16.mxu0 0
  %6171 = vmatpush1.bf16.msra.mxu0 %v5864
  %6172 = vmatprep.subr.bf16.mxu0 0
  %6173 = vmatpush1.bf16.msra.mxu0 %v5865
  %6174 = vmatprep.subr.bf16.mxu0 0
  %6175 = vmatpush1.bf16.msra.mxu0 %v5866
  %6176 = vmatprep.subr.bf16.mxu0 0
  %6177 = vmatpush1.bf16.msra.mxu0 %v5867
  %6178 = vmatprep.subr.bf16.mxu0 0
  %6179 = vmatpush1.bf16.msra.mxu0 %v5868
  %6180 = vmatprep.subr.bf16.mxu0 0
  %6181 = vmatpush1.bf16.msra.mxu0 %v5869
  %6182 = vmatprep.subr.bf16.mxu0 0
  %6183 = vmatpush1.bf16.msra.mxu0 %v5870
  %6184 = vmatprep.subr.bf16.mxu0 0
  %6185 = vmatpush1.bf16.msra.mxu0 %v5871
  %6186 = vmatprep.subr.bf16.mxu0 0
  %6187 = vmatpush1.bf16.msra.mxu0 %v5872
  %6188 = vmatprep.subr.bf16.mxu0 0
  %6189 = vmatpush1.bf16.msra.mxu0 %v5873
  %6190 = vmatprep.subr.bf16.mxu0 0
  %6191 = vmatpush1.bf16.msra.mxu0 %v5874
  %6192 = vmatprep.subr.bf16.mxu0 0
  %6193 = vmatpush1.bf16.msra.mxu0 %v5875
  %6194 = vmatprep.subr.bf16.mxu0 0
  %6195 = vmatpush1.bf16.msra.mxu0 %v5876
  %6196 = vmatprep.subr.bf16.mxu0 0
  %6197 = vmatpush1.bf16.msra.mxu0 %v5877
  %6198 = vmatprep.subr.bf16.mxu0 0
  %6199 = vmatpush1.bf16.msra.mxu0 %v5878
  %6200 = vmatprep.subr.bf16.mxu0 0
  %6201 = vmatpush1.bf16.msra.mxu0 %v5879
  %6202 = vmatprep.mubr.bf16.mxu0 %v5046
  %6203 = vmatmul.mubr.bf16.gmra.mrb[0].mxu0 %v5045
  %v6204 = vpop.f32.mrb[0].mxu0
  %v6205 = vadd.f32 %v6164, %v6204
  %v6206 = vpop.f32.mrb[0].mxu0
  %v6207 = vpop.f32.mrb[0].mxu0
  %v6208 = vadd.f32 %v6167, %v6207
  %v6209 = vpop.f32.mrb[0].mxu0
  %6210 = vdwg.mxu0
  %6211 = vmatprep.subr.bf16.mxu0 0
  %6212 = vmatpush1.bf16.msra.mxu0 %v5880
  %6213 = vmatprep.subr.bf16.mxu0 0
  %6214 = vmatpush1.bf16.msra.mxu0 %v5881
  %6215 = vmatprep.subr.bf16.mxu0 0
  %6216 = vmatpush1.bf16.msra.mxu0 %v5882
  %6217 = vmatprep.subr.bf16.mxu0 0
  %6218 = vmatpush1.bf16.msra.mxu0 %v5883
  %6219 = vmatprep.subr.bf16.mxu0 0
  %6220 = vmatpush1.bf16.msra.mxu0 %v5884
  %6221 = vmatprep.subr.bf16.mxu0 0
  %6222 = vmatpush1.bf16.msra.mxu0 %v5885
  %6223 = vmatprep.subr.bf16.mxu0 0
  %6224 = vmatpush1.bf16.msra.mxu0 %v5886
  %6225 = vmatprep.subr.bf16.mxu0 0
  %6226 = vmatpush1.bf16.msra.mxu0 %v5887
  %6227 = vmatprep.subr.bf16.mxu0 0
  %6228 = vmatpush1.bf16.msra.mxu0 %v5888
  %6229 = vmatprep.subr.bf16.mxu0 0
  %6230 = vmatpush1.bf16.msra.mxu0 %v5889
  %6231 = vmatprep.subr.bf16.mxu0 0
  %6232 = vmatpush1.bf16.msra.mxu0 %v5890
  %6233 = vmatprep.subr.bf16.mxu0 0
  %6234 = vmatpush1.bf16.msra.mxu0 %v5891
  %6235 = vmatprep.subr.bf16.mxu0 0
  %6236 = vmatpush1.bf16.msra.mxu0 %v5892
  %6237 = vmatprep.subr.bf16.mxu0 0
  %6238 = vmatpush1.bf16.msra.mxu0 %v5893
  %6239 = vmatprep.subr.bf16.mxu0 0
  %6240 = vmatpush1.bf16.msra.mxu0 %v5894
  %6241 = vmatprep.subr.bf16.mxu0 0
  %6242 = vmatpush1.bf16.msra.mxu0 %v5895
  %6243 = vmatprep.mubr.bf16.mxu0 %v5048
  %6244 = vmatmul.mubr.bf16.gmra.mrb[0].mxu0 %v5047
  %v6245 = vpop.f32.mrb[0].mxu0
  %v6246 = vadd.f32 %v6205, %v6245
  %v6247 = vpop.f32.mrb[0].mxu0
  %v6248 = vpop.f32.mrb[0].mxu0
  %v6249 = vadd.f32 %v6208, %v6248
  %v6250 = vpop.f32.mrb[0].mxu0
  %6251 = vdwg.mxu0
  %6252 = vmatprep.subr.bf16.mxu0 0
  %6253 = vmatpush1.bf16.msra.mxu0 %v5896
  %6254 = vmatprep.subr.bf16.mxu0 0
  %6255 = vmatpush1.bf16.msra.mxu0 %v5897
  %6256 = vmatprep.subr.bf16.mxu0 0
  %6257 = vmatpush1.bf16.msra.mxu0 %v5898
  %6258 = vmatprep.subr.bf16.mxu0 0
  %6259 = vmatpush1.bf16.msra.mxu0 %v5899
  %6260 = vmatprep.subr.bf16.mxu0 0
  %6261 = vmatpush1.bf16.msra.mxu0 %v5900
  %6262 = vmatprep.subr.bf16.mxu0 0
  %6263 = vmatpush1.bf16.msra.mxu0 %v5901
  %6264 = vmatprep.subr.bf16.mxu0 0
  %6265 = vmatpush1.bf16.msra.mxu0 %v5902
  %6266 = vmatprep.subr.bf16.mxu0 0
  %6267 = vmatpush1.bf16.msra.mxu0 %v5903
  %6268 = vmatprep.subr.bf16.mxu0 0
  %6269 = vmatpush1.bf16.msra.mxu0 %v5904
  %6270 = vmatprep.subr.bf16.mxu0 0
  %6271 = vmatpush1.bf16.msra.mxu0 %v5905
  %6272 = vmatprep.subr.bf16.mxu0 0
  %6273 = vmatpush1.bf16.msra.mxu0 %v5906
  %6274 = vmatprep.subr.bf16.mxu0 0
  %6275 = vmatpush1.bf16.msra.mxu0 %v5907
  %6276 = vmatprep.subr.bf16.mxu0 0
  %6277 = vmatpush1.bf16.msra.mxu0 %v5908
  %6278 = vmatprep.subr.bf16.mxu0 0
  %6279 = vmatpush1.bf16.msra.mxu0 %v5909
  %6280 = vmatprep.subr.bf16.mxu0 0
  %6281 = vmatpush1.bf16.msra.mxu0 %v5910
  %6282 = vmatprep.subr.bf16.mxu0 0
  %6283 = vmatpush1.bf16.msra.mxu0 %v5911
  %6284 = vmatprep.mubr.bf16.mxu0 %v5050
  %6285 = vmatmul.mubr.bf16.gmra.mrb[0].mxu0 %v5049
  %v6286 = vpop.f32.mrb[0].mxu0
  %v6287 = vadd.f32 %v6246, %v6286
  %v6288 = vpop.f32.mrb[0].mxu0
  %v6289 = vpop.f32.mrb[0].mxu0
  %v6290 = vadd.f32 %v6249, %v6289
  %v6291 = vpop.f32.mrb[0].mxu0
  %6292 = vdwg.mxu0
  %6293 = vmatprep.subr.bf16.mxu0 0
  %6294 = vmatpush1.bf16.msra.mxu0 %v5912
  %6295 = vmatprep.subr.bf16.mxu0 0
  %6296 = vmatpush1.bf16.msra.mxu0 %v5913
  %6297 = vmatprep.subr.bf16.mxu0 0
  %6298 = vmatpush1.bf16.msra.mxu0 %v5914
  %6299 = vmatprep.subr.bf16.mxu0 0
  %6300 = vmatpush1.bf16.msra.mxu0 %v5915
  %6301 = vmatprep.subr.bf16.mxu0 0
  %6302 = vmatpush1.bf16.msra.mxu0 %v5916
  %6303 = vmatprep.subr.bf16.mxu0 0
  %6304 = vmatpush1.bf16.msra.mxu0 %v5917
  %6305 = vmatprep.subr.bf16.mxu0 0
  %6306 = vmatpush1.bf16.msra.mxu0 %v5918
  %6307 = vmatprep.subr.bf16.mxu0 0
  %6308 = vmatpush1.bf16.msra.mxu0 %v5919
  %6309 = vmatprep.subr.bf16.mxu0 0
  %6310 = vmatpush1.bf16.msra.mxu0 %v5920
  %6311 = vmatprep.subr.bf16.mxu0 0
  %6312 = vmatpush1.bf16.msra.mxu0 %v5921
  %6313 = vmatprep.subr.bf16.mxu0 0
  %6314 = vmatpush1.bf16.msra.mxu0 %v5922
  %6315 = vmatprep.subr.bf16.mxu0 0
  %6316 = vmatpush1.bf16.msra.mxu0 %v5923
  %6317 = vmatprep.subr.bf16.mxu0 0
  %6318 = vmatpush1.bf16.msra.mxu0 %v5924
  %6319 = vmatprep.subr.bf16.mxu0 0
  %6320 = vmatpush1.bf16.msra.mxu0 %v5925
  %6321 = vmatprep.subr.bf16.mxu0 0
  %6322 = vmatpush1.bf16.msra.mxu0 %v5926
  %6323 = vmatprep.subr.bf16.mxu0 0
  %6324 = vmatpush1.bf16.msra.mxu0 %v5927
  %6325 = vmatprep.mubr.bf16.mxu0 %v5052
  %6326 = vmatmul.mubr.bf16.gmra.mrb[0].mxu0 %v5051
  %v6327 = vpop.f32.mrb[0].mxu0
  %v6328 = vadd.f32 %v6287, %v6327
  %v6329 = vpop.f32.mrb[0].mxu0
  %v6330 = vpop.f32.mrb[0].mxu0
  %v6331 = vadd.f32 %v6290, %v6330
  %v6332 = vpop.f32.mrb[0].mxu0
  %6333 = vdwg.mxu0
  %6334 = vmatprep.subr.bf16.mxu0 0
  %6335 = vmatpush1.bf16.msra.mxu0 %v5928
  %6336 = vmatprep.subr.bf16.mxu0 0
  %6337 = vmatpush1.bf16.msra.mxu0 %v5929
  %6338 = vmatprep.subr.bf16.mxu0 0
  %6339 = vmatpush1.bf16.msra.mxu0 %v5930
  %6340 = vmatprep.subr.bf16.mxu0 0
  %6341 = vmatpush1.bf16.msra.mxu0 %v5931
  %6342 = vmatprep.subr.bf16.mxu0 0
  %6343 = vmatpush1.bf16.msra.mxu0 %v5932
  %6344 = vmatprep.subr.bf16.mxu0 0
  %6345 = vmatpush1.bf16.msra.mxu0 %v5933
  %6346 = vmatprep.subr.bf16.mxu0 0
  %6347 = vmatpush1.bf16.msra.mxu0 %v5934
  %6348 = vmatprep.subr.bf16.mxu0 0
  %6349 = vmatpush1.bf16.msra.mxu0 %v5935
  %6350 = vmatprep.subr.bf16.mxu0 0
  %6351 = vmatpush1.bf16.msra.mxu0 %v5936
  %6352 = vmatprep.subr.bf16.mxu0 0
  %6353 = vmatpush1.bf16.msra.mxu0 %v5937
  %6354 = vmatprep.subr.bf16.mxu0 0
  %6355 = vmatpush1.bf16.msra.mxu0 %v5938
  %6356 = vmatprep.subr.bf16.mxu0 0
  %6357 = vmatpush1.bf16.msra.mxu0 %v5939
  %6358 = vmatprep.subr.bf16.mxu0 0
  %6359 = vmatpush1.bf16.msra.mxu0 %v5940
  %6360 = vmatprep.subr.bf16.mxu0 0
  %6361 = vmatpush1.bf16.msra.mxu0 %v5941
  %6362 = vmatprep.subr.bf16.mxu0 0
  %6363 = vmatpush1.bf16.msra.mxu0 %v5942
  %6364 = vmatprep.subr.bf16.mxu0 0
  %6365 = vmatpush1.bf16.msra.mxu0 %v5943
  %6366 = vmatprep.mubr.bf16.mxu0 %v5054
  %6367 = vmatmul.mubr.bf16.gmra.mrb[0].mxu0 %v5053
  %v6368 = vpop.f32.mrb[0].mxu0
  %v6369 = vadd.f32 %v6328, %v6368
  %v6370 = vpop.f32.mrb[0].mxu0
  %v6371 = vpop.f32.mrb[0].mxu0
  %v6372 = vadd.f32 %v6331, %v6371
  %v6373 = vpop.f32.mrb[0].mxu0
  %6374 = vdwg.mxu0
  %6375 = vmatprep.subr.bf16.mxu0 0
  %6376 = vmatpush1.bf16.msra.mxu0 %v5944
  %6377 = vmatprep.subr.bf16.mxu0 0
  %6378 = vmatpush1.bf16.msra.mxu0 %v5945
  %6379 = vmatprep.subr.bf16.mxu0 0
  %6380 = vmatpush1.bf16.msra.mxu0 %v5946
  %6381 = vmatprep.subr.bf16.mxu0 0
  %6382 = vmatpush1.bf16.msra.mxu0 %v5947
  %6383 = vmatprep.subr.bf16.mxu0 0
  %6384 = vmatpush1.bf16.msra.mxu0 %v5948
  %6385 = vmatprep.subr.bf16.mxu0 0
  %6386 = vmatpush1.bf16.msra.mxu0 %v5949
  %6387 = vmatprep.subr.bf16.mxu0 0
  %6388 = vmatpush1.bf16.msra.mxu0 %v5950
  %6389 = vmatprep.subr.bf16.mxu0 0
  %6390 = vmatpush1.bf16.msra.mxu0 %v5951
  %6391 = vmatprep.subr.bf16.mxu0 0
  %6392 = vmatpush1.bf16.msra.mxu0 %v5952
  %6393 = vmatprep.subr.bf16.mxu0 0
  %6394 = vmatpush1.bf16.msra.mxu0 %v5953
  %6395 = vmatprep.subr.bf16.mxu0 0
  %6396 = vmatpush1.bf16.msra.mxu0 %v5954
  %6397 = vmatprep.subr.bf16.mxu0 0
  %6398 = vmatpush1.bf16.msra.mxu0 %v5955
  %6399 = vmatprep.subr.bf16.mxu0 0
  %6400 = vmatpush1.bf16.msra.mxu0 %v5956
  %6401 = vmatprep.subr.bf16.mxu0 0
  %6402 = vmatpush1.bf16.msra.mxu0 %v5957
  %6403 = vmatprep.subr.bf16.mxu0 0
  %6404 = vmatpush1.bf16.msra.mxu0 %v5958
  %6405 = vmatprep.subr.bf16.mxu0 0
  %6406 = vmatpush1.bf16.msra.mxu0 %v5959
  %6407 = vmatprep.mubr.bf16.mxu0 %v5056
  %6408 = vmatmul.mubr.bf16.gmra.mrb[0].mxu0 %v5055
  %v6409 = vpop.f32.mrb[0].mxu0
  %v6410 = vadd.f32 %v6369, %v6409
  %v6411 = vpop.f32.mrb[0].mxu0
  %v6412 = vpop.f32.mrb[0].mxu0
  %v6413 = vadd.f32 %v6372, %v6412
  %v6414 = vpop.f32.mrb[0].mxu0
  %6415 = vdwg.mxu0
  %v6416 = vmul.f32 %v6410, %v6410
  %v6417 = vmul.f32 %v6413, %v6413
  %6418 = vadd.xlane.f32.xlu0 %v6416
  %v6419 = vpop.xlane.xlu0 %6418
  %6420 = vadd.xlane.f32.xlu0 %v6417
  %v6421 = vpop.xlane.xlu0 %6420
  %v6422 = vmax.f32 %v6419, 1e-24
  %v6423 = vmax.f32 %v6421, 1e-24
  %v6424 = vrsqrt.pop %v6422
  %v6425 = vrsqrt.pop %v6423
  %v6426 = vmul.f32 %v6410, %v6424
  %v6427 = vmul.f32 %v6413, %v6425
  %6428 = vst [vmem:[%s5] sm:$0xff] %v6426
  %6429 = vst [vmem:[%s5 + $0x8] sm:$0xff] %v6427
  // Predicated region
  $region22: #{wide_resnet_proj.1} parent=0 // pred_check
    _
  $region23: #{wide_resnet_proj.1} parent=0 // pred_check_branch
    %6431 = sbr.rel (0) target = $region25
  $region24: #{wide_resnet_proj.1} parent=0 // pred_region
    _
  $region25: #{wide_resnet_proj.1} parent=0 // pred_fallthru
    _
  // Predicated region
  $region26: #{wide_resnet_proj.1} parent=0 // pred_check
    _
  $region27: #{wide_resnet_proj.1} parent=0 // pred_check_branch
    %6433 = sbr.rel (0) target = $region29
  $region28: #{wide_resnet_proj.1} parent=0 // pred_region
    _
  $region29: #{wide_resnet_proj.1} parent=0 // pred_fallthru
    _

</llo_original>
